<compile_context>
chip_gen: v7x
topology: tpu7x:2x2x1
jax: 0.10.0
libtpu: 0.0.40
codegen_flags: <defaults>
</compile_context>

<pallas_src>
import functools

import numpy as np

import jax
import jax.numpy as jnp
from jax.experimental import pallas as pl
from jax.experimental.pallas import tpu as pltpu

# Problem dimensions implied by the PyTorch module (MNIST-style 28x28, 1 channel).
K = 5            # conv kernel size
C1 = 16          # conv1 out channels
C2 = 32          # conv2 out channels
H0 = W0 = 28     # input spatial
P1 = 14          # spatial after pool1 (= conv2 in/out spatial)
P2 = 7           # spatial after pool2
NOUT_PAD = 128   # final linear output lanes (10 real outputs, zero-padded -> lane-dense store)


# ------------------------------- fused kernel -------------------------------

def _cnn_kernel(x_ref, t1e_ref, t1o_ref, b1_ref, t2e_ref, t2o_ref, b2_ref,
                wl_ref, bo_ref, out_ref, m1_ref, a2_ref, m2_ref, *, bt):
    """Processes `bt` images per grid step.  All stacked activations use row index r*bt + i
    (spatial row r, image i); lanes are (w_pooled * C + c)."""
    f32 = jnp.float32

    # ---- conv1 (5x5, pad 2): 5 batch-stacked row-tap Toeplitz matmuls.  Even/odd output
    #      columns are computed separately so the 2x2 pool's W-reduction is one elementwise max.
    tap = x_ref[0, 0]                                                # (28*bt, 28)
    y1e = jnp.dot(tap, t1e_ref[0], preferred_element_type=f32)
    y1o = jnp.dot(tap, t1o_ref[0], preferred_element_type=f32)
    for dy in range(1, K):
        tap = x_ref[0, dy]
        y1e = y1e + jnp.dot(tap, t1e_ref[dy], preferred_element_type=f32)
        y1o = y1o + jnp.dot(tap, t1o_ref[dy], preferred_element_type=f32)
    # bias + pool over W + ReLU (ReLU commutes with max; bias identical for both parities)
    m1_ref[...] = jnp.maximum(jnp.maximum(y1e, y1o) + b1_ref[...], 0.0)   # (28*bt, 224)

    # ---- pool1 over H + zero height-padding rows for conv2 (pure VPU row-block max)
    zpad = jnp.zeros((2 * bt, P1 * C1), f32)
    a2_ref[0:2 * bt, :] = zpad
    a2_ref[(P1 + 2) * bt:(P1 + 4) * bt, :] = zpad
    for p in range(P1):
        a2_ref[(p + 2) * bt:(p + 3) * bt, :] = jnp.maximum(
            m1_ref[(2 * p) * bt:(2 * p + 1) * bt, :],
            m1_ref[(2 * p + 1) * bt:(2 * p + 2) * bt, :])

    # ---- conv2 (5x5, pad 2): same structure; row taps are contiguous row-block slices of a2
    tap = a2_ref[0:P1 * bt, :]                                       # (14*bt, 224)
    y2e = jnp.dot(tap, t2e_ref[0], preferred_element_type=f32)
    y2o = jnp.dot(tap, t2o_ref[0], preferred_element_type=f32)
    for dy in range(1, K):
        tap = a2_ref[dy * bt:(dy + P1) * bt, :]
        y2e = y2e + jnp.dot(tap, t2e_ref[dy], preferred_element_type=f32)
        y2o = y2o + jnp.dot(tap, t2o_ref[dy], preferred_element_type=f32)
    m2_ref[...] = jnp.maximum(jnp.maximum(y2e, y2o) + b2_ref[...], 0.0)   # (14*bt, 224)

    # ---- pool2 over H fused into the final linear: one (bt,224)@(224,128) matmul per pooled row
    acc = jnp.zeros((bt, NOUT_PAD), f32)
    for h in range(P2):
        ph = jnp.maximum(m2_ref[(2 * h) * bt:(2 * h + 1) * bt, :],
                         m2_ref[(2 * h + 1) * bt:(2 * h + 2) * bt, :])
        acc = acc + jnp.dot(ph, wl_ref[h], preferred_element_type=f32)
    out_ref[...] = acc + bo_ref[...]                                 # (bt, 128), lane-dense


# --------------------------- host-side weight prep ---------------------------

def prepare_params(params):
    """One-time host-side conversion of PyTorch-layout params into the kernel's weights:
    row-Toeplitz conv matrices (pool even/odd split + width zero-padding baked in) and the
    pre-permuted / lane-padded linear layer."""
    w1 = np.asarray(params["w1"], np.float32)      # (16, 1, 5, 5)
    b1 = np.asarray(params["b1"], np.float32)      # (16,)
    w2 = np.asarray(params["w2"], np.float32)      # (32, 16, 5, 5)
    b2 = np.asarray(params["b2"], np.float32)      # (32,)
    wo = np.asarray(params["w_out"], np.float32)   # (10, 32*7*7)
    bo = np.asarray(params["b_out"], np.float32)   # (10,)

    # conv1: per kernel row dy, map input row (28 lanes) -> outputs at (w_pool, c) = 224 lanes
    t1e = np.zeros((K, W0, P1 * C1), np.float32)
    t1o = np.zeros((K, W0, P1 * C1), np.float32)
    for dy in range(K):
        for j in range(P1):
            for kx in range(K):
                wi = 2 * j + kx - 2
                if 0 <= wi < W0:
                    t1e[dy, wi, j * C1:(j + 1) * C1] = w1[:, 0, dy, kx]
                wi = 2 * j + 1 + kx - 2
                if 0 <= wi < W0:
                    t1o[dy, wi, j * C1:(j + 1) * C1] = w1[:, 0, dy, kx]
    b1row = np.tile(b1, P1)[None, :]               # (1, 224)

    # conv2: per kernel row dy, map pooled row ((w1p, c1) = 224 lanes) -> ((w_pool, c2) = 224)
    t2e = np.zeros((K, P1 * C1, P2 * C2), np.float32)
    t2o = np.zeros((K, P1 * C1, P2 * C2), np.float32)
    for dy in range(K):
        for j in range(P2):
            for kx in range(K):
                wi = 2 * j + kx - 2
                if 0 <= wi < P1:
                    t2e[dy, wi * C1:(wi + 1) * C1, j * C2:(j + 1) * C2] = w2[:, :, dy, kx].T
                wi = 2 * j + 1 + kx - 2
                if 0 <= wi < P1:
                    t2o[dy, wi * C1:(wi + 1) * C1, j * C2:(j + 1) * C2] = w2[:, :, dy, kx].T
    b2row = np.tile(b2, P2)[None, :]               # (1, 224)

    # linear: PyTorch flatten order is (c, h, w); kernel layout is rows h, lanes w*C2+c.
    wl = np.zeros((P2, P2 * C2, NOUT_PAD), np.float32)
    for h in range(P2):
        for w in range(P2):
            wl[h, w * C2:(w + 1) * C2, :10] = wo[:, h * P2 + w::P2 * P2].T
    bout = np.zeros((1, NOUT_PAD), np.float32)
    bout[0, :10] = bo

    return {k: jnp.asarray(v) for k, v in dict(
        t1e=t1e, t1o=t1o, b1row=b1row, t2e=t2e, t2o=t2o, b2row=b2row,
        wl=wl, bout=bout).items()}


# ------------------------------- full forward --------------------------------

def cnn_forward(x_nchw, prep):
    """x_nchw: (B, 1, 28, 28) PyTorch-layout input; prep: output of prepare_params."""
    B = x_nchw.shape[0]
    # batch tile: whole batch when small; else 8 images per grid step (8 = sublane-aligned).
    if B <= 8:
        BT, Bp = B, B
    else:
        BT = 8
        Bp = ((B + 7) // 8) * 8
    NB = Bp // BT

    x = x_nchw.astype(jnp.float32)[:, 0, :, :]                  # (B, 28, 28)
    if Bp != B:
        x = jnp.pad(x, ((0, Bp - B), (0, 0), (0, 0)))
    xp = jnp.pad(x, ((0, 0), (2, 2), (0, 0)))                   # (Bp, 32, 28) height zero-pad
    # 5 height taps in batch-stacked row layout: [nb, dy, r*BT+i, w] = xp[nb*BT+i, dy+r, w]
    taps = jnp.stack([xp[:, dy:dy + H0, :] for dy in range(K)], axis=1)   # (Bp, 5, 28, 28)
    x_taps = (taps.reshape(NB, BT, K, H0, W0)
                  .transpose(0, 2, 3, 1, 4)
                  .reshape(NB, K, H0 * BT, W0))

    zero2 = lambda nb: (0, 0)
    zero3 = lambda nb: (0, 0, 0)
    kernel = functools.partial(_cnn_kernel, bt=BT)
    out_pad = pl.pallas_call(
        kernel,
        out_shape=jax.ShapeDtypeStruct((Bp, NOUT_PAD), jnp.float32),
        grid=(NB,),
        in_specs=[
            pl.BlockSpec((1, K, H0 * BT, W0), lambda nb: (nb, 0, 0, 0)),   # stacked input taps
            pl.BlockSpec((K, W0, P1 * C1), zero3),                         # t1e
            pl.BlockSpec((K, W0, P1 * C1), zero3),                         # t1o
            pl.BlockSpec((1, P1 * C1), zero2),                             # b1 row
            pl.BlockSpec((K, P1 * C1, P2 * C2), zero3),                    # t2e
            pl.BlockSpec((K, P1 * C1, P2 * C2), zero3),                    # t2o
            pl.BlockSpec((1, P2 * C2), zero2),                             # b2 row
            pl.BlockSpec((P2, P2 * C2, NOUT_PAD), zero3),                  # linear weights
            pl.BlockSpec((1, NOUT_PAD), zero2),                            # linear bias (padded)
        ],
        out_specs=pl.BlockSpec((BT, NOUT_PAD), lambda nb: (nb, 0)),
        scratch_shapes=[
            pltpu.VMEM((H0 * BT, P1 * C1), jnp.float32),        # m1: relu'd W-pooled conv1
            pltpu.VMEM(((P1 + 4) * BT, P1 * C1), jnp.float32),  # a2: H-pooled + H-padded conv1
            pltpu.VMEM((2 * P2 * BT, P2 * C2), jnp.float32),    # m2: relu'd W-pooled conv2
        ],
        compiler_params=pltpu.CompilerParams(
            dimension_semantics=("parallel",)),
    )(x_taps, prep["t1e"], prep["t1o"], prep["b1row"],
      prep["t2e"], prep["t2o"], prep["b2row"], prep["wl"], prep["bout"])
    return out_pad[:B, :10]


def init_params(key):
    k1, k2, k3, k4, k5, k6 = jax.random.split(key, 6)
    scale = 0.1
    return {
        "w1": scale * jax.random.normal(k1, (16, 1, 5, 5), jnp.float32),
        "b1": scale * jax.random.normal(k2, (16,), jnp.float32),
        "w2": scale * jax.random.normal(k3, (32, 16, 5, 5), jnp.float32),
        "b2": scale * jax.random.normal(k4, (32,), jnp.float32),
        "w_out": scale * jax.random.normal(k5, (10, 32 * 7 * 7), jnp.float32),
        "b_out": scale * jax.random.normal(k6, (10,), jnp.float32),
    }


def _reference(x, params):
    """Pure-JAX forward matching the PyTorch module (for a correctness cross-check)."""
    hp = jax.lax.Precision.HIGHEST
    dn = ("NCHW", "OIHW", "NCHW")
    y = jax.lax.conv_general_dilated(x, params["w1"], (1, 1), ((2, 2), (2, 2)),
                                     dimension_numbers=dn, precision=hp)
    y = jnp.maximum(y + params["b1"][None, :, None, None], 0.0)
    y = jax.lax.reduce_window(y, -jnp.inf, jax.lax.max, (1, 1, 2, 2), (1, 1, 2, 2), "VALID")
    y = jax.lax.conv_general_dilated(y, params["w2"], (1, 1), ((2, 2), (2, 2)),
                                     dimension_numbers=dn, precision=hp)
    y = jnp.maximum(y + params["b2"][None, :, None, None], 0.0)
    y = jax.lax.reduce_window(y, -jnp.inf, jax.lax.max, (1, 1, 2, 2), (1, 1, 2, 2), "VALID")
    flat = y.reshape(y.shape[0], -1)
    return jnp.dot(flat, params["w_out"].T, precision=hp) + params["b_out"]


if __name__ == "__main__":
    key = jax.random.PRNGKey(0)
    k_x, k_p = jax.random.split(key)
    # forward implies MNIST-style input: 28x28 so the flatten gives 32*7*7
    x = jax.random.normal(k_x, (2, 1, 28, 28), jnp.float32)
    params = init_params(k_p)
    prep = prepare_params(params)   # one-time host-side weight preparation

    out = jax.jit(cnn_forward)(x, prep)
    out = jax.block_until_ready(out)
    assert out.shape == (2, 10), out.shape
    assert out.dtype == jnp.float32
    assert bool(jnp.all(jnp.isfinite(out)))

    ref = _reference(x, params)
    max_err = float(jnp.max(jnp.abs(out - ref)))
    assert bool(jnp.allclose(out, ref, rtol=5e-2, atol=5e-2)), max_err
    print("KERNEL_OK")
</pallas_src>

<mosaic_0001>
module attributes {stable_mosaic.version = 11 : i64} {
  func.func @_cnn_kernel(%arg0: i32, %arg1: memref<1x5x56x28xf32, #tpu.memory_space<vmem>>, %arg2: memref<5x28x224xf32, #tpu.memory_space<vmem>>, %arg3: memref<5x28x224xf32, #tpu.memory_space<vmem>>, %arg4: memref<1x224xf32, #tpu.memory_space<vmem>>, %arg5: memref<5x224x224xf32, #tpu.memory_space<vmem>>, %arg6: memref<5x224x224xf32, #tpu.memory_space<vmem>>, %arg7: memref<1x224xf32, #tpu.memory_space<vmem>>, %arg8: memref<7x224x128xf32, #tpu.memory_space<vmem>>, %arg9: memref<1x128xf32, #tpu.memory_space<vmem>>, %arg10: memref<2x128xf32, #tpu.memory_space<vmem>>, %arg11: memref<56x224xf32, #tpu.memory_space<vmem>>, %arg12: memref<36x224xf32, #tpu.memory_space<vmem>>, %arg13: memref<28x224xf32, #tpu.memory_space<vmem>>) attributes {dimension_semantics = [#tpu.dimension_semantics<parallel>], iteration_bounds = array<i64: 1>, scalar_prefetch = 0 : i64, scratch_operands = 3 : i64, tpu.core_type = #tpu.core_type<tc>, window_params = [{transform_indices = @transform_0, window_bounds = array<i64: 1, 5, 56, 28>}, {pipeline_mode = #tpu.pipeline_mode<synchronous>, transform_indices = @transform_1, window_bounds = array<i64: 5, 28, 224>}, {pipeline_mode = #tpu.pipeline_mode<synchronous>, transform_indices = @transform_2, window_bounds = array<i64: 5, 28, 224>}, {pipeline_mode = #tpu.pipeline_mode<synchronous>, transform_indices = @transform_3, window_bounds = array<i64: 1, 224>}, {pipeline_mode = #tpu.pipeline_mode<synchronous>, transform_indices = @transform_4, window_bounds = array<i64: 5, 224, 224>}, {pipeline_mode = #tpu.pipeline_mode<synchronous>, transform_indices = @transform_5, window_bounds = array<i64: 5, 224, 224>}, {pipeline_mode = #tpu.pipeline_mode<synchronous>, transform_indices = @transform_6, window_bounds = array<i64: 1, 224>}, {pipeline_mode = #tpu.pipeline_mode<synchronous>, transform_indices = @transform_7, window_bounds = array<i64: 7, 224, 128>}, {pipeline_mode = #tpu.pipeline_mode<synchronous>, transform_indices = @transform_8, window_bounds = array<i64: 1, 128>}, {transform_indices = @transform_9, window_bounds = array<i64: 2, 128>}]} {
    %c0 = arith.constant 0 : index
    %c0_0 = arith.constant 0 : index
    %c0_1 = arith.constant 0 : index
    %c0_2 = arith.constant 0 : index
    %0 = vector.load %arg1[%c0, %c0_0, %c0_1, %c0_2] : memref<1x5x56x28xf32, #tpu.memory_space<vmem>>, vector<1x1x56x28xf32>
    %1 = vector.shape_cast %0 : vector<1x1x56x28xf32> to vector<56x28xf32>
    %c0_3 = arith.constant 0 : index
    %c0_4 = arith.constant 0 : index
    %c0_5 = arith.constant 0 : index
    %2 = vector.load %arg2[%c0_3, %c0_4, %c0_5] : memref<5x28x224xf32, #tpu.memory_space<vmem>>, vector<1x28x224xf32>
    %3 = vector.shape_cast %2 : vector<1x28x224xf32> to vector<28x224xf32>
    %cst = arith.constant dense<0.000000e+00> : vector<56x224xf32>
    %4 = tpu.matmul %1, %3, %cst {dimension_numbers = #tpu.dot_dimension_numbers<[1], [0], [0], [1], [0, 0, 1, 1], [], []>} : vector<56x28xf32>, vector<28x224xf32>, vector<56x224xf32> -> vector<56x224xf32>
    %c0_6 = arith.constant 0 : index
    %c0_7 = arith.constant 0 : index
    %c0_8 = arith.constant 0 : index
    %5 = vector.load %arg3[%c0_6, %c0_7, %c0_8] : memref<5x28x224xf32, #tpu.memory_space<vmem>>, vector<1x28x224xf32>
    %6 = vector.shape_cast %5 : vector<1x28x224xf32> to vector<28x224xf32>
    %cst_9 = arith.constant dense<0.000000e+00> : vector<56x224xf32>
    %7 = tpu.matmul %1, %6, %cst_9 {dimension_numbers = #tpu.dot_dimension_numbers<[1], [0], [0], [1], [0, 0, 1, 1], [], []>} : vector<56x28xf32>, vector<28x224xf32>, vector<56x224xf32> -> vector<56x224xf32>
    %c0_10 = arith.constant 0 : index
    %c1 = arith.constant 1 : index
    %c0_11 = arith.constant 0 : index
    %c0_12 = arith.constant 0 : index
    %8 = vector.load %arg1[%c0_10, %c1, %c0_11, %c0_12] : memref<1x5x56x28xf32, #tpu.memory_space<vmem>>, vector<1x1x56x28xf32>
    %9 = vector.shape_cast %8 : vector<1x1x56x28xf32> to vector<56x28xf32>
    %c1_13 = arith.constant 1 : index
    %c0_14 = arith.constant 0 : index
    %c0_15 = arith.constant 0 : index
    %10 = vector.load %arg2[%c1_13, %c0_14, %c0_15] : memref<5x28x224xf32, #tpu.memory_space<vmem>>, vector<1x28x224xf32>
    %11 = vector.shape_cast %10 : vector<1x28x224xf32> to vector<28x224xf32>
    %cst_16 = arith.constant dense<0.000000e+00> : vector<56x224xf32>
    %12 = tpu.matmul %9, %11, %cst_16 {dimension_numbers = #tpu.dot_dimension_numbers<[1], [0], [0], [1], [0, 0, 1, 1], [], []>} : vector<56x28xf32>, vector<28x224xf32>, vector<56x224xf32> -> vector<56x224xf32>
    %13 = arith.addf %4, %12 : vector<56x224xf32>
    %c1_17 = arith.constant 1 : index
    %c0_18 = arith.constant 0 : index
    %c0_19 = arith.constant 0 : index
    %14 = vector.load %arg3[%c1_17, %c0_18, %c0_19] : memref<5x28x224xf32, #tpu.memory_space<vmem>>, vector<1x28x224xf32>
    %15 = vector.shape_cast %14 : vector<1x28x224xf32> to vector<28x224xf32>
    %cst_20 = arith.constant dense<0.000000e+00> : vector<56x224xf32>
    %16 = tpu.matmul %9, %15, %cst_20 {dimension_numbers = #tpu.dot_dimension_numbers<[1], [0], [0], [1], [0, 0, 1, 1], [], []>} : vector<56x28xf32>, vector<28x224xf32>, vector<56x224xf32> -> vector<56x224xf32>
    %17 = arith.addf %7, %16 : vector<56x224xf32>
    %c0_21 = arith.constant 0 : index
    %c2 = arith.constant 2 : index
    %c0_22 = arith.constant 0 : index
    %c0_23 = arith.constant 0 : index
    %18 = vector.load %arg1[%c0_21, %c2, %c0_22, %c0_23] : memref<1x5x56x28xf32, #tpu.memory_space<vmem>>, vector<1x1x56x28xf32>
    %19 = vector.shape_cast %18 : vector<1x1x56x28xf32> to vector<56x28xf32>
    %c2_24 = arith.constant 2 : index
    %c0_25 = arith.constant 0 : index
    %c0_26 = arith.constant 0 : index
    %20 = vector.load %arg2[%c2_24, %c0_25, %c0_26] : memref<5x28x224xf32, #tpu.memory_space<vmem>>, vector<1x28x224xf32>
    %21 = vector.shape_cast %20 : vector<1x28x224xf32> to vector<28x224xf32>
    %cst_27 = arith.constant dense<0.000000e+00> : vector<56x224xf32>
    %22 = tpu.matmul %19, %21, %cst_27 {dimension_numbers = #tpu.dot_dimension_numbers<[1], [0], [0], [1], [0, 0, 1, 1], [], []>} : vector<56x28xf32>, vector<28x224xf32>, vector<56x224xf32> -> vector<56x224xf32>
    %23 = arith.addf %13, %22 : vector<56x224xf32>
    %c2_28 = arith.constant 2 : index
    %c0_29 = arith.constant 0 : index
    %c0_30 = arith.constant 0 : index
    %24 = vector.load %arg3[%c2_28, %c0_29, %c0_30] : memref<5x28x224xf32, #tpu.memory_space<vmem>>, vector<1x28x224xf32>
    %25 = vector.shape_cast %24 : vector<1x28x224xf32> to vector<28x224xf32>
    %cst_31 = arith.constant dense<0.000000e+00> : vector<56x224xf32>
    %26 = tpu.matmul %19, %25, %cst_31 {dimension_numbers = #tpu.dot_dimension_numbers<[1], [0], [0], [1], [0, 0, 1, 1], [], []>} : vector<56x28xf32>, vector<28x224xf32>, vector<56x224xf32> -> vector<56x224xf32>
    %27 = arith.addf %17, %26 : vector<56x224xf32>
    %c0_32 = arith.constant 0 : index
    %c3 = arith.constant 3 : index
    %c0_33 = arith.constant 0 : index
    %c0_34 = arith.constant 0 : index
    %28 = vector.load %arg1[%c0_32, %c3, %c0_33, %c0_34] : memref<1x5x56x28xf32, #tpu.memory_space<vmem>>, vector<1x1x56x28xf32>
    %29 = vector.shape_cast %28 : vector<1x1x56x28xf32> to vector<56x28xf32>
    %c3_35 = arith.constant 3 : index
    %c0_36 = arith.constant 0 : index
    %c0_37 = arith.constant 0 : index
    %30 = vector.load %arg2[%c3_35, %c0_36, %c0_37] : memref<5x28x224xf32, #tpu.memory_space<vmem>>, vector<1x28x224xf32>
    %31 = vector.shape_cast %30 : vector<1x28x224xf32> to vector<28x224xf32>
    %cst_38 = arith.constant dense<0.000000e+00> : vector<56x224xf32>
    %32 = tpu.matmul %29, %31, %cst_38 {dimension_numbers = #tpu.dot_dimension_numbers<[1], [0], [0], [1], [0, 0, 1, 1], [], []>} : vector<56x28xf32>, vector<28x224xf32>, vector<56x224xf32> -> vector<56x224xf32>
    %33 = arith.addf %23, %32 : vector<56x224xf32>
    %c3_39 = arith.constant 3 : index
    %c0_40 = arith.constant 0 : index
    %c0_41 = arith.constant 0 : index
    %34 = vector.load %arg3[%c3_39, %c0_40, %c0_41] : memref<5x28x224xf32, #tpu.memory_space<vmem>>, vector<1x28x224xf32>
    %35 = vector.shape_cast %34 : vector<1x28x224xf32> to vector<28x224xf32>
    %cst_42 = arith.constant dense<0.000000e+00> : vector<56x224xf32>
    %36 = tpu.matmul %29, %35, %cst_42 {dimension_numbers = #tpu.dot_dimension_numbers<[1], [0], [0], [1], [0, 0, 1, 1], [], []>} : vector<56x28xf32>, vector<28x224xf32>, vector<56x224xf32> -> vector<56x224xf32>
    %37 = arith.addf %27, %36 : vector<56x224xf32>
    %c0_43 = arith.constant 0 : index
    %c4 = arith.constant 4 : index
    %c0_44 = arith.constant 0 : index
    %c0_45 = arith.constant 0 : index
    %38 = vector.load %arg1[%c0_43, %c4, %c0_44, %c0_45] : memref<1x5x56x28xf32, #tpu.memory_space<vmem>>, vector<1x1x56x28xf32>
    %39 = vector.shape_cast %38 : vector<1x1x56x28xf32> to vector<56x28xf32>
    %c4_46 = arith.constant 4 : index
    %c0_47 = arith.constant 0 : index
    %c0_48 = arith.constant 0 : index
    %40 = vector.load %arg2[%c4_46, %c0_47, %c0_48] : memref<5x28x224xf32, #tpu.memory_space<vmem>>, vector<1x28x224xf32>
    %41 = vector.shape_cast %40 : vector<1x28x224xf32> to vector<28x224xf32>
    %cst_49 = arith.constant dense<0.000000e+00> : vector<56x224xf32>
    %42 = tpu.matmul %39, %41, %cst_49 {dimension_numbers = #tpu.dot_dimension_numbers<[1], [0], [0], [1], [0, 0, 1, 1], [], []>} : vector<56x28xf32>, vector<28x224xf32>, vector<56x224xf32> -> vector<56x224xf32>
    %43 = arith.addf %33, %42 : vector<56x224xf32>
    %c4_50 = arith.constant 4 : index
    %c0_51 = arith.constant 0 : index
    %c0_52 = arith.constant 0 : index
    %44 = vector.load %arg3[%c4_50, %c0_51, %c0_52] : memref<5x28x224xf32, #tpu.memory_space<vmem>>, vector<1x28x224xf32>
    %45 = vector.shape_cast %44 : vector<1x28x224xf32> to vector<28x224xf32>
    %cst_53 = arith.constant dense<0.000000e+00> : vector<56x224xf32>
    %46 = tpu.matmul %39, %45, %cst_53 {dimension_numbers = #tpu.dot_dimension_numbers<[1], [0], [0], [1], [0, 0, 1, 1], [], []>} : vector<56x28xf32>, vector<28x224xf32>, vector<56x224xf32> -> vector<56x224xf32>
    %47 = arith.addf %37, %46 : vector<56x224xf32>
    %48 = arith.maximumf %43, %47 : vector<56x224xf32>
    %c0_54 = arith.constant 0 : index
    %c0_55 = arith.constant 0 : index
    %49 = vector.load %arg4[%c0_54, %c0_55] : memref<1x224xf32, #tpu.memory_space<vmem>>, vector<1x224xf32>
    %50 = vector.broadcast %49 : vector<1x224xf32> to vector<56x224xf32>
    %51 = arith.addf %48, %50 : vector<56x224xf32>
    %cst_56 = arith.constant 0.000000e+00 : f32
    %52 = vector.broadcast %cst_56 : f32 to vector<56x224xf32>
    %53 = arith.maximumf %51, %52 : vector<56x224xf32>
    %c0_57 = arith.constant 0 : index
    %c0_58 = arith.constant 0 : index
    %54 = vector.load %arg11[%c0_57, %c0_58] : memref<56x224xf32, #tpu.memory_space<vmem>>, vector<56x224xf32>
    tpu.vector_store %arg11[%c0_57, %c0_58], %53 {strides = array<i32>} : memref<56x224xf32, #tpu.memory_space<vmem>>, vector<56x224xf32>,
    %cst_59 = arith.constant 0.000000e+00 : f32
    %55 = vector.broadcast %cst_59 : f32 to vector<4x224xf32>
    %c0_60 = arith.constant 0 : index
    %c0_61 = arith.constant 0 : index
    %56 = vector.load %arg12[%c0_60, %c0_61] : memref<36x224xf32, #tpu.memory_space<vmem>>, vector<4x224xf32>
    tpu.vector_store %arg12[%c0_60, %c0_61], %55 {strides = array<i32>} : memref<36x224xf32, #tpu.memory_space<vmem>>, vector<4x224xf32>,
    %c32 = arith.constant 32 : index
    %c0_62 = arith.constant 0 : index
    %57 = vector.load %arg12[%c32, %c0_62] : memref<36x224xf32, #tpu.memory_space<vmem>>, vector<4x224xf32>
    tpu.vector_store %arg12[%c32, %c0_62], %55 {strides = array<i32>} : memref<36x224xf32, #tpu.memory_space<vmem>>, vector<4x224xf32>,
    %c0_63 = arith.constant 0 : index
    %c0_64 = arith.constant 0 : index
    %58 = vector.load %arg11[%c0_63, %c0_64] : memref<56x224xf32, #tpu.memory_space<vmem>>, vector<2x224xf32>
    %c2_65 = arith.constant 2 : index
    %c0_66 = arith.constant 0 : index
    %59 = vector.load %arg11[%c2_65, %c0_66] : memref<56x224xf32, #tpu.memory_space<vmem>>, vector<2x224xf32>
    %60 = arith.maximumf %58, %59 : vector<2x224xf32>
    %c4_67 = arith.constant 4 : index
    %c0_68 = arith.constant 0 : index
    %61 = vector.load %arg12[%c4_67, %c0_68] : memref<36x224xf32, #tpu.memory_space<vmem>>, vector<2x224xf32>
    tpu.vector_store %arg12[%c4_67, %c0_68], %60 {strides = array<i32>} : memref<36x224xf32, #tpu.memory_space<vmem>>, vector<2x224xf32>,
    %c4_69 = arith.constant 4 : index
    %c0_70 = arith.constant 0 : index
    %62 = vector.load %arg11[%c4_69, %c0_70] : memref<56x224xf32, #tpu.memory_space<vmem>>, vector<2x224xf32>
    %c6 = arith.constant 6 : index
    %c0_71 = arith.constant 0 : index
    %63 = vector.load %arg11[%c6, %c0_71] : memref<56x224xf32, #tpu.memory_space<vmem>>, vector<2x224xf32>
    %64 = arith.maximumf %62, %63 : vector<2x224xf32>
    %c6_72 = arith.constant 6 : index
    %c0_73 = arith.constant 0 : index
    %65 = vector.load %arg12[%c6_72, %c0_73] : memref<36x224xf32, #tpu.memory_space<vmem>>, vector<2x224xf32>
    tpu.vector_store %arg12[%c6_72, %c0_73], %64 {strides = array<i32>} : memref<36x224xf32, #tpu.memory_space<vmem>>, vector<2x224xf32>,
    %c8 = arith.constant 8 : index
    %c0_74 = arith.constant 0 : index
    %66 = vector.load %arg11[%c8, %c0_74] : memref<56x224xf32, #tpu.memory_space<vmem>>, vector<2x224xf32>
    %c10 = arith.constant 10 : index
    %c0_75 = arith.constant 0 : index
    %67 = vector.load %arg11[%c10, %c0_75] : memref<56x224xf32, #tpu.memory_space<vmem>>, vector<2x224xf32>
    %68 = arith.maximumf %66, %67 : vector<2x224xf32>
    %c8_76 = arith.constant 8 : index
    %c0_77 = arith.constant 0 : index
    %69 = vector.load %arg12[%c8_76, %c0_77] : memref<36x224xf32, #tpu.memory_space<vmem>>, vector<2x224xf32>
    tpu.vector_store %arg12[%c8_76, %c0_77], %68 {strides = array<i32>} : memref<36x224xf32, #tpu.memory_space<vmem>>, vector<2x224xf32>,
    %c12 = arith.constant 12 : index
    %c0_78 = arith.constant 0 : index
    %70 = vector.load %arg11[%c12, %c0_78] : memref<56x224xf32, #tpu.memory_space<vmem>>, vector<2x224xf32>
    %c14 = arith.constant 14 : index
    %c0_79 = arith.constant 0 : index
    %71 = vector.load %arg11[%c14, %c0_79] : memref<56x224xf32, #tpu.memory_space<vmem>>, vector<2x224xf32>
    %72 = arith.maximumf %70, %71 : vector<2x224xf32>
    %c10_80 = arith.constant 10 : index
    %c0_81 = arith.constant 0 : index
    %73 = vector.load %arg12[%c10_80, %c0_81] : memref<36x224xf32, #tpu.memory_space<vmem>>, vector<2x224xf32>
    tpu.vector_store %arg12[%c10_80, %c0_81], %72 {strides = array<i32>} : memref<36x224xf32, #tpu.memory_space<vmem>>, vector<2x224xf32>,
    %c16 = arith.constant 16 : index
    %c0_82 = arith.constant 0 : index
    %74 = vector.load %arg11[%c16, %c0_82] : memref<56x224xf32, #tpu.memory_space<vmem>>, vector<2x224xf32>
    %c18 = arith.constant 18 : index
    %c0_83 = arith.constant 0 : index
    %75 = vector.load %arg11[%c18, %c0_83] : memref<56x224xf32, #tpu.memory_space<vmem>>, vector<2x224xf32>
    %76 = arith.maximumf %74, %75 : vector<2x224xf32>
    %c12_84 = arith.constant 12 : index
    %c0_85 = arith.constant 0 : index
    %77 = vector.load %arg12[%c12_84, %c0_85] : memref<36x224xf32, #tpu.memory_space<vmem>>, vector<2x224xf32>
    tpu.vector_store %arg12[%c12_84, %c0_85], %76 {strides = array<i32>} : memref<36x224xf32, #tpu.memory_space<vmem>>, vector<2x224xf32>,
    %c20 = arith.constant 20 : index
    %c0_86 = arith.constant 0 : index
    %78 = vector.load %arg11[%c20, %c0_86] : memref<56x224xf32, #tpu.memory_space<vmem>>, vector<2x224xf32>
    %c22 = arith.constant 22 : index
    %c0_87 = arith.constant 0 : index
    %79 = vector.load %arg11[%c22, %c0_87] : memref<56x224xf32, #tpu.memory_space<vmem>>, vector<2x224xf32>
    %80 = arith.maximumf %78, %79 : vector<2x224xf32>
    %c14_88 = arith.constant 14 : index
    %c0_89 = arith.constant 0 : index
    %81 = vector.load %arg12[%c14_88, %c0_89] : memref<36x224xf32, #tpu.memory_space<vmem>>, vector<2x224xf32>
    tpu.vector_store %arg12[%c14_88, %c0_89], %80 {strides = array<i32>} : memref<36x224xf32, #tpu.memory_space<vmem>>, vector<2x224xf32>,
    %c24 = arith.constant 24 : index
    %c0_90 = arith.constant 0 : index
    %82 = vector.load %arg11[%c24, %c0_90] : memref<56x224xf32, #tpu.memory_space<vmem>>, vector<2x224xf32>
    %c26 = arith.constant 26 : index
    %c0_91 = arith.constant 0 : index
    %83 = vector.load %arg11[%c26, %c0_91] : memref<56x224xf32, #tpu.memory_space<vmem>>, vector<2x224xf32>
    %84 = arith.maximumf %82, %83 : vector<2x224xf32>
    %c16_92 = arith.constant 16 : index
    %c0_93 = arith.constant 0 : index
    %85 = vector.load %arg12[%c16_92, %c0_93] : memref<36x224xf32, #tpu.memory_space<vmem>>, vector<2x224xf32>
    tpu.vector_store %arg12[%c16_92, %c0_93], %84 {strides = array<i32>} : memref<36x224xf32, #tpu.memory_space<vmem>>, vector<2x224xf32>,
    %c28 = arith.constant 28 : index
    %c0_94 = arith.constant 0 : index
    %86 = vector.load %arg11[%c28, %c0_94] : memref<56x224xf32, #tpu.memory_space<vmem>>, vector<2x224xf32>
    %c30 = arith.constant 30 : index
    %c0_95 = arith.constant 0 : index
    %87 = vector.load %arg11[%c30, %c0_95] : memref<56x224xf32, #tpu.memory_space<vmem>>, vector<2x224xf32>
    %88 = arith.maximumf %86, %87 : vector<2x224xf32>
    %c18_96 = arith.constant 18 : index
    %c0_97 = arith.constant 0 : index
    %89 = vector.load %arg12[%c18_96, %c0_97] : memref<36x224xf32, #tpu.memory_space<vmem>>, vector<2x224xf32>
    tpu.vector_store %arg12[%c18_96, %c0_97], %88 {strides = array<i32>} : memref<36x224xf32, #tpu.memory_space<vmem>>, vector<2x224xf32>,
    %c32_98 = arith.constant 32 : index
    %c0_99 = arith.constant 0 : index
    %90 = vector.load %arg11[%c32_98, %c0_99] : memref<56x224xf32, #tpu.memory_space<vmem>>, vector<2x224xf32>
    %c34 = arith.constant 34 : index
    %c0_100 = arith.constant 0 : index
    %91 = vector.load %arg11[%c34, %c0_100] : memref<56x224xf32, #tpu.memory_space<vmem>>, vector<2x224xf32>
    %92 = arith.maximumf %90, %91 : vector<2x224xf32>
    %c20_101 = arith.constant 20 : index
    %c0_102 = arith.constant 0 : index
    %93 = vector.load %arg12[%c20_101, %c0_102] : memref<36x224xf32, #tpu.memory_space<vmem>>, vector<2x224xf32>
    tpu.vector_store %arg12[%c20_101, %c0_102], %92 {strides = array<i32>} : memref<36x224xf32, #tpu.memory_space<vmem>>, vector<2x224xf32>,
    %c36 = arith.constant 36 : index
    %c0_103 = arith.constant 0 : index
    %94 = vector.load %arg11[%c36, %c0_103] : memref<56x224xf32, #tpu.memory_space<vmem>>, vector<2x224xf32>
    %c38 = arith.constant 38 : index
    %c0_104 = arith.constant 0 : index
    %95 = vector.load %arg11[%c38, %c0_104] : memref<56x224xf32, #tpu.memory_space<vmem>>, vector<2x224xf32>
    %96 = arith.maximumf %94, %95 : vector<2x224xf32>
    %c22_105 = arith.constant 22 : index
    %c0_106 = arith.constant 0 : index
    %97 = vector.load %arg12[%c22_105, %c0_106] : memref<36x224xf32, #tpu.memory_space<vmem>>, vector<2x224xf32>
    tpu.vector_store %arg12[%c22_105, %c0_106], %96 {strides = array<i32>} : memref<36x224xf32, #tpu.memory_space<vmem>>, vector<2x224xf32>,
    %c40 = arith.constant 40 : index
    %c0_107 = arith.constant 0 : index
    %98 = vector.load %arg11[%c40, %c0_107] : memref<56x224xf32, #tpu.memory_space<vmem>>, vector<2x224xf32>
    %c42 = arith.constant 42 : index
    %c0_108 = arith.constant 0 : index
    %99 = vector.load %arg11[%c42, %c0_108] : memref<56x224xf32, #tpu.memory_space<vmem>>, vector<2x224xf32>
    %100 = arith.maximumf %98, %99 : vector<2x224xf32>
    %c24_109 = arith.constant 24 : index
    %c0_110 = arith.constant 0 : index
    %101 = vector.load %arg12[%c24_109, %c0_110] : memref<36x224xf32, #tpu.memory_space<vmem>>, vector<2x224xf32>
    tpu.vector_store %arg12[%c24_109, %c0_110], %100 {strides = array<i32>} : memref<36x224xf32, #tpu.memory_space<vmem>>, vector<2x224xf32>,
    %c44 = arith.constant 44 : index
    %c0_111 = arith.constant 0 : index
    %102 = vector.load %arg11[%c44, %c0_111] : memref<56x224xf32, #tpu.memory_space<vmem>>, vector<2x224xf32>
    %c46 = arith.constant 46 : index
    %c0_112 = arith.constant 0 : index
    %103 = vector.load %arg11[%c46, %c0_112] : memref<56x224xf32, #tpu.memory_space<vmem>>, vector<2x224xf32>
    %104 = arith.maximumf %102, %103 : vector<2x224xf32>
    %c26_113 = arith.constant 26 : index
    %c0_114 = arith.constant 0 : index
    %105 = vector.load %arg12[%c26_113, %c0_114] : memref<36x224xf32, #tpu.memory_space<vmem>>, vector<2x224xf32>
    tpu.vector_store %arg12[%c26_113, %c0_114], %104 {strides = array<i32>} : memref<36x224xf32, #tpu.memory_space<vmem>>, vector<2x224xf32>,
    %c48 = arith.constant 48 : index
    %c0_115 = arith.constant 0 : index
    %106 = vector.load %arg11[%c48, %c0_115] : memref<56x224xf32, #tpu.memory_space<vmem>>, vector<2x224xf32>
    %c50 = arith.constant 50 : index
    %c0_116 = arith.constant 0 : index
    %107 = vector.load %arg11[%c50, %c0_116] : memref<56x224xf32, #tpu.memory_space<vmem>>, vector<2x224xf32>
    %108 = arith.maximumf %106, %107 : vector<2x224xf32>
    %c28_117 = arith.constant 28 : index
    %c0_118 = arith.constant 0 : index
    %109 = vector.load %arg12[%c28_117, %c0_118] : memref<36x224xf32, #tpu.memory_space<vmem>>, vector<2x224xf32>
    tpu.vector_store %arg12[%c28_117, %c0_118], %108 {strides = array<i32>} : memref<36x224xf32, #tpu.memory_space<vmem>>, vector<2x224xf32>,
    %c52 = arith.constant 52 : index
    %c0_119 = arith.constant 0 : index
    %110 = vector.load %arg11[%c52, %c0_119] : memref<56x224xf32, #tpu.memory_space<vmem>>, vector<2x224xf32>
    %c54 = arith.constant 54 : index
    %c0_120 = arith.constant 0 : index
    %111 = vector.load %arg11[%c54, %c0_120] : memref<56x224xf32, #tpu.memory_space<vmem>>, vector<2x224xf32>
    %112 = arith.maximumf %110, %111 : vector<2x224xf32>
    %c30_121 = arith.constant 30 : index
    %c0_122 = arith.constant 0 : index
    %113 = vector.load %arg12[%c30_121, %c0_122] : memref<36x224xf32, #tpu.memory_space<vmem>>, vector<2x224xf32>
    tpu.vector_store %arg12[%c30_121, %c0_122], %112 {strides = array<i32>} : memref<36x224xf32, #tpu.memory_space<vmem>>, vector<2x224xf32>,
    %c0_123 = arith.constant 0 : index
    %c0_124 = arith.constant 0 : index
    %114 = vector.load %arg12[%c0_123, %c0_124] : memref<36x224xf32, #tpu.memory_space<vmem>>, vector<28x224xf32>
    %c0_125 = arith.constant 0 : index
    %c0_126 = arith.constant 0 : index
    %c0_127 = arith.constant 0 : index
    %115 = vector.load %arg5[%c0_125, %c0_126, %c0_127] : memref<5x224x224xf32, #tpu.memory_space<vmem>>, vector<1x224x224xf32>
    %116 = vector.shape_cast %115 : vector<1x224x224xf32> to vector<224x224xf32>
    %cst_128 = arith.constant dense<0.000000e+00> : vector<28x224xf32>
    %117 = tpu.matmul %114, %116, %cst_128 {dimension_numbers = #tpu.dot_dimension_numbers<[1], [0], [0], [1], [0, 0, 1, 1], [], []>} : vector<28x224xf32>, vector<224x224xf32>, vector<28x224xf32> -> vector<28x224xf32>
    %c0_129 = arith.constant 0 : index
    %c0_130 = arith.constant 0 : index
    %c0_131 = arith.constant 0 : index
    %118 = vector.load %arg6[%c0_129, %c0_130, %c0_131] : memref<5x224x224xf32, #tpu.memory_space<vmem>>, vector<1x224x224xf32>
    %119 = vector.shape_cast %118 : vector<1x224x224xf32> to vector<224x224xf32>
    %cst_132 = arith.constant dense<0.000000e+00> : vector<28x224xf32>
    %120 = tpu.matmul %114, %119, %cst_132 {dimension_numbers = #tpu.dot_dimension_numbers<[1], [0], [0], [1], [0, 0, 1, 1], [], []>} : vector<28x224xf32>, vector<224x224xf32>, vector<28x224xf32> -> vector<28x224xf32>
    %c2_133 = arith.constant 2 : index
    %c0_134 = arith.constant 0 : index
    %121 = vector.load %arg12[%c2_133, %c0_134] : memref<36x224xf32, #tpu.memory_space<vmem>>, vector<28x224xf32>
    %c1_135 = arith.constant 1 : index
    %c0_136 = arith.constant 0 : index
    %c0_137 = arith.constant 0 : index
    %122 = vector.load %arg5[%c1_135, %c0_136, %c0_137] : memref<5x224x224xf32, #tpu.memory_space<vmem>>, vector<1x224x224xf32>
    %123 = vector.shape_cast %122 : vector<1x224x224xf32> to vector<224x224xf32>
    %cst_138 = arith.constant dense<0.000000e+00> : vector<28x224xf32>
    %124 = tpu.matmul %121, %123, %cst_138 {dimension_numbers = #tpu.dot_dimension_numbers<[1], [0], [0], [1], [0, 0, 1, 1], [], []>} : vector<28x224xf32>, vector<224x224xf32>, vector<28x224xf32> -> vector<28x224xf32>
    %125 = arith.addf %117, %124 : vector<28x224xf32>
    %c1_139 = arith.constant 1 : index
    %c0_140 = arith.constant 0 : index
    %c0_141 = arith.constant 0 : index
    %126 = vector.load %arg6[%c1_139, %c0_140, %c0_141] : memref<5x224x224xf32, #tpu.memory_space<vmem>>, vector<1x224x224xf32>
    %127 = vector.shape_cast %126 : vector<1x224x224xf32> to vector<224x224xf32>
    %cst_142 = arith.constant dense<0.000000e+00> : vector<28x224xf32>
    %128 = tpu.matmul %121, %127, %cst_142 {dimension_numbers = #tpu.dot_dimension_numbers<[1], [0], [0], [1], [0, 0, 1, 1], [], []>} : vector<28x224xf32>, vector<224x224xf32>, vector<28x224xf32> -> vector<28x224xf32>
    %129 = arith.addf %120, %128 : vector<28x224xf32>
    %c4_143 = arith.constant 4 : index
    %c0_144 = arith.constant 0 : index
    %130 = vector.load %arg12[%c4_143, %c0_144] : memref<36x224xf32, #tpu.memory_space<vmem>>, vector<28x224xf32>
    %c2_145 = arith.constant 2 : index
    %c0_146 = arith.constant 0 : index
    %c0_147 = arith.constant 0 : index
    %131 = vector.load %arg5[%c2_145, %c0_146, %c0_147] : memref<5x224x224xf32, #tpu.memory_space<vmem>>, vector<1x224x224xf32>
    %132 = vector.shape_cast %131 : vector<1x224x224xf32> to vector<224x224xf32>
    %cst_148 = arith.constant dense<0.000000e+00> : vector<28x224xf32>
    %133 = tpu.matmul %130, %132, %cst_148 {dimension_numbers = #tpu.dot_dimension_numbers<[1], [0], [0], [1], [0, 0, 1, 1], [], []>} : vector<28x224xf32>, vector<224x224xf32>, vector<28x224xf32> -> vector<28x224xf32>
    %134 = arith.addf %125, %133 : vector<28x224xf32>
    %c2_149 = arith.constant 2 : index
    %c0_150 = arith.constant 0 : index
    %c0_151 = arith.constant 0 : index
    %135 = vector.load %arg6[%c2_149, %c0_150, %c0_151] : memref<5x224x224xf32, #tpu.memory_space<vmem>>, vector<1x224x224xf32>
    %136 = vector.shape_cast %135 : vector<1x224x224xf32> to vector<224x224xf32>
    %cst_152 = arith.constant dense<0.000000e+00> : vector<28x224xf32>
    %137 = tpu.matmul %130, %136, %cst_152 {dimension_numbers = #tpu.dot_dimension_numbers<[1], [0], [0], [1], [0, 0, 1, 1], [], []>} : vector<28x224xf32>, vector<224x224xf32>, vector<28x224xf32> -> vector<28x224xf32>
    %138 = arith.addf %129, %137 : vector<28x224xf32>
    %c6_153 = arith.constant 6 : index
    %c0_154 = arith.constant 0 : index
    %139 = vector.load %arg12[%c6_153, %c0_154] : memref<36x224xf32, #tpu.memory_space<vmem>>, vector<28x224xf32>
    %c3_155 = arith.constant 3 : index
    %c0_156 = arith.constant 0 : index
    %c0_157 = arith.constant 0 : index
    %140 = vector.load %arg5[%c3_155, %c0_156, %c0_157] : memref<5x224x224xf32, #tpu.memory_space<vmem>>, vector<1x224x224xf32>
    %141 = vector.shape_cast %140 : vector<1x224x224xf32> to vector<224x224xf32>
    %cst_158 = arith.constant dense<0.000000e+00> : vector<28x224xf32>
    %142 = tpu.matmul %139, %141, %cst_158 {dimension_numbers = #tpu.dot_dimension_numbers<[1], [0], [0], [1], [0, 0, 1, 1], [], []>} : vector<28x224xf32>, vector<224x224xf32>, vector<28x224xf32> -> vector<28x224xf32>
    %143 = arith.addf %134, %142 : vector<28x224xf32>
    %c3_159 = arith.constant 3 : index
    %c0_160 = arith.constant 0 : index
    %c0_161 = arith.constant 0 : index
    %144 = vector.load %arg6[%c3_159, %c0_160, %c0_161] : memref<5x224x224xf32, #tpu.memory_space<vmem>>, vector<1x224x224xf32>
    %145 = vector.shape_cast %144 : vector<1x224x224xf32> to vector<224x224xf32>
    %cst_162 = arith.constant dense<0.000000e+00> : vector<28x224xf32>
    %146 = tpu.matmul %139, %145, %cst_162 {dimension_numbers = #tpu.dot_dimension_numbers<[1], [0], [0], [1], [0, 0, 1, 1], [], []>} : vector<28x224xf32>, vector<224x224xf32>, vector<28x224xf32> -> vector<28x224xf32>
    %147 = arith.addf %138, %146 : vector<28x224xf32>
    %c8_163 = arith.constant 8 : index
    %c0_164 = arith.constant 0 : index
    %148 = vector.load %arg12[%c8_163, %c0_164] : memref<36x224xf32, #tpu.memory_space<vmem>>, vector<28x224xf32>
    %c4_165 = arith.constant 4 : index
    %c0_166 = arith.constant 0 : index
    %c0_167 = arith.constant 0 : index
    %149 = vector.load %arg5[%c4_165, %c0_166, %c0_167] : memref<5x224x224xf32, #tpu.memory_space<vmem>>, vector<1x224x224xf32>
    %150 = vector.shape_cast %149 : vector<1x224x224xf32> to vector<224x224xf32>
    %cst_168 = arith.constant dense<0.000000e+00> : vector<28x224xf32>
    %151 = tpu.matmul %148, %150, %cst_168 {dimension_numbers = #tpu.dot_dimension_numbers<[1], [0], [0], [1], [0, 0, 1, 1], [], []>} : vector<28x224xf32>, vector<224x224xf32>, vector<28x224xf32> -> vector<28x224xf32>
    %152 = arith.addf %143, %151 : vector<28x224xf32>
    %c4_169 = arith.constant 4 : index
    %c0_170 = arith.constant 0 : index
    %c0_171 = arith.constant 0 : index
    %153 = vector.load %arg6[%c4_169, %c0_170, %c0_171] : memref<5x224x224xf32, #tpu.memory_space<vmem>>, vector<1x224x224xf32>
    %154 = vector.shape_cast %153 : vector<1x224x224xf32> to vector<224x224xf32>
    %cst_172 = arith.constant dense<0.000000e+00> : vector<28x224xf32>
    %155 = tpu.matmul %148, %154, %cst_172 {dimension_numbers = #tpu.dot_dimension_numbers<[1], [0], [0], [1], [0, 0, 1, 1], [], []>} : vector<28x224xf32>, vector<224x224xf32>, vector<28x224xf32> -> vector<28x224xf32>
    %156 = arith.addf %147, %155 : vector<28x224xf32>
    %157 = arith.maximumf %152, %156 : vector<28x224xf32>
    %c0_173 = arith.constant 0 : index
    %c0_174 = arith.constant 0 : index
    %158 = vector.load %arg7[%c0_173, %c0_174] : memref<1x224xf32, #tpu.memory_space<vmem>>, vector<1x224xf32>
    %159 = vector.broadcast %158 : vector<1x224xf32> to vector<28x224xf32>
    %160 = arith.addf %157, %159 : vector<28x224xf32>
    %cst_175 = arith.constant 0.000000e+00 : f32
    %161 = vector.broadcast %cst_175 : f32 to vector<28x224xf32>
    %162 = arith.maximumf %160, %161 : vector<28x224xf32>
    %c0_176 = arith.constant 0 : index
    %c0_177 = arith.constant 0 : index
    %163 = vector.load %arg13[%c0_176, %c0_177] : memref<28x224xf32, #tpu.memory_space<vmem>>, vector<28x224xf32>
    tpu.vector_store %arg13[%c0_176, %c0_177], %162 {strides = array<i32>} : memref<28x224xf32, #tpu.memory_space<vmem>>, vector<28x224xf32>,
    %cst_178 = arith.constant 0.000000e+00 : f32
    %164 = vector.broadcast %cst_178 : f32 to vector<2x128xf32>
    %c0_179 = arith.constant 0 : index
    %c0_180 = arith.constant 0 : index
    %165 = vector.load %arg13[%c0_179, %c0_180] : memref<28x224xf32, #tpu.memory_space<vmem>>, vector<2x224xf32>
    %c2_181 = arith.constant 2 : index
    %c0_182 = arith.constant 0 : index
    %166 = vector.load %arg13[%c2_181, %c0_182] : memref<28x224xf32, #tpu.memory_space<vmem>>, vector<2x224xf32>
    %167 = arith.maximumf %165, %166 : vector<2x224xf32>
    %c0_183 = arith.constant 0 : index
    %c0_184 = arith.constant 0 : index
    %c0_185 = arith.constant 0 : index
    %168 = vector.load %arg8[%c0_183, %c0_184, %c0_185] : memref<7x224x128xf32, #tpu.memory_space<vmem>>, vector<1x224x128xf32>
    %169 = vector.shape_cast %168 : vector<1x224x128xf32> to vector<224x128xf32>
    %cst_186 = arith.constant dense<0.000000e+00> : vector<2x128xf32>
    %170 = tpu.matmul %167, %169, %cst_186 {dimension_numbers = #tpu.dot_dimension_numbers<[1], [0], [0], [1], [0, 0, 1, 1], [], []>} : vector<2x224xf32>, vector<224x128xf32>, vector<2x128xf32> -> vector<2x128xf32>
    %171 = arith.addf %164, %170 : vector<2x128xf32>
    %c4_187 = arith.constant 4 : index
    %c0_188 = arith.constant 0 : index
    %172 = vector.load %arg13[%c4_187, %c0_188] : memref<28x224xf32, #tpu.memory_space<vmem>>, vector<2x224xf32>
    %c6_189 = arith.constant 6 : index
    %c0_190 = arith.constant 0 : index
    %173 = vector.load %arg13[%c6_189, %c0_190] : memref<28x224xf32, #tpu.memory_space<vmem>>, vector<2x224xf32>
    %174 = arith.maximumf %172, %173 : vector<2x224xf32>
    %c1_191 = arith.constant 1 : index
    %c0_192 = arith.constant 0 : index
    %c0_193 = arith.constant 0 : index
    %175 = vector.load %arg8[%c1_191, %c0_192, %c0_193] : memref<7x224x128xf32, #tpu.memory_space<vmem>>, vector<1x224x128xf32>
    %176 = vector.shape_cast %175 : vector<1x224x128xf32> to vector<224x128xf32>
    %cst_194 = arith.constant dense<0.000000e+00> : vector<2x128xf32>
    %177 = tpu.matmul %174, %176, %cst_194 {dimension_numbers = #tpu.dot_dimension_numbers<[1], [0], [0], [1], [0, 0, 1, 1], [], []>} : vector<2x224xf32>, vector<224x128xf32>, vector<2x128xf32> -> vector<2x128xf32>
    %178 = arith.addf %171, %177 : vector<2x128xf32>
    %c8_195 = arith.constant 8 : index
    %c0_196 = arith.constant 0 : index
    %179 = vector.load %arg13[%c8_195, %c0_196] : memref<28x224xf32, #tpu.memory_space<vmem>>, vector<2x224xf32>
    %c10_197 = arith.constant 10 : index
    %c0_198 = arith.constant 0 : index
    %180 = vector.load %arg13[%c10_197, %c0_198] : memref<28x224xf32, #tpu.memory_space<vmem>>, vector<2x224xf32>
    %181 = arith.maximumf %179, %180 : vector<2x224xf32>
    %c2_199 = arith.constant 2 : index
    %c0_200 = arith.constant 0 : index
    %c0_201 = arith.constant 0 : index
    %182 = vector.load %arg8[%c2_199, %c0_200, %c0_201] : memref<7x224x128xf32, #tpu.memory_space<vmem>>, vector<1x224x128xf32>
    %183 = vector.shape_cast %182 : vector<1x224x128xf32> to vector<224x128xf32>
    %cst_202 = arith.constant dense<0.000000e+00> : vector<2x128xf32>
    %184 = tpu.matmul %181, %183, %cst_202 {dimension_numbers = #tpu.dot_dimension_numbers<[1], [0], [0], [1], [0, 0, 1, 1], [], []>} : vector<2x224xf32>, vector<224x128xf32>, vector<2x128xf32> -> vector<2x128xf32>
    %185 = arith.addf %178, %184 : vector<2x128xf32>
    %c12_203 = arith.constant 12 : index
    %c0_204 = arith.constant 0 : index
    %186 = vector.load %arg13[%c12_203, %c0_204] : memref<28x224xf32, #tpu.memory_space<vmem>>, vector<2x224xf32>
    %c14_205 = arith.constant 14 : index
    %c0_206 = arith.constant 0 : index
    %187 = vector.load %arg13[%c14_205, %c0_206] : memref<28x224xf32, #tpu.memory_space<vmem>>, vector<2x224xf32>
    %188 = arith.maximumf %186, %187 : vector<2x224xf32>
    %c3_207 = arith.constant 3 : index
    %c0_208 = arith.constant 0 : index
    %c0_209 = arith.constant 0 : index
    %189 = vector.load %arg8[%c3_207, %c0_208, %c0_209] : memref<7x224x128xf32, #tpu.memory_space<vmem>>, vector<1x224x128xf32>
    %190 = vector.shape_cast %189 : vector<1x224x128xf32> to vector<224x128xf32>
    %cst_210 = arith.constant dense<0.000000e+00> : vector<2x128xf32>
    %191 = tpu.matmul %188, %190, %cst_210 {dimension_numbers = #tpu.dot_dimension_numbers<[1], [0], [0], [1], [0, 0, 1, 1], [], []>} : vector<2x224xf32>, vector<224x128xf32>, vector<2x128xf32> -> vector<2x128xf32>
    %192 = arith.addf %185, %191 : vector<2x128xf32>
    %c16_211 = arith.constant 16 : index
    %c0_212 = arith.constant 0 : index
    %193 = vector.load %arg13[%c16_211, %c0_212] : memref<28x224xf32, #tpu.memory_space<vmem>>, vector<2x224xf32>
    %c18_213 = arith.constant 18 : index
    %c0_214 = arith.constant 0 : index
    %194 = vector.load %arg13[%c18_213, %c0_214] : memref<28x224xf32, #tpu.memory_space<vmem>>, vector<2x224xf32>
    %195 = arith.maximumf %193, %194 : vector<2x224xf32>
    %c4_215 = arith.constant 4 : index
    %c0_216 = arith.constant 0 : index
    %c0_217 = arith.constant 0 : index
    %196 = vector.load %arg8[%c4_215, %c0_216, %c0_217] : memref<7x224x128xf32, #tpu.memory_space<vmem>>, vector<1x224x128xf32>
    %197 = vector.shape_cast %196 : vector<1x224x128xf32> to vector<224x128xf32>
    %cst_218 = arith.constant dense<0.000000e+00> : vector<2x128xf32>
    %198 = tpu.matmul %195, %197, %cst_218 {dimension_numbers = #tpu.dot_dimension_numbers<[1], [0], [0], [1], [0, 0, 1, 1], [], []>} : vector<2x224xf32>, vector<224x128xf32>, vector<2x128xf32> -> vector<2x128xf32>
    %199 = arith.addf %192, %198 : vector<2x128xf32>
    %c20_219 = arith.constant 20 : index
    %c0_220 = arith.constant 0 : index
    %200 = vector.load %arg13[%c20_219, %c0_220] : memref<28x224xf32, #tpu.memory_space<vmem>>, vector<2x224xf32>
    %c22_221 = arith.constant 22 : index
    %c0_222 = arith.constant 0 : index
    %201 = vector.load %arg13[%c22_221, %c0_222] : memref<28x224xf32, #tpu.memory_space<vmem>>, vector<2x224xf32>
    %202 = arith.maximumf %200, %201 : vector<2x224xf32>
    %c5 = arith.constant 5 : index
    %c0_223 = arith.constant 0 : index
    %c0_224 = arith.constant 0 : index
    %203 = vector.load %arg8[%c5, %c0_223, %c0_224] : memref<7x224x128xf32, #tpu.memory_space<vmem>>, vector<1x224x128xf32>
    %204 = vector.shape_cast %203 : vector<1x224x128xf32> to vector<224x128xf32>
    %cst_225 = arith.constant dense<0.000000e+00> : vector<2x128xf32>
    %205 = tpu.matmul %202, %204, %cst_225 {dimension_numbers = #tpu.dot_dimension_numbers<[1], [0], [0], [1], [0, 0, 1, 1], [], []>} : vector<2x224xf32>, vector<224x128xf32>, vector<2x128xf32> -> vector<2x128xf32>
    %206 = arith.addf %199, %205 : vector<2x128xf32>
    %c24_226 = arith.constant 24 : index
    %c0_227 = arith.constant 0 : index
    %207 = vector.load %arg13[%c24_226, %c0_227] : memref<28x224xf32, #tpu.memory_space<vmem>>, vector<2x224xf32>
    %c26_228 = arith.constant 26 : index
    %c0_229 = arith.constant 0 : index
    %208 = vector.load %arg13[%c26_228, %c0_229] : memref<28x224xf32, #tpu.memory_space<vmem>>, vector<2x224xf32>
    %209 = arith.maximumf %207, %208 : vector<2x224xf32>
    %c6_230 = arith.constant 6 : index
    %c0_231 = arith.constant 0 : index
    %c0_232 = arith.constant 0 : index
    %210 = vector.load %arg8[%c6_230, %c0_231, %c0_232] : memref<7x224x128xf32, #tpu.memory_space<vmem>>, vector<1x224x128xf32>
    %211 = vector.shape_cast %210 : vector<1x224x128xf32> to vector<224x128xf32>
    %cst_233 = arith.constant dense<0.000000e+00> : vector<2x128xf32>
    %212 = tpu.matmul %209, %211, %cst_233 {dimension_numbers = #tpu.dot_dimension_numbers<[1], [0], [0], [1], [0, 0, 1, 1], [], []>} : vector<2x224xf32>, vector<224x128xf32>, vector<2x128xf32> -> vector<2x128xf32>
    %213 = arith.addf %206, %212 : vector<2x128xf32>
    %c0_234 = arith.constant 0 : index
    %c0_235 = arith.constant 0 : index
    %214 = vector.load %arg9[%c0_234, %c0_235] : memref<1x128xf32, #tpu.memory_space<vmem>>, vector<1x128xf32>
    %215 = vector.broadcast %214 : vector<1x128xf32> to vector<2x128xf32>
    %216 = arith.addf %213, %215 : vector<2x128xf32>
    %c0_236 = arith.constant 0 : index
    %c0_237 = arith.constant 0 : index
    %217 = vector.load %arg10[%c0_236, %c0_237] : memref<2x128xf32, #tpu.memory_space<vmem>>, vector<2x128xf32>
    tpu.vector_store %arg10[%c0_236, %c0_237], %216 {strides = array<i32>} : memref<2x128xf32, #tpu.memory_space<vmem>>, vector<2x128xf32>,
    return
  }
  func.func @transform_0(%arg0: i32) -> (i32, i32, i32, i32) {
    %c0_i32 = arith.constant 0 : i32
    %c0_i32_0 = arith.constant 0 : i32
    %c0_i32_1 = arith.constant 0 : i32
    %c0_i32_2 = arith.constant 0 : i32
    return %arg0, %c0_i32, %c0_i32_0, %c0_i32_1 : i32, i32, i32, i32
  }
  func.func @transform_1(%arg0: i32) -> (i32, i32, i32) {
    %c0_i32 = arith.constant 0 : i32
    %c0_i32_0 = arith.constant 0 : i32
    %c0_i32_1 = arith.constant 0 : i32
    %c0_i32_2 = arith.constant 0 : i32
    return %c0_i32, %c0_i32_0, %c0_i32_1 : i32, i32, i32
  }
  func.func @transform_2(%arg0: i32) -> (i32, i32, i32) {
    %c0_i32 = arith.constant 0 : i32
    %c0_i32_0 = arith.constant 0 : i32
    %c0_i32_1 = arith.constant 0 : i32
    %c0_i32_2 = arith.constant 0 : i32
    return %c0_i32, %c0_i32_0, %c0_i32_1 : i32, i32, i32
  }
  func.func @transform_3(%arg0: i32) -> (i32, i32) {
    %c0_i32 = arith.constant 0 : i32
    %c0_i32_0 = arith.constant 0 : i32
    %c0_i32_1 = arith.constant 0 : i32
    return %c0_i32, %c0_i32_0 : i32, i32
  }
  func.func @transform_4(%arg0: i32) -> (i32, i32, i32) {
    %c0_i32 = arith.constant 0 : i32
    %c0_i32_0 = arith.constant 0 : i32
    %c0_i32_1 = arith.constant 0 : i32
    %c0_i32_2 = arith.constant 0 : i32
    return %c0_i32, %c0_i32_0, %c0_i32_1 : i32, i32, i32
  }
  func.func @transform_5(%arg0: i32) -> (i32, i32, i32) {
    %c0_i32 = arith.constant 0 : i32
    %c0_i32_0 = arith.constant 0 : i32
    %c0_i32_1 = arith.constant 0 : i32
    %c0_i32_2 = arith.constant 0 : i32
    return %c0_i32, %c0_i32_0, %c0_i32_1 : i32, i32, i32
  }
  func.func @transform_6(%arg0: i32) -> (i32, i32) {
    %c0_i32 = arith.constant 0 : i32
    %c0_i32_0 = arith.constant 0 : i32
    %c0_i32_1 = arith.constant 0 : i32
    return %c0_i32, %c0_i32_0 : i32, i32
  }
  func.func @transform_7(%arg0: i32) -> (i32, i32, i32) {
    %c0_i32 = arith.constant 0 : i32
    %c0_i32_0 = arith.constant 0 : i32
    %c0_i32_1 = arith.constant 0 : i32
    %c0_i32_2 = arith.constant 0 : i32
    return %c0_i32, %c0_i32_0, %c0_i32_1 : i32, i32, i32
  }
  func.func @transform_8(%arg0: i32) -> (i32, i32) {
    %c0_i32 = arith.constant 0 : i32
    %c0_i32_0 = arith.constant 0 : i32
    %c0_i32_1 = arith.constant 0 : i32
    return %c0_i32, %c0_i32_0 : i32, i32
  }
  func.func @transform_9(%arg0: i32) -> (i32, i32) {
    %c0_i32 = arith.constant 0 : i32
    %c0_i32_0 = arith.constant 0 : i32
    return %arg0, %c0_i32 : i32, i32
  }
}

</mosaic_0001>

<llo_original>
// kernel: cnn_forward.1
$region0: #{cnn_forward.1}
  #allocation0 [shape = 'u32[]', space=smem, size = 0x4, offset = 0x4, fixed_abs, tag = 'smem constant byte address 0x4 - core index']
  #allocation1 [shape = 'u32[144,128]{1,0:T(1,128)}', space=vmem, size = 0x12000, scoped, tag = 'internal scratch']
  #allocation2 [shape = 'f32[56,224]{1,0:T(8,128)}', space=vmem, size = 0xe000, scoped, tag = 'scratch operand']
  #allocation3 [shape = 'f32[36,224]{1,0:T(8,128)}', space=vmem, size = 0xa000, scoped, tag = 'scratch operand']
  #allocation4 [shape = 'f32[28,224]{1,0:T(8,128)}', space=vmem, size = 0x8000, scoped, tag = 'scratch operand']
  %s0 = inlined_call_operand.vmem [shape: f32[1,5,56,28], index: 0, kind: input, shape index: {}]
  %s1 = inlined_call_operand.hbm [shape: f32[5,28,224], index: 1, kind: input, shape index: {}]
  %s2 = inlined_call_operand.hbm [shape: f32[5,28,224], index: 2, kind: input, shape index: {}]
  %s3 = inlined_call_operand.hbm [shape: f32[1,224], index: 3, kind: input, shape index: {}]
  %s4 = inlined_call_operand.hbm [shape: f32[5,224,224], index: 4, kind: input, shape index: {}]
  %s5 = inlined_call_operand.hbm [shape: f32[5,224,224], index: 5, kind: input, shape index: {}]
  %s6 = inlined_call_operand.hbm [shape: f32[1,224], index: 6, kind: input, shape index: {}]
  %s7 = inlined_call_operand.hbm [shape: f32[7,224,128], index: 7, kind: input, shape index: {}]
  %s8 = inlined_call_operand.hbm [shape: f32[1,128], index: 8, kind: input, shape index: {}]
  %s9 = inlined_call_operand.hbm [shape: f32[2,128], index: 9, kind: output, shape index: {}]
  %s10 = sld [smem:[#allocation0]]
  $region78: #{cnn_forward.1} parent=0
    _
  %s12 = ssub.s32 1, %s10
  %s13 = scalar_select 0, %s12, %s10
  $region1: #{cnn_forward.1} parent=0
    #allocation5 [shape = 'u8[163840]{0}', space=vmem, size = 0x28000, scoped, tag = 'input window, operand 1, single buffered']
    #allocation6 [shape = 's32[1]{0}', space=sflag, size = 0x4, scoped, tag = 'scoped memory for cnn_forward.1']
    #allocation7 [shape = 's32[1]{0}', space=sflag, size = 0x4, scoped, tag = 'scoped memory for cnn_forward.1']
    #allocation8 [shape = 'u8[163840]{0}', space=vmem, size = 0x28000, scoped, tag = 'input window, operand 2, single buffered']
    #allocation9 [shape = 's32[1]{0}', space=sflag, size = 0x4, scoped, tag = 'scoped memory for cnn_forward.1']
    #allocation10 [shape = 'u8[1024]{0}', space=vmem, size = 0x400, scoped, tag = 'input window, operand 3, single buffered']
    #allocation11 [shape = 'u8[1146880]{0}', space=vmem, size = 0x118000, scoped, tag = 'input window, operand 4, single buffered']
    #allocation12 [shape = 's32[1]{0}', space=sflag, size = 0x4, scoped, tag = 'scoped memory for cnn_forward.1']
    #allocation13 [shape = 'u8[1146880]{0}', space=vmem, size = 0x118000, scoped, tag = 'input window, operand 5, single buffered']
    #allocation14 [shape = 'u8[1024]{0}', space=vmem, size = 0x400, scoped, tag = 'input window, operand 6, single buffered']
    #allocation15 [shape = 's32[1]{0}', space=sflag, size = 0x4, scoped, tag = 'scoped memory for cnn_forward.1']
    #allocation16 [shape = 'u8[802816]{0}', space=vmem, size = 0xc4000, scoped, tag = 'input window, operand 7, single buffered']
    #allocation17 [shape = 'u8[512]{0}', space=vmem, size = 0x400, scoped, tag = 'input window, operand 8, single buffered']
    #allocation18 [shape = 's32[1]{0}', space=sflag, size = 0x4, scoped, tag = 'scoped memory for cnn_forward.1']
    #allocation19 [shape = 'u8[1024]{0}', space=vmem, size = 0x400, scoped, tag = 'output window, operand 0, single buffered']
    %14 = vsyncpa [#allocation6], 0
    %15 = vsyncpa [#allocation9], 0
    %16 = vsyncpa [#allocation12], 0
    %17 = vsyncpa [#allocation15], 0
    %18 = vsyncpa [#allocation18], 0
    %19 = vsyncpa [#allocation7], 0
    // Predicated region
    $region2: #{cnn_forward.1} parent=1 // pred_check
      _
    $region3: #{cnn_forward.1} parent=1 // pred_check_branch
      %21 = sbr.rel (0) target = $region5
    $region4: #{cnn_forward.1} parent=1 // pred_region
      _
    $region5: #{cnn_forward.1} parent=1 // pred_fallthru
      _
    // Predicated region
    $region6: #{cnn_forward.1} parent=1 // pred_check
      _
    $region7: #{cnn_forward.1} parent=1 // pred_check_branch
      %23 = sbr.rel (0) target = $region9
    $region8: #{cnn_forward.1} parent=1 // pred_region
      %s25 = ssub.s32 5120, 5120
      %26 = vsyncadd [#allocation6], %s25
      %s27 = sshll.u32 [#allocation5], 4
      %s28 = int_to_ptr.vmem [resolvable:$true] %s27
      %33 = dma.hbm_to_vmem [thread:$0]  %s1, 5120, %s28, [#allocation6], 256, 256, 16
    $region9: #{cnn_forward.1} parent=1 // pred_fallthru
      _
    // Predicated region
    $region10: #{cnn_forward.1} parent=1 // pred_check
      _
    $region11: #{cnn_forward.1} parent=1 // pred_check_branch
      %35 = sbr.rel (0) target = $region13
    $region12: #{cnn_forward.1} parent=1 // pred_region
      %s37 = ssub.s32 5120, 5120
      %38 = vsyncadd [#allocation9], %s37
      %s39 = sshll.u32 [#allocation8], 4
      %s40 = int_to_ptr.vmem [resolvable:$true] %s39
      %45 = dma.hbm_to_vmem [thread:$0]  %s2, 5120, %s40, [#allocation9], 256, 256, 16
    $region13: #{cnn_forward.1} parent=1 // pred_fallthru
      _
    // Predicated region
    $region14: #{cnn_forward.1} parent=1 // pred_check
      _
    $region15: #{cnn_forward.1} parent=1 // pred_check_branch
      %47 = sbr.rel (0) target = $region17
    $region16: #{cnn_forward.1} parent=1 // pred_region
      %s49 = ssub.s32 32, 32
      %50 = vsyncadd [#allocation9], %s49
      %s52 = sshll.u32 [#allocation10], 4
      %s53 = int_to_ptr.vmem [resolvable:$true] %s52
      %55 = dma.hbm_to_vmem [thread:$0]  %s3, 32, %s53, [#allocation9]
    $region17: #{cnn_forward.1} parent=1 // pred_fallthru
      _
    // Predicated region
    $region18: #{cnn_forward.1} parent=1 // pred_check
      _
    $region19: #{cnn_forward.1} parent=1 // pred_check_branch
      %57 = sbr.rel (0) target = $region21
    $region20: #{cnn_forward.1} parent=1 // pred_region
      %s59 = ssub.s32 35840, 35840
      %60 = vsyncadd [#allocation12], %s59
      %s61 = sshll.u32 [#allocation11], 4
      %s62 = int_to_ptr.vmem [resolvable:$true] %s61
      %67 = dma.hbm_to_vmem [thread:$0]  %s4, 35840, %s62, [#allocation12], 256, 256, 16
    $region21: #{cnn_forward.1} parent=1 // pred_fallthru
      _
    // Predicated region
    $region22: #{cnn_forward.1} parent=1 // pred_check
      _
    $region23: #{cnn_forward.1} parent=1 // pred_check_branch
      %69 = sbr.rel (0) target = $region25
    $region24: #{cnn_forward.1} parent=1 // pred_region
      %s71 = ssub.s32 35840, 35840
      %72 = vsyncadd [#allocation12], %s71
      %s73 = sshll.u32 [#allocation13], 4
      %s74 = int_to_ptr.vmem [resolvable:$true] %s73
      %79 = dma.hbm_to_vmem [thread:$0]  %s5, 35840, %s74, [#allocation12], 256, 256, 16
    $region25: #{cnn_forward.1} parent=1 // pred_fallthru
      _
    // Predicated region
    $region26: #{cnn_forward.1} parent=1 // pred_check
      _
    $region27: #{cnn_forward.1} parent=1 // pred_check_branch
      %81 = sbr.rel (0) target = $region29
    $region28: #{cnn_forward.1} parent=1 // pred_region
      %s83 = ssub.s32 32, 32
      %84 = vsyncadd [#allocation15], %s83
      %s86 = sshll.u32 [#allocation14], 4
      %s87 = int_to_ptr.vmem [resolvable:$true] %s86
      %89 = dma.hbm_to_vmem [thread:$0]  %s6, 32, %s87, [#allocation15]
    $region29: #{cnn_forward.1} parent=1 // pred_fallthru
      _
    // Predicated region
    $region30: #{cnn_forward.1} parent=1 // pred_check
      _
    $region31: #{cnn_forward.1} parent=1 // pred_check_branch
      %91 = sbr.rel (0) target = $region33
    $region32: #{cnn_forward.1} parent=1 // pred_region
      %s93 = ssub.s32 25088, 25088
      %94 = vsyncadd [#allocation15], %s93
      %s95 = sshll.u32 [#allocation16], 4
      %s96 = int_to_ptr.vmem [resolvable:$true] %s95
      %101 = dma.hbm_to_vmem [thread:$0]  %s7, 25088, %s96, [#allocation15], 128, 128, 8
    $region33: #{cnn_forward.1} parent=1 // pred_fallthru
      _
    // Predicated region
    $region34: #{cnn_forward.1} parent=1 // pred_check
      _
    $region35: #{cnn_forward.1} parent=1 // pred_check_branch
      %103 = sbr.rel (0) target = $region37
    $region36: #{cnn_forward.1} parent=1 // pred_region
      %s105 = ssub.s32 16, 16
      %106 = vsyncadd [#allocation18], %s105
      %s108 = sshll.u32 [#allocation17], 4
      %s109 = int_to_ptr.vmem [resolvable:$true] %s108
      %111 = dma.hbm_to_vmem [thread:$0]  %s8, 16, %s109, [#allocation18]
    $region37: #{cnn_forward.1} parent=1 // pred_fallthru
      _
    // Predicated region
    $region38: #{cnn_forward.1} parent=1 // pred_check
      _
    $region39: #{cnn_forward.1} parent=1 // pred_check_branch
      %113 = sbr.rel (0) target = $region41
    $region40: #{cnn_forward.1} parent=1 // pred_region
      %114 = dma.done [#allocation6], 5120
    $region41: #{cnn_forward.1} parent=1 // pred_fallthru
      _
    // Predicated region
    $region42: #{cnn_forward.1} parent=1 // pred_check
      _
    $region43: #{cnn_forward.1} parent=1 // pred_check_branch
      %116 = sbr.rel (0) target = $region45
    $region44: #{cnn_forward.1} parent=1 // pred_region
      %117 = dma.done [#allocation9], 5120
    $region45: #{cnn_forward.1} parent=1 // pred_fallthru
      _
    // Predicated region
    $region46: #{cnn_forward.1} parent=1 // pred_check
      _
    $region47: #{cnn_forward.1} parent=1 // pred_check_branch
      %119 = sbr.rel (0) target = $region49
    $region48: #{cnn_forward.1} parent=1 // pred_region
      %120 = dma.done [#allocation9], 32
    $region49: #{cnn_forward.1} parent=1 // pred_fallthru
      _
    // Predicated region
    $region50: #{cnn_forward.1} parent=1 // pred_check
      _
    $region51: #{cnn_forward.1} parent=1 // pred_check_branch
      %122 = sbr.rel (0) target = $region53
    $region52: #{cnn_forward.1} parent=1 // pred_region
      %123 = dma.done [#allocation12], 35840
    $region53: #{cnn_forward.1} parent=1 // pred_fallthru
      _
    // Predicated region
    $region54: #{cnn_forward.1} parent=1 // pred_check
      _
    $region55: #{cnn_forward.1} parent=1 // pred_check_branch
      %125 = sbr.rel (0) target = $region57
    $region56: #{cnn_forward.1} parent=1 // pred_region
      %126 = dma.done [#allocation12], 35840
    $region57: #{cnn_forward.1} parent=1 // pred_fallthru
      _
    // Predicated region
    $region58: #{cnn_forward.1} parent=1 // pred_check
      _
    $region59: #{cnn_forward.1} parent=1 // pred_check_branch
      %128 = sbr.rel (0) target = $region61
    $region60: #{cnn_forward.1} parent=1 // pred_region
      %129 = dma.done [#allocation15], 32
    $region61: #{cnn_forward.1} parent=1 // pred_fallthru
      _
    // Predicated region
    $region62: #{cnn_forward.1} parent=1 // pred_check
      _
    $region63: #{cnn_forward.1} parent=1 // pred_check_branch
      %131 = sbr.rel (0) target = $region65
    $region64: #{cnn_forward.1} parent=1 // pred_region
      %132 = dma.done [#allocation15], 25088
    $region65: #{cnn_forward.1} parent=1 // pred_fallthru
      _
    // Predicated region
    $region66: #{cnn_forward.1} parent=1 // pred_check
      _
    $region67: #{cnn_forward.1} parent=1 // pred_check_branch
      %134 = sbr.rel (0) target = $region69
    $region68: #{cnn_forward.1} parent=1 // pred_region
      %135 = dma.done [#allocation18], 16
    $region69: #{cnn_forward.1} parent=1 // pred_fallthru
      _
    %v136 = vld [vmem:[%s0] sm:$0xff]
    %v137 = vld [vmem:[%s0 + $0x8] sm:$0xff]
    %v138 = vld [vmem:[%s0 + $0x10] sm:$0xff]
    %v139 = vld [vmem:[%s0 + $0x18] sm:$0xff]
    %v140 = vld [vmem:[%s0 + $0x20] sm:$0xff]
    %v141 = vld [vmem:[%s0 + $0x28] sm:$0xff]
    %v142 = vld [vmem:[%s0 + $0x30] sm:$0xff]
    %v143 = vld [vmem:[#allocation5] sm:$0xff]
    %v144 = vld [vmem:[#allocation5 + $0x8] sm:$0xff]
    %v145 = vld [vmem:[#allocation5 + $0x10] sm:$0xff]
    %v146 = vld [vmem:[#allocation5 + $0x18] sm:$0xff]
    %v147 = vld [vmem:[#allocation5 + $0x20] sm:$0xff]
    %v148 = vld [vmem:[#allocation5 + $0x28] sm:$0xff]
    %v149 = vld [vmem:[#allocation5 + $0x30] sm:$0xf]
    %v150 = vld [vmem:[#allocation5 + $0x38] sm:$0xf]
    %v151 = vld [vmem:[#allocation8] sm:$0xff]
    %v152 = vld [vmem:[#allocation8 + $0x8] sm:$0xff]
    %v153 = vld [vmem:[#allocation8 + $0x10] sm:$0xff]
    %v154 = vld [vmem:[#allocation8 + $0x18] sm:$0xff]
    %v155 = vld [vmem:[#allocation8 + $0x20] sm:$0xff]
    %v156 = vld [vmem:[#allocation8 + $0x28] sm:$0xff]
    %v157 = vld [vmem:[#allocation8 + $0x30] sm:$0xf]
    %v158 = vld [vmem:[#allocation8 + $0x38] sm:$0xf]
    %s159 = scalar_lea.vmem %s0, 56
    %v160 = vld [vmem:[%s159] sm:$0xff]
    %v161 = vld [vmem:[%s159 + $0x8] sm:$0xff]
    %v162 = vld [vmem:[%s159 + $0x10] sm:$0xff]
    %v163 = vld [vmem:[%s159 + $0x18] sm:$0xff]
    %v164 = vld [vmem:[%s159 + $0x20] sm:$0xff]
    %v165 = vld [vmem:[%s159 + $0x28] sm:$0xff]
    %v166 = vld [vmem:[%s159 + $0x30] sm:$0xff]
    %s167 = scalar_lea.vmem [#allocation5], 64
    %v168 = vld [vmem:[%s167] sm:$0xff]
    %v169 = vld [vmem:[%s167 + $0x8] sm:$0xff]
    %v170 = vld [vmem:[%s167 + $0x10] sm:$0xff]
    %v171 = vld [vmem:[%s167 + $0x18] sm:$0xff]
    %v172 = vld [vmem:[%s167 + $0x20] sm:$0xff]
    %v173 = vld [vmem:[%s167 + $0x28] sm:$0xff]
    %v174 = vld [vmem:[%s167 + $0x30] sm:$0xf]
    %v175 = vld [vmem:[%s167 + $0x38] sm:$0xf]
    %vm176 = vcmask 228352
    %v178 = vsel %vm176, %v160, 0
    %v181 = vsel %vm176, %v161, 0
    %v184 = vsel %vm176, %v162, 0
    %v187 = vsel %vm176, %v163, 0
    %v190 = vsel %vm176, %v164, 0
    %v193 = vsel %vm176, %v165, 0
    %v196 = vsel %vm176, %v166, 0
    %vm198 = vcmask 1043456
    %v200 = vsel %vm198, %v174, 0
    %v203 = vsel %vm198, %v175, 0
    %205 = vmatprep.subr.mxu0 %v169
    %206 = vmatpush1.msra.mxu0 %v168
    %207 = vmatprep.subr.mxu0 %v171
    %208 = vmatpush1.msra.mxu0 %v170
    %209 = vmatprep.subr.mxu0 %v173
    %210 = vmatpush1.msra.mxu0 %v172
    %211 = vmatprep.subr.mxu0 %v203
    %212 = vmatpush1.msra.mxu0 %v200
    %213 = vmatprep.subr.mxu0 0.0
    %214 = vmatpush1.msra.mxu0 0.0
    %215 = vmatprep.subr.mxu0 0.0
    %216 = vmatpush1.msra.mxu0 0.0
    %217 = vmatprep.subr.mxu0 0.0
    %218 = vmatpush1.msra.mxu0 0.0
    %219 = vmatprep.subr.mxu0 0.0
    %220 = vmatpush1.msra.mxu0 0.0
    %221 = vmatprep.subr.mxu0 0.0
    %222 = vmatpush1.msra.mxu0 0.0
    %223 = vmatprep.subr.mxu0 0.0
    %224 = vmatpush1.msra.mxu0 0.0
    %225 = vmatprep.subr.mxu0 0.0
    %226 = vmatpush1.msra.mxu0 0.0
    %227 = vmatprep.subr.mxu0 0.0
    %228 = vmatpush1.msra.mxu0 0.0
    %229 = vmatprep.subr.mxu0 0.0
    %230 = vmatpush1.msra.mxu0 0.0
    %231 = vmatprep.subr.mxu0 0.0
    %232 = vmatpush1.msra.mxu0 0.0
    %233 = vmatprep.subr.mxu0 0.0
    %234 = vmatpush1.msra.mxu0 0.0
    %235 = vmatprep.subr.mxu0 0.0
    %236 = vmatpush1.msra.mxu0 0.0
    %237 = vmatprep.subr.mxu0 0.0
    %238 = vmatpush1.msra.mxu0 0.0
    %239 = vmatprep.subr.mxu0 0.0
    %240 = vmatpush1.msra.mxu0 0.0
    %241 = vmatprep.subr.mxu0 0.0
    %242 = vmatpush1.msra.mxu0 0.0
    %243 = vmatprep.subr.mxu0 0.0
    %244 = vmatpush1.msra.mxu0 0.0
    %245 = vmatprep.subr.mxu0 0.0
    %246 = vmatpush1.msra.mxu0 0.0
    %247 = vmatprep.subr.mxu0 0.0
    %248 = vmatpush1.msra.mxu0 0.0
    %249 = vmatprep.subr.mxu0 0.0
    %250 = vmatpush1.msra.mxu0 0.0
    %251 = vmatprep.subr.mxu0 0.0
    %252 = vmatpush1.msra.mxu0 0.0
    %253 = vmatprep.subr.mxu0 0.0
    %254 = vmatpush1.msra.mxu0 0.0
    %255 = vmatprep.subr.mxu0 0.0
    %256 = vmatpush1.msra.mxu0 0.0
    %257 = vmatprep.subr.mxu0 0.0
    %258 = vmatpush1.msra.mxu0 0.0
    %259 = vmatprep.subr.mxu0 0.0
    %260 = vmatpush1.msra.mxu0 0.0
    %261 = vmatprep.subr.mxu0 0.0
    %262 = vmatpush1.msra.mxu0 0.0
    %263 = vmatprep.subr.mxu0 0.0
    %264 = vmatpush1.msra.mxu0 0.0
    %265 = vmatprep.subr.mxu0 0.0
    %266 = vmatpush1.msra.mxu0 0.0
    %267 = vmatprep.subr.mxu0 0.0
    %268 = vmatpush1.msra.mxu0 0.0
    %269 = vmatprep.mubr.f32.mxu0 0.0
    %270 = vmatmul.mubr.f32.gmra.mrb[0].mxu0 %v178
    %v271 = vpop.f32.mrb[0].mxu0
    %v272 = vadd.f32 0.0, %v271
    %v273 = vpop.f32.mrb[0].mxu0
    %v274 = vadd.f32 0.0, %v273
    %275 = vmatprep.mubr.f32.mxu0 0.0
    %276 = vmatmul.mubr.f32.gmra.mrb[0].mxu0 %v181
    %v277 = vpop.f32.mrb[0].mxu0
    %v278 = vadd.f32 0.0, %v277
    %v279 = vpop.f32.mrb[0].mxu0
    %v280 = vadd.f32 0.0, %v279
    %281 = vmatprep.mubr.f32.mxu0 0.0
    %282 = vmatmul.mubr.f32.gmra.mrb[0].mxu0 %v184
    %v283 = vpop.f32.mrb[0].mxu0
    %v284 = vadd.f32 0.0, %v283
    %v285 = vpop.f32.mrb[0].mxu0
    %v286 = vadd.f32 0.0, %v285
    %287 = vmatprep.mubr.f32.mxu0 0.0
    %288 = vmatmul.mubr.f32.gmra.mrb[0].mxu0 %v187
    %v289 = vpop.f32.mrb[0].mxu0
    %v290 = vadd.f32 0.0, %v289
    %v291 = vpop.f32.mrb[0].mxu0
    %v292 = vadd.f32 0.0, %v291
    %293 = vmatprep.mubr.f32.mxu0 0.0
    %294 = vmatmul.mubr.f32.gmra.mrb[0].mxu0 %v190
    %v295 = vpop.f32.mrb[0].mxu0
    %v296 = vadd.f32 0.0, %v295
    %v297 = vpop.f32.mrb[0].mxu0
    %v298 = vadd.f32 0.0, %v297
    %299 = vmatprep.mubr.f32.mxu0 0.0
    %300 = vmatmul.mubr.f32.gmra.mrb[0].mxu0 %v193
    %v301 = vpop.f32.mrb[0].mxu0
    %v302 = vadd.f32 0.0, %v301
    %v303 = vpop.f32.mrb[0].mxu0
    %v304 = vadd.f32 0.0, %v303
    %305 = vmatprep.mubr.f32.mxu0 0.0
    %306 = vmatmul.mubr.f32.gmra.mrb[0].mxu0 %v196
    %v307 = vpop.f32.mrb[0].mxu0
    %v308 = vadd.f32 0.0, %v307
    %v309 = vpop.f32.mrb[0].mxu0
    %v310 = vadd.f32 0.0, %v309
    %311 = vdwg.mxu0
    %v313 = vsel %vm176, %v136, 0
    %v316 = vsel %vm176, %v137, 0
    %v319 = vsel %vm176, %v138, 0
    %v322 = vsel %vm176, %v139, 0
    %v325 = vsel %vm176, %v140, 0
    %v328 = vsel %vm176, %v141, 0
    %v331 = vsel %vm176, %v142, 0
    %v334 = vsel %vm198, %v149, 0
    %v337 = vsel %vm198, %v150, 0
    %339 = vmatprep.subr.mxu0 %v144
    %340 = vmatpush1.msra.mxu0 %v143
    %341 = vmatprep.subr.mxu0 %v146
    %342 = vmatpush1.msra.mxu0 %v145
    %343 = vmatprep.subr.mxu0 %v148
    %344 = vmatpush1.msra.mxu0 %v147
    %345 = vmatprep.subr.mxu0 %v337
    %346 = vmatpush1.msra.mxu0 %v334
    %347 = vmatprep.subr.mxu0 0.0
    %348 = vmatpush1.msra.mxu0 0.0
    %349 = vmatprep.subr.mxu0 0.0
    %350 = vmatpush1.msra.mxu0 0.0
    %351 = vmatprep.subr.mxu0 0.0
    %352 = vmatpush1.msra.mxu0 0.0
    %353 = vmatprep.subr.mxu0 0.0
    %354 = vmatpush1.msra.mxu0 0.0
    %355 = vmatprep.subr.mxu0 0.0
    %356 = vmatpush1.msra.mxu0 0.0
    %357 = vmatprep.subr.mxu0 0.0
    %358 = vmatpush1.msra.mxu0 0.0
    %359 = vmatprep.subr.mxu0 0.0
    %360 = vmatpush1.msra.mxu0 0.0
    %361 = vmatprep.subr.mxu0 0.0
    %362 = vmatpush1.msra.mxu0 0.0
    %363 = vmatprep.subr.mxu0 0.0
    %364 = vmatpush1.msra.mxu0 0.0
    %365 = vmatprep.subr.mxu0 0.0
    %366 = vmatpush1.msra.mxu0 0.0
    %367 = vmatprep.subr.mxu0 0.0
    %368 = vmatpush1.msra.mxu0 0.0
    %369 = vmatprep.subr.mxu0 0.0
    %370 = vmatpush1.msra.mxu0 0.0
    %371 = vmatprep.subr.mxu0 0.0
    %372 = vmatpush1.msra.mxu0 0.0
    %373 = vmatprep.subr.mxu0 0.0
    %374 = vmatpush1.msra.mxu0 0.0
    %375 = vmatprep.subr.mxu0 0.0
    %376 = vmatpush1.msra.mxu0 0.0
    %377 = vmatprep.subr.mxu0 0.0
    %378 = vmatpush1.msra.mxu0 0.0
    %379 = vmatprep.subr.mxu0 0.0
    %380 = vmatpush1.msra.mxu0 0.0
    %381 = vmatprep.subr.mxu0 0.0
    %382 = vmatpush1.msra.mxu0 0.0
    %383 = vmatprep.subr.mxu0 0.0
    %384 = vmatpush1.msra.mxu0 0.0
    %385 = vmatprep.subr.mxu0 0.0
    %386 = vmatpush1.msra.mxu0 0.0
    %387 = vmatprep.subr.mxu0 0.0
    %388 = vmatpush1.msra.mxu0 0.0
    %389 = vmatprep.subr.mxu0 0.0
    %390 = vmatpush1.msra.mxu0 0.0
    %391 = vmatprep.subr.mxu0 0.0
    %392 = vmatpush1.msra.mxu0 0.0
    %393 = vmatprep.subr.mxu0 0.0
    %394 = vmatpush1.msra.mxu0 0.0
    %395 = vmatprep.subr.mxu0 0.0
    %396 = vmatpush1.msra.mxu0 0.0
    %397 = vmatprep.subr.mxu0 0.0
    %398 = vmatpush1.msra.mxu0 0.0
    %399 = vmatprep.subr.mxu0 0.0
    %400 = vmatpush1.msra.mxu0 0.0
    %401 = vmatprep.subr.mxu0 0.0
    %402 = vmatpush1.msra.mxu0 0.0
    %403 = vmatprep.mubr.f32.mxu0 0.0
    %404 = vmatmul.mubr.f32.gmra.mrb[0].mxu0 %v313
    %v405 = vpop.f32.mrb[0].mxu0
    %v406 = vadd.f32 %v272, %v405
    %v407 = vpop.f32.mrb[0].mxu0
    %v408 = vadd.f32 %v274, %v407
    %409 = vmatprep.mubr.f32.mxu0 0.0
    %410 = vmatmul.mubr.f32.gmra.mrb[0].mxu0 %v316
    %v411 = vpop.f32.mrb[0].mxu0
    %v412 = vadd.f32 %v278, %v411
    %v413 = vpop.f32.mrb[0].mxu0
    %v414 = vadd.f32 %v280, %v413
    %415 = vmatprep.mubr.f32.mxu0 0.0
    %416 = vmatmul.mubr.f32.gmra.mrb[0].mxu0 %v319
    %v417 = vpop.f32.mrb[0].mxu0
    %v418 = vadd.f32 %v284, %v417
    %v419 = vpop.f32.mrb[0].mxu0
    %v420 = vadd.f32 %v286, %v419
    %421 = vmatprep.mubr.f32.mxu0 0.0
    %422 = vmatmul.mubr.f32.gmra.mrb[0].mxu0 %v322
    %v423 = vpop.f32.mrb[0].mxu0
    %v424 = vadd.f32 %v290, %v423
    %v425 = vpop.f32.mrb[0].mxu0
    %v426 = vadd.f32 %v292, %v425
    %427 = vmatprep.mubr.f32.mxu0 0.0
    %428 = vmatmul.mubr.f32.gmra.mrb[0].mxu0 %v325
    %v429 = vpop.f32.mrb[0].mxu0
    %v430 = vadd.f32 %v296, %v429
    %v431 = vpop.f32.mrb[0].mxu0
    %v432 = vadd.f32 %v298, %v431
    %433 = vmatprep.mubr.f32.mxu0 0.0
    %434 = vmatmul.mubr.f32.gmra.mrb[0].mxu0 %v328
    %v435 = vpop.f32.mrb[0].mxu0
    %v436 = vadd.f32 %v302, %v435
    %v437 = vpop.f32.mrb[0].mxu0
    %v438 = vadd.f32 %v304, %v437
    %439 = vmatprep.mubr.f32.mxu0 0.0
    %440 = vmatmul.mubr.f32.gmra.mrb[0].mxu0 %v331
    %v441 = vpop.f32.mrb[0].mxu0
    %v442 = vadd.f32 %v308, %v441
    %v443 = vpop.f32.mrb[0].mxu0
    %v444 = vadd.f32 %v310, %v443
    %445 = vdwg.mxu0
    %s446 = scalar_lea.vmem [#allocation8], 64
    %v447 = vld [vmem:[%s446] sm:$0xff]
    %v448 = vld [vmem:[%s446 + $0x8] sm:$0xff]
    %v449 = vld [vmem:[%s446 + $0x10] sm:$0xff]
    %v450 = vld [vmem:[%s446 + $0x18] sm:$0xff]
    %v451 = vld [vmem:[%s446 + $0x20] sm:$0xff]
    %v452 = vld [vmem:[%s446 + $0x28] sm:$0xff]
    %v453 = vld [vmem:[%s446 + $0x30] sm:$0xf]
    %v454 = vld [vmem:[%s446 + $0x38] sm:$0xf]
    %v456 = vsel %vm198, %v453, 0
    %v459 = vsel %vm198, %v454, 0
    %461 = vmatprep.subr.mxu0 %v448
    %462 = vmatpush1.msra.mxu0 %v447
    %463 = vmatprep.subr.mxu0 %v450
    %464 = vmatpush1.msra.mxu0 %v449
    %465 = vmatprep.subr.mxu0 %v452
    %466 = vmatpush1.msra.mxu0 %v451
    %467 = vmatprep.subr.mxu0 %v459
    %468 = vmatpush1.msra.mxu0 %v456
    %469 = vmatprep.subr.mxu0 0.0
    %470 = vmatpush1.msra.mxu0 0.0
    %471 = vmatprep.subr.mxu0 0.0
    %472 = vmatpush1.msra.mxu0 0.0
    %473 = vmatprep.subr.mxu0 0.0
    %474 = vmatpush1.msra.mxu0 0.0
    %475 = vmatprep.subr.mxu0 0.0
    %476 = vmatpush1.msra.mxu0 0.0
    %477 = vmatprep.subr.mxu0 0.0
    %478 = vmatpush1.msra.mxu0 0.0
    %479 = vmatprep.subr.mxu0 0.0
    %480 = vmatpush1.msra.mxu0 0.0
    %481 = vmatprep.subr.mxu0 0.0
    %482 = vmatpush1.msra.mxu0 0.0
    %483 = vmatprep.subr.mxu0 0.0
    %484 = vmatpush1.msra.mxu0 0.0
    %485 = vmatprep.subr.mxu0 0.0
    %486 = vmatpush1.msra.mxu0 0.0
    %487 = vmatprep.subr.mxu0 0.0
    %488 = vmatpush1.msra.mxu0 0.0
    %489 = vmatprep.subr.mxu0 0.0
    %490 = vmatpush1.msra.mxu0 0.0
    %491 = vmatprep.subr.mxu0 0.0
    %492 = vmatpush1.msra.mxu0 0.0
    %493 = vmatprep.subr.mxu0 0.0
    %494 = vmatpush1.msra.mxu0 0.0
    %495 = vmatprep.subr.mxu0 0.0
    %496 = vmatpush1.msra.mxu0 0.0
    %497 = vmatprep.subr.mxu0 0.0
    %498 = vmatpush1.msra.mxu0 0.0
    %499 = vmatprep.subr.mxu0 0.0
    %500 = vmatpush1.msra.mxu0 0.0
    %501 = vmatprep.subr.mxu0 0.0
    %502 = vmatpush1.msra.mxu0 0.0
    %503 = vmatprep.subr.mxu0 0.0
    %504 = vmatpush1.msra.mxu0 0.0
    %505 = vmatprep.subr.mxu0 0.0
    %506 = vmatpush1.msra.mxu0 0.0
    %507 = vmatprep.subr.mxu0 0.0
    %508 = vmatpush1.msra.mxu0 0.0
    %509 = vmatprep.subr.mxu0 0.0
    %510 = vmatpush1.msra.mxu0 0.0
    %511 = vmatprep.subr.mxu0 0.0
    %512 = vmatpush1.msra.mxu0 0.0
    %513 = vmatprep.subr.mxu0 0.0
    %514 = vmatpush1.msra.mxu0 0.0
    %515 = vmatprep.subr.mxu0 0.0
    %516 = vmatpush1.msra.mxu0 0.0
    %517 = vmatprep.subr.mxu0 0.0
    %518 = vmatpush1.msra.mxu0 0.0
    %519 = vmatprep.subr.mxu0 0.0
    %520 = vmatpush1.msra.mxu0 0.0
    %521 = vmatprep.subr.mxu0 0.0
    %522 = vmatpush1.msra.mxu0 0.0
    %523 = vmatprep.subr.mxu0 0.0
    %524 = vmatpush1.msra.mxu0 0.0
    %525 = vmatprep.mubr.f32.mxu0 0.0
    %526 = vmatmul.mubr.f32.gmra.mrb[0].mxu0 %v178
    %v527 = vpop.f32.mrb[0].mxu0
    %v528 = vadd.f32 0.0, %v527
    %v529 = vpop.f32.mrb[0].mxu0
    %v530 = vadd.f32 0.0, %v529
    %531 = vmatprep.mubr.f32.mxu0 0.0
    %532 = vmatmul.mubr.f32.gmra.mrb[0].mxu0 %v181
    %v533 = vpop.f32.mrb[0].mxu0
    %v534 = vadd.f32 0.0, %v533
    %v535 = vpop.f32.mrb[0].mxu0
    %v536 = vadd.f32 0.0, %v535
    %537 = vmatprep.mubr.f32.mxu0 0.0
    %538 = vmatmul.mubr.f32.gmra.mrb[0].mxu0 %v184
    %v539 = vpop.f32.mrb[0].mxu0
    %v540 = vadd.f32 0.0, %v539
    %v541 = vpop.f32.mrb[0].mxu0
    %v542 = vadd.f32 0.0, %v541
    %543 = vmatprep.mubr.f32.mxu0 0.0
    %544 = vmatmul.mubr.f32.gmra.mrb[0].mxu0 %v187
    %v545 = vpop.f32.mrb[0].mxu0
    %v546 = vadd.f32 0.0, %v545
    %v547 = vpop.f32.mrb[0].mxu0
    %v548 = vadd.f32 0.0, %v547
    %549 = vmatprep.mubr.f32.mxu0 0.0
    %550 = vmatmul.mubr.f32.gmra.mrb[0].mxu0 %v190
    %v551 = vpop.f32.mrb[0].mxu0
    %v552 = vadd.f32 0.0, %v551
    %v553 = vpop.f32.mrb[0].mxu0
    %v554 = vadd.f32 0.0, %v553
    %555 = vmatprep.mubr.f32.mxu0 0.0
    %556 = vmatmul.mubr.f32.gmra.mrb[0].mxu0 %v193
    %v557 = vpop.f32.mrb[0].mxu0
    %v558 = vadd.f32 0.0, %v557
    %v559 = vpop.f32.mrb[0].mxu0
    %v560 = vadd.f32 0.0, %v559
    %561 = vmatprep.mubr.f32.mxu0 0.0
    %562 = vmatmul.mubr.f32.gmra.mrb[0].mxu0 %v196
    %v563 = vpop.f32.mrb[0].mxu0
    %v564 = vadd.f32 0.0, %v563
    %v565 = vpop.f32.mrb[0].mxu0
    %v566 = vadd.f32 0.0, %v565
    %567 = vdwg.mxu0
    %v569 = vsel %vm198, %v157, 0
    %v572 = vsel %vm198, %v158, 0
    %574 = vmatprep.subr.mxu0 %v152
    %575 = vmatpush1.msra.mxu0 %v151
    %576 = vmatprep.subr.mxu0 %v154
    %577 = vmatpush1.msra.mxu0 %v153
    %578 = vmatprep.subr.mxu0 %v156
    %579 = vmatpush1.msra.mxu0 %v155
    %580 = vmatprep.subr.mxu0 %v572
    %581 = vmatpush1.msra.mxu0 %v569
    %582 = vmatprep.subr.mxu0 0.0
    %583 = vmatpush1.msra.mxu0 0.0
    %584 = vmatprep.subr.mxu0 0.0
    %585 = vmatpush1.msra.mxu0 0.0
    %586 = vmatprep.subr.mxu0 0.0
    %587 = vmatpush1.msra.mxu0 0.0
    %588 = vmatprep.subr.mxu0 0.0
    %589 = vmatpush1.msra.mxu0 0.0
    %590 = vmatprep.subr.mxu0 0.0
    %591 = vmatpush1.msra.mxu0 0.0
    %592 = vmatprep.subr.mxu0 0.0
    %593 = vmatpush1.msra.mxu0 0.0
    %594 = vmatprep.subr.mxu0 0.0
    %595 = vmatpush1.msra.mxu0 0.0
    %596 = vmatprep.subr.mxu0 0.0
    %597 = vmatpush1.msra.mxu0 0.0
    %598 = vmatprep.subr.mxu0 0.0
    %599 = vmatpush1.msra.mxu0 0.0
    %600 = vmatprep.subr.mxu0 0.0
    %601 = vmatpush1.msra.mxu0 0.0
    %602 = vmatprep.subr.mxu0 0.0
    %603 = vmatpush1.msra.mxu0 0.0
    %604 = vmatprep.subr.mxu0 0.0
    %605 = vmatpush1.msra.mxu0 0.0
    %606 = vmatprep.subr.mxu0 0.0
    %607 = vmatpush1.msra.mxu0 0.0
    %608 = vmatprep.subr.mxu0 0.0
    %609 = vmatpush1.msra.mxu0 0.0
    %610 = vmatprep.subr.mxu0 0.0
    %611 = vmatpush1.msra.mxu0 0.0
    %612 = vmatprep.subr.mxu0 0.0
    %613 = vmatpush1.msra.mxu0 0.0
    %614 = vmatprep.subr.mxu0 0.0
    %615 = vmatpush1.msra.mxu0 0.0
    %616 = vmatprep.subr.mxu0 0.0
    %617 = vmatpush1.msra.mxu0 0.0
    %618 = vmatprep.subr.mxu0 0.0
    %619 = vmatpush1.msra.mxu0 0.0
    %620 = vmatprep.subr.mxu0 0.0
    %621 = vmatpush1.msra.mxu0 0.0
    %622 = vmatprep.subr.mxu0 0.0
    %623 = vmatpush1.msra.mxu0 0.0
    %624 = vmatprep.subr.mxu0 0.0
    %625 = vmatpush1.msra.mxu0 0.0
    %626 = vmatprep.subr.mxu0 0.0
    %627 = vmatpush1.msra.mxu0 0.0
    %628 = vmatprep.subr.mxu0 0.0
    %629 = vmatpush1.msra.mxu0 0.0
    %630 = vmatprep.subr.mxu0 0.0
    %631 = vmatpush1.msra.mxu0 0.0
    %632 = vmatprep.subr.mxu0 0.0
    %633 = vmatpush1.msra.mxu0 0.0
    %634 = vmatprep.subr.mxu0 0.0
    %635 = vmatpush1.msra.mxu0 0.0
    %636 = vmatprep.subr.mxu0 0.0
    %637 = vmatpush1.msra.mxu0 0.0
    %638 = vmatprep.mubr.f32.mxu0 0.0
    %639 = vmatmul.mubr.f32.gmra.mrb[0].mxu0 %v313
    %v640 = vpop.f32.mrb[0].mxu0
    %v641 = vadd.f32 %v528, %v640
    %v642 = vpop.f32.mrb[0].mxu0
    %v643 = vadd.f32 %v530, %v642
    %644 = vmatprep.mubr.f32.mxu0 0.0
    %645 = vmatmul.mubr.f32.gmra.mrb[0].mxu0 %v316
    %v646 = vpop.f32.mrb[0].mxu0
    %v647 = vadd.f32 %v534, %v646
    %v648 = vpop.f32.mrb[0].mxu0
    %v649 = vadd.f32 %v536, %v648
    %650 = vmatprep.mubr.f32.mxu0 0.0
    %651 = vmatmul.mubr.f32.gmra.mrb[0].mxu0 %v319
    %v652 = vpop.f32.mrb[0].mxu0
    %v653 = vadd.f32 %v540, %v652
    %v654 = vpop.f32.mrb[0].mxu0
    %v655 = vadd.f32 %v542, %v654
    %656 = vmatprep.mubr.f32.mxu0 0.0
    %657 = vmatmul.mubr.f32.gmra.mrb[0].mxu0 %v322
    %v658 = vpop.f32.mrb[0].mxu0
    %v659 = vadd.f32 %v546, %v658
    %v660 = vpop.f32.mrb[0].mxu0
    %v661 = vadd.f32 %v548, %v660
    %662 = vmatprep.mubr.f32.mxu0 0.0
    %663 = vmatmul.mubr.f32.gmra.mrb[0].mxu0 %v325
    %v664 = vpop.f32.mrb[0].mxu0
    %v665 = vadd.f32 %v552, %v664
    %v666 = vpop.f32.mrb[0].mxu0
    %v667 = vadd.f32 %v554, %v666
    %668 = vmatprep.mubr.f32.mxu0 0.0
    %669 = vmatmul.mubr.f32.gmra.mrb[0].mxu0 %v328
    %v670 = vpop.f32.mrb[0].mxu0
    %v671 = vadd.f32 %v558, %v670
    %v672 = vpop.f32.mrb[0].mxu0
    %v673 = vadd.f32 %v560, %v672
    %674 = vmatprep.mubr.f32.mxu0 0.0
    %675 = vmatmul.mubr.f32.gmra.mrb[0].mxu0 %v331
    %v676 = vpop.f32.mrb[0].mxu0
    %v677 = vadd.f32 %v564, %v676
    %v678 = vpop.f32.mrb[0].mxu0
    %v679 = vadd.f32 %v566, %v678
    %680 = vdwg.mxu0
    %s681 = scalar_lea.vmem %s0, 112
    %v682 = vld [vmem:[%s681] sm:$0xff]
    %v683 = vld [vmem:[%s681 + $0x8] sm:$0xff]
    %v684 = vld [vmem:[%s681 + $0x10] sm:$0xff]
    %v685 = vld [vmem:[%s681 + $0x18] sm:$0xff]
    %v686 = vld [vmem:[%s681 + $0x20] sm:$0xff]
    %v687 = vld [vmem:[%s681 + $0x28] sm:$0xff]
    %v688 = vld [vmem:[%s681 + $0x30] sm:$0xff]
    %s689 = scalar_lea.vmem [#allocation5], 128
    %v690 = vld [vmem:[%s689] sm:$0xff]
    %v691 = vld [vmem:[%s689 + $0x8] sm:$0xff]
    %v692 = vld [vmem:[%s689 + $0x10] sm:$0xff]
    %v693 = vld [vmem:[%s689 + $0x18] sm:$0xff]
    %v694 = vld [vmem:[%s689 + $0x20] sm:$0xff]
    %v695 = vld [vmem:[%s689 + $0x28] sm:$0xff]
    %v696 = vld [vmem:[%s689 + $0x30] sm:$0xf]
    %v697 = vld [vmem:[%s689 + $0x38] sm:$0xf]
    %v699 = vsel %vm176, %v682, 0
    %v702 = vsel %vm176, %v683, 0
    %v705 = vsel %vm176, %v684, 0
    %v708 = vsel %vm176, %v685, 0
    %v711 = vsel %vm176, %v686, 0
    %v714 = vsel %vm176, %v687, 0
    %v717 = vsel %vm176, %v688, 0
    %v720 = vsel %vm198, %v696, 0
    %v723 = vsel %vm198, %v697, 0
    %725 = vmatprep.subr.mxu0 %v691
    %726 = vmatpush1.msra.mxu0 %v690
    %727 = vmatprep.subr.mxu0 %v693
    %728 = vmatpush1.msra.mxu0 %v692
    %729 = vmatprep.subr.mxu0 %v695
    %730 = vmatpush1.msra.mxu0 %v694
    %731 = vmatprep.subr.mxu0 %v723
    %732 = vmatpush1.msra.mxu0 %v720
    %733 = vmatprep.subr.mxu0 0.0
    %734 = vmatpush1.msra.mxu0 0.0
    %735 = vmatprep.subr.mxu0 0.0
    %736 = vmatpush1.msra.mxu0 0.0
    %737 = vmatprep.subr.mxu0 0.0
    %738 = vmatpush1.msra.mxu0 0.0
    %739 = vmatprep.subr.mxu0 0.0
    %740 = vmatpush1.msra.mxu0 0.0
    %741 = vmatprep.subr.mxu0 0.0
    %742 = vmatpush1.msra.mxu0 0.0
    %743 = vmatprep.subr.mxu0 0.0
    %744 = vmatpush1.msra.mxu0 0.0
    %745 = vmatprep.subr.mxu0 0.0
    %746 = vmatpush1.msra.mxu0 0.0
    %747 = vmatprep.subr.mxu0 0.0
    %748 = vmatpush1.msra.mxu0 0.0
    %749 = vmatprep.subr.mxu0 0.0
    %750 = vmatpush1.msra.mxu0 0.0
    %751 = vmatprep.subr.mxu0 0.0
    %752 = vmatpush1.msra.mxu0 0.0
    %753 = vmatprep.subr.mxu0 0.0
    %754 = vmatpush1.msra.mxu0 0.0
    %755 = vmatprep.subr.mxu0 0.0
    %756 = vmatpush1.msra.mxu0 0.0
    %757 = vmatprep.subr.mxu0 0.0
    %758 = vmatpush1.msra.mxu0 0.0
    %759 = vmatprep.subr.mxu0 0.0
    %760 = vmatpush1.msra.mxu0 0.0
    %761 = vmatprep.subr.mxu0 0.0
    %762 = vmatpush1.msra.mxu0 0.0
    %763 = vmatprep.subr.mxu0 0.0
    %764 = vmatpush1.msra.mxu0 0.0
    %765 = vmatprep.subr.mxu0 0.0
    %766 = vmatpush1.msra.mxu0 0.0
    %767 = vmatprep.subr.mxu0 0.0
    %768 = vmatpush1.msra.mxu0 0.0
    %769 = vmatprep.subr.mxu0 0.0
    %770 = vmatpush1.msra.mxu0 0.0
    %771 = vmatprep.subr.mxu0 0.0
    %772 = vmatpush1.msra.mxu0 0.0
    %773 = vmatprep.subr.mxu0 0.0
    %774 = vmatpush1.msra.mxu0 0.0
    %775 = vmatprep.subr.mxu0 0.0
    %776 = vmatpush1.msra.mxu0 0.0
    %777 = vmatprep.subr.mxu0 0.0
    %778 = vmatpush1.msra.mxu0 0.0
    %779 = vmatprep.subr.mxu0 0.0
    %780 = vmatpush1.msra.mxu0 0.0
    %781 = vmatprep.subr.mxu0 0.0
    %782 = vmatpush1.msra.mxu0 0.0
    %783 = vmatprep.subr.mxu0 0.0
    %784 = vmatpush1.msra.mxu0 0.0
    %785 = vmatprep.subr.mxu0 0.0
    %786 = vmatpush1.msra.mxu0 0.0
    %787 = vmatprep.subr.mxu0 0.0
    %788 = vmatpush1.msra.mxu0 0.0
    %789 = vmatprep.mubr.f32.mxu0 0.0
    %790 = vmatmul.mubr.f32.gmra.mrb[0].mxu0 %v699
    %v791 = vpop.f32.mrb[0].mxu0
    %v792 = vadd.f32 0.0, %v791
    %v793 = vpop.f32.mrb[0].mxu0
    %v794 = vadd.f32 0.0, %v793
    %795 = vmatprep.mubr.f32.mxu0 0.0
    %796 = vmatmul.mubr.f32.gmra.mrb[0].mxu0 %v702
    %v797 = vpop.f32.mrb[0].mxu0
    %v798 = vadd.f32 0.0, %v797
    %v799 = vpop.f32.mrb[0].mxu0
    %v800 = vadd.f32 0.0, %v799
    %801 = vmatprep.mubr.f32.mxu0 0.0
    %802 = vmatmul.mubr.f32.gmra.mrb[0].mxu0 %v705
    %v803 = vpop.f32.mrb[0].mxu0
    %v804 = vadd.f32 0.0, %v803
    %v805 = vpop.f32.mrb[0].mxu0
    %v806 = vadd.f32 0.0, %v805
    %807 = vmatprep.mubr.f32.mxu0 0.0
    %808 = vmatmul.mubr.f32.gmra.mrb[0].mxu0 %v708
    %v809 = vpop.f32.mrb[0].mxu0
    %v810 = vadd.f32 0.0, %v809
    %v811 = vpop.f32.mrb[0].mxu0
    %v812 = vadd.f32 0.0, %v811
    %813 = vmatprep.mubr.f32.mxu0 0.0
    %814 = vmatmul.mubr.f32.gmra.mrb[0].mxu0 %v711
    %v815 = vpop.f32.mrb[0].mxu0
    %v816 = vadd.f32 0.0, %v815
    %v817 = vpop.f32.mrb[0].mxu0
    %v818 = vadd.f32 0.0, %v817
    %819 = vmatprep.mubr.f32.mxu0 0.0
    %820 = vmatmul.mubr.f32.gmra.mrb[0].mxu0 %v714
    %v821 = vpop.f32.mrb[0].mxu0
    %v822 = vadd.f32 0.0, %v821
    %v823 = vpop.f32.mrb[0].mxu0
    %v824 = vadd.f32 0.0, %v823
    %825 = vmatprep.mubr.f32.mxu0 0.0
    %826 = vmatmul.mubr.f32.gmra.mrb[0].mxu0 %v717
    %v827 = vpop.f32.mrb[0].mxu0
    %v828 = vadd.f32 0.0, %v827
    %v829 = vpop.f32.mrb[0].mxu0
    %v830 = vadd.f32 0.0, %v829
    %831 = vdwg.mxu0
    %v832 = vadd.f32 %v406, %v792
    %v833 = vadd.f32 %v408, %v794
    %v834 = vadd.f32 %v412, %v798
    %v835 = vadd.f32 %v414, %v800
    %v836 = vadd.f32 %v418, %v804
    %v837 = vadd.f32 %v420, %v806
    %v838 = vadd.f32 %v424, %v810
    %v839 = vadd.f32 %v426, %v812
    %v840 = vadd.f32 %v430, %v816
    %v841 = vadd.f32 %v432, %v818
    %v842 = vadd.f32 %v436, %v822
    %v843 = vadd.f32 %v438, %v824
    %v844 = vadd.f32 %v442, %v828
    %v845 = vadd.f32 %v444, %v830
    %s846 = scalar_lea.vmem [#allocation8], 128
    %v847 = vld [vmem:[%s846] sm:$0xff]
    %v848 = vld [vmem:[%s846 + $0x8] sm:$0xff]
    %v849 = vld [vmem:[%s846 + $0x10] sm:$0xff]
    %v850 = vld [vmem:[%s846 + $0x18] sm:$0xff]
    %v851 = vld [vmem:[%s846 + $0x20] sm:$0xff]
    %v852 = vld [vmem:[%s846 + $0x28] sm:$0xff]
    %v853 = vld [vmem:[%s846 + $0x30] sm:$0xf]
    %v854 = vld [vmem:[%s846 + $0x38] sm:$0xf]
    %v856 = vsel %vm198, %v853, 0
    %v859 = vsel %vm198, %v854, 0
    %861 = vmatprep.subr.mxu0 %v848
    %862 = vmatpush1.msra.mxu0 %v847
    %863 = vmatprep.subr.mxu0 %v850
    %864 = vmatpush1.msra.mxu0 %v849
    %865 = vmatprep.subr.mxu0 %v852
    %866 = vmatpush1.msra.mxu0 %v851
    %867 = vmatprep.subr.mxu0 %v859
    %868 = vmatpush1.msra.mxu0 %v856
    %869 = vmatprep.subr.mxu0 0.0
    %870 = vmatpush1.msra.mxu0 0.0
    %871 = vmatprep.subr.mxu0 0.0
    %872 = vmatpush1.msra.mxu0 0.0
    %873 = vmatprep.subr.mxu0 0.0
    %874 = vmatpush1.msra.mxu0 0.0
    %875 = vmatprep.subr.mxu0 0.0
    %876 = vmatpush1.msra.mxu0 0.0
    %877 = vmatprep.subr.mxu0 0.0
    %878 = vmatpush1.msra.mxu0 0.0
    %879 = vmatprep.subr.mxu0 0.0
    %880 = vmatpush1.msra.mxu0 0.0
    %881 = vmatprep.subr.mxu0 0.0
    %882 = vmatpush1.msra.mxu0 0.0
    %883 = vmatprep.subr.mxu0 0.0
    %884 = vmatpush1.msra.mxu0 0.0
    %885 = vmatprep.subr.mxu0 0.0
    %886 = vmatpush1.msra.mxu0 0.0
    %887 = vmatprep.subr.mxu0 0.0
    %888 = vmatpush1.msra.mxu0 0.0
    %889 = vmatprep.subr.mxu0 0.0
    %890 = vmatpush1.msra.mxu0 0.0
    %891 = vmatprep.subr.mxu0 0.0
    %892 = vmatpush1.msra.mxu0 0.0
    %893 = vmatprep.subr.mxu0 0.0
    %894 = vmatpush1.msra.mxu0 0.0
    %895 = vmatprep.subr.mxu0 0.0
    %896 = vmatpush1.msra.mxu0 0.0
    %897 = vmatprep.subr.mxu0 0.0
    %898 = vmatpush1.msra.mxu0 0.0
    %899 = vmatprep.subr.mxu0 0.0
    %900 = vmatpush1.msra.mxu0 0.0
    %901 = vmatprep.subr.mxu0 0.0
    %902 = vmatpush1.msra.mxu0 0.0
    %903 = vmatprep.subr.mxu0 0.0
    %904 = vmatpush1.msra.mxu0 0.0
    %905 = vmatprep.subr.mxu0 0.0
    %906 = vmatpush1.msra.mxu0 0.0
    %907 = vmatprep.subr.mxu0 0.0
    %908 = vmatpush1.msra.mxu0 0.0
    %909 = vmatprep.subr.mxu0 0.0
    %910 = vmatpush1.msra.mxu0 0.0
    %911 = vmatprep.subr.mxu0 0.0
    %912 = vmatpush1.msra.mxu0 0.0
    %913 = vmatprep.subr.mxu0 0.0
    %914 = vmatpush1.msra.mxu0 0.0
    %915 = vmatprep.subr.mxu0 0.0
    %916 = vmatpush1.msra.mxu0 0.0
    %917 = vmatprep.subr.mxu0 0.0
    %918 = vmatpush1.msra.mxu0 0.0
    %919 = vmatprep.subr.mxu0 0.0
    %920 = vmatpush1.msra.mxu0 0.0
    %921 = vmatprep.subr.mxu0 0.0
    %922 = vmatpush1.msra.mxu0 0.0
    %923 = vmatprep.subr.mxu0 0.0
    %924 = vmatpush1.msra.mxu0 0.0
    %925 = vmatprep.mubr.f32.mxu0 0.0
    %926 = vmatmul.mubr.f32.gmra.mrb[0].mxu0 %v699
    %v927 = vpop.f32.mrb[0].mxu0
    %v928 = vadd.f32 0.0, %v927
    %v929 = vpop.f32.mrb[0].mxu0
    %v930 = vadd.f32 0.0, %v929
    %931 = vmatprep.mubr.f32.mxu0 0.0
    %932 = vmatmul.mubr.f32.gmra.mrb[0].mxu0 %v702
    %v933 = vpop.f32.mrb[0].mxu0
    %v934 = vadd.f32 0.0, %v933
    %v935 = vpop.f32.mrb[0].mxu0
    %v936 = vadd.f32 0.0, %v935
    %937 = vmatprep.mubr.f32.mxu0 0.0
    %938 = vmatmul.mubr.f32.gmra.mrb[0].mxu0 %v705
    %v939 = vpop.f32.mrb[0].mxu0
    %v940 = vadd.f32 0.0, %v939
    %v941 = vpop.f32.mrb[0].mxu0
    %v942 = vadd.f32 0.0, %v941
    %943 = vmatprep.mubr.f32.mxu0 0.0
    %944 = vmatmul.mubr.f32.gmra.mrb[0].mxu0 %v708
    %v945 = vpop.f32.mrb[0].mxu0
    %v946 = vadd.f32 0.0, %v945
    %v947 = vpop.f32.mrb[0].mxu0
    %v948 = vadd.f32 0.0, %v947
    %949 = vmatprep.mubr.f32.mxu0 0.0
    %950 = vmatmul.mubr.f32.gmra.mrb[0].mxu0 %v711
    %v951 = vpop.f32.mrb[0].mxu0
    %v952 = vadd.f32 0.0, %v951
    %v953 = vpop.f32.mrb[0].mxu0
    %v954 = vadd.f32 0.0, %v953
    %955 = vmatprep.mubr.f32.mxu0 0.0
    %956 = vmatmul.mubr.f32.gmra.mrb[0].mxu0 %v714
    %v957 = vpop.f32.mrb[0].mxu0
    %v958 = vadd.f32 0.0, %v957
    %v959 = vpop.f32.mrb[0].mxu0
    %v960 = vadd.f32 0.0, %v959
    %961 = vmatprep.mubr.f32.mxu0 0.0
    %962 = vmatmul.mubr.f32.gmra.mrb[0].mxu0 %v717
    %v963 = vpop.f32.mrb[0].mxu0
    %v964 = vadd.f32 0.0, %v963
    %v965 = vpop.f32.mrb[0].mxu0
    %v966 = vadd.f32 0.0, %v965
    %967 = vdwg.mxu0
    %v968 = vadd.f32 %v641, %v928
    %v969 = vadd.f32 %v643, %v930
    %v970 = vadd.f32 %v647, %v934
    %v971 = vadd.f32 %v649, %v936
    %v972 = vadd.f32 %v653, %v940
    %v973 = vadd.f32 %v655, %v942
    %v974 = vadd.f32 %v659, %v946
    %v975 = vadd.f32 %v661, %v948
    %v976 = vadd.f32 %v665, %v952
    %v977 = vadd.f32 %v667, %v954
    %v978 = vadd.f32 %v671, %v958
    %v979 = vadd.f32 %v673, %v960
    %v980 = vadd.f32 %v677, %v964
    %v981 = vadd.f32 %v679, %v966
    %s982 = scalar_lea.vmem %s0, 168
    %v983 = vld [vmem:[%s982] sm:$0xff]
    %v984 = vld [vmem:[%s982 + $0x8] sm:$0xff]
    %v985 = vld [vmem:[%s982 + $0x10] sm:$0xff]
    %v986 = vld [vmem:[%s982 + $0x18] sm:$0xff]
    %v987 = vld [vmem:[%s982 + $0x20] sm:$0xff]
    %v988 = vld [vmem:[%s982 + $0x28] sm:$0xff]
    %v989 = vld [vmem:[%s982 + $0x30] sm:$0xff]
    %s990 = scalar_lea.vmem [#allocation5], 192
    %v991 = vld [vmem:[%s990] sm:$0xff]
    %v992 = vld [vmem:[%s990 + $0x8] sm:$0xff]
    %v993 = vld [vmem:[%s990 + $0x10] sm:$0xff]
    %v994 = vld [vmem:[%s990 + $0x18] sm:$0xff]
    %v995 = vld [vmem:[%s990 + $0x20] sm:$0xff]
    %v996 = vld [vmem:[%s990 + $0x28] sm:$0xff]
    %v997 = vld [vmem:[%s990 + $0x30] sm:$0xf]
    %v998 = vld [vmem:[%s990 + $0x38] sm:$0xf]
    %v1000 = vsel %vm176, %v983, 0
    %v1003 = vsel %vm176, %v984, 0
    %v1006 = vsel %vm176, %v985, 0
    %v1009 = vsel %vm176, %v986, 0
    %v1012 = vsel %vm176, %v987, 0
    %v1015 = vsel %vm176, %v988, 0
    %v1018 = vsel %vm176, %v989, 0
    %v1021 = vsel %vm198, %v997, 0
    %v1024 = vsel %vm198, %v998, 0
    %1026 = vmatprep.subr.mxu0 %v992
    %1027 = vmatpush1.msra.mxu0 %v991
    %1028 = vmatprep.subr.mxu0 %v994
    %1029 = vmatpush1.msra.mxu0 %v993
    %1030 = vmatprep.subr.mxu0 %v996
    %1031 = vmatpush1.msra.mxu0 %v995
    %1032 = vmatprep.subr.mxu0 %v1024
    %1033 = vmatpush1.msra.mxu0 %v1021
    %1034 = vmatprep.subr.mxu0 0.0
    %1035 = vmatpush1.msra.mxu0 0.0
    %1036 = vmatprep.subr.mxu0 0.0
    %1037 = vmatpush1.msra.mxu0 0.0
    %1038 = vmatprep.subr.mxu0 0.0
    %1039 = vmatpush1.msra.mxu0 0.0
    %1040 = vmatprep.subr.mxu0 0.0
    %1041 = vmatpush1.msra.mxu0 0.0
    %1042 = vmatprep.subr.mxu0 0.0
    %1043 = vmatpush1.msra.mxu0 0.0
    %1044 = vmatprep.subr.mxu0 0.0
    %1045 = vmatpush1.msra.mxu0 0.0
    %1046 = vmatprep.subr.mxu0 0.0
    %1047 = vmatpush1.msra.mxu0 0.0
    %1048 = vmatprep.subr.mxu0 0.0
    %1049 = vmatpush1.msra.mxu0 0.0
    %1050 = vmatprep.subr.mxu0 0.0
    %1051 = vmatpush1.msra.mxu0 0.0
    %1052 = vmatprep.subr.mxu0 0.0
    %1053 = vmatpush1.msra.mxu0 0.0
    %1054 = vmatprep.subr.mxu0 0.0
    %1055 = vmatpush1.msra.mxu0 0.0
    %1056 = vmatprep.subr.mxu0 0.0
    %1057 = vmatpush1.msra.mxu0 0.0
    %1058 = vmatprep.subr.mxu0 0.0
    %1059 = vmatpush1.msra.mxu0 0.0
    %1060 = vmatprep.subr.mxu0 0.0
    %1061 = vmatpush1.msra.mxu0 0.0
    %1062 = vmatprep.subr.mxu0 0.0
    %1063 = vmatpush1.msra.mxu0 0.0
    %1064 = vmatprep.subr.mxu0 0.0
    %1065 = vmatpush1.msra.mxu0 0.0
    %1066 = vmatprep.subr.mxu0 0.0
    %1067 = vmatpush1.msra.mxu0 0.0
    %1068 = vmatprep.subr.mxu0 0.0
    %1069 = vmatpush1.msra.mxu0 0.0
    %1070 = vmatprep.subr.mxu0 0.0
    %1071 = vmatpush1.msra.mxu0 0.0
    %1072 = vmatprep.subr.mxu0 0.0
    %1073 = vmatpush1.msra.mxu0 0.0
    %1074 = vmatprep.subr.mxu0 0.0
    %1075 = vmatpush1.msra.mxu0 0.0
    %1076 = vmatprep.subr.mxu0 0.0
    %1077 = vmatpush1.msra.mxu0 0.0
    %1078 = vmatprep.subr.mxu0 0.0
    %1079 = vmatpush1.msra.mxu0 0.0
    %1080 = vmatprep.subr.mxu0 0.0
    %1081 = vmatpush1.msra.mxu0 0.0
    %1082 = vmatprep.subr.mxu0 0.0
    %1083 = vmatpush1.msra.mxu0 0.0
    %1084 = vmatprep.subr.mxu0 0.0
    %1085 = vmatpush1.msra.mxu0 0.0
    %1086 = vmatprep.subr.mxu0 0.0
    %1087 = vmatpush1.msra.mxu0 0.0
    %1088 = vmatprep.subr.mxu0 0.0
    %1089 = vmatpush1.msra.mxu0 0.0
    %1090 = vmatprep.mubr.f32.mxu0 0.0
    %1091 = vmatmul.mubr.f32.gmra.mrb[0].mxu0 %v1000
    %v1092 = vpop.f32.mrb[0].mxu0
    %v1093 = vadd.f32 0.0, %v1092
    %v1094 = vpop.f32.mrb[0].mxu0
    %v1095 = vadd.f32 0.0, %v1094
    %1096 = vmatprep.mubr.f32.mxu0 0.0
    %1097 = vmatmul.mubr.f32.gmra.mrb[0].mxu0 %v1003
    %v1098 = vpop.f32.mrb[0].mxu0
    %v1099 = vadd.f32 0.0, %v1098
    %v1100 = vpop.f32.mrb[0].mxu0
    %v1101 = vadd.f32 0.0, %v1100
    %1102 = vmatprep.mubr.f32.mxu0 0.0
    %1103 = vmatmul.mubr.f32.gmra.mrb[0].mxu0 %v1006
    %v1104 = vpop.f32.mrb[0].mxu0
    %v1105 = vadd.f32 0.0, %v1104
    %v1106 = vpop.f32.mrb[0].mxu0
    %v1107 = vadd.f32 0.0, %v1106
    %1108 = vmatprep.mubr.f32.mxu0 0.0
    %1109 = vmatmul.mubr.f32.gmra.mrb[0].mxu0 %v1009
    %v1110 = vpop.f32.mrb[0].mxu0
    %v1111 = vadd.f32 0.0, %v1110
    %v1112 = vpop.f32.mrb[0].mxu0
    %v1113 = vadd.f32 0.0, %v1112
    %1114 = vmatprep.mubr.f32.mxu0 0.0
    %1115 = vmatmul.mubr.f32.gmra.mrb[0].mxu0 %v1012
    %v1116 = vpop.f32.mrb[0].mxu0
    %v1117 = vadd.f32 0.0, %v1116
    %v1118 = vpop.f32.mrb[0].mxu0
    %v1119 = vadd.f32 0.0, %v1118
    %1120 = vmatprep.mubr.f32.mxu0 0.0
    %1121 = vmatmul.mubr.f32.gmra.mrb[0].mxu0 %v1015
    %v1122 = vpop.f32.mrb[0].mxu0
    %v1123 = vadd.f32 0.0, %v1122
    %v1124 = vpop.f32.mrb[0].mxu0
    %v1125 = vadd.f32 0.0, %v1124
    %1126 = vmatprep.mubr.f32.mxu0 0.0
    %1127 = vmatmul.mubr.f32.gmra.mrb[0].mxu0 %v1018
    %v1128 = vpop.f32.mrb[0].mxu0
    %v1129 = vadd.f32 0.0, %v1128
    %v1130 = vpop.f32.mrb[0].mxu0
    %v1131 = vadd.f32 0.0, %v1130
    %1132 = vdwg.mxu0
    %v1133 = vadd.f32 %v832, %v1093
    %v1134 = vadd.f32 %v833, %v1095
    %v1135 = vadd.f32 %v834, %v1099
    %v1136 = vadd.f32 %v835, %v1101
    %v1137 = vadd.f32 %v836, %v1105
    %v1138 = vadd.f32 %v837, %v1107
    %v1139 = vadd.f32 %v838, %v1111
    %v1140 = vadd.f32 %v839, %v1113
    %v1141 = vadd.f32 %v840, %v1117
    %v1142 = vadd.f32 %v841, %v1119
    %v1143 = vadd.f32 %v842, %v1123
    %v1144 = vadd.f32 %v843, %v1125
    %v1145 = vadd.f32 %v844, %v1129
    %v1146 = vadd.f32 %v845, %v1131
    %s1147 = scalar_lea.vmem [#allocation8], 192
    %v1148 = vld [vmem:[%s1147] sm:$0xff]
    %v1149 = vld [vmem:[%s1147 + $0x8] sm:$0xff]
    %v1150 = vld [vmem:[%s1147 + $0x10] sm:$0xff]
    %v1151 = vld [vmem:[%s1147 + $0x18] sm:$0xff]
    %v1152 = vld [vmem:[%s1147 + $0x20] sm:$0xff]
    %v1153 = vld [vmem:[%s1147 + $0x28] sm:$0xff]
    %v1154 = vld [vmem:[%s1147 + $0x30] sm:$0xf]
    %v1155 = vld [vmem:[%s1147 + $0x38] sm:$0xf]
    %v1157 = vsel %vm198, %v1154, 0
    %v1160 = vsel %vm198, %v1155, 0
    %1162 = vmatprep.subr.mxu0 %v1149
    %1163 = vmatpush1.msra.mxu0 %v1148
    %1164 = vmatprep.subr.mxu0 %v1151
    %1165 = vmatpush1.msra.mxu0 %v1150
    %1166 = vmatprep.subr.mxu0 %v1153
    %1167 = vmatpush1.msra.mxu0 %v1152
    %1168 = vmatprep.subr.mxu0 %v1160
    %1169 = vmatpush1.msra.mxu0 %v1157
    %1170 = vmatprep.subr.mxu0 0.0
    %1171 = vmatpush1.msra.mxu0 0.0
    %1172 = vmatprep.subr.mxu0 0.0
    %1173 = vmatpush1.msra.mxu0 0.0
    %1174 = vmatprep.subr.mxu0 0.0
    %1175 = vmatpush1.msra.mxu0 0.0
    %1176 = vmatprep.subr.mxu0 0.0
    %1177 = vmatpush1.msra.mxu0 0.0
    %1178 = vmatprep.subr.mxu0 0.0
    %1179 = vmatpush1.msra.mxu0 0.0
    %1180 = vmatprep.subr.mxu0 0.0
    %1181 = vmatpush1.msra.mxu0 0.0
    %1182 = vmatprep.subr.mxu0 0.0
    %1183 = vmatpush1.msra.mxu0 0.0
    %1184 = vmatprep.subr.mxu0 0.0
    %1185 = vmatpush1.msra.mxu0 0.0
    %1186 = vmatprep.subr.mxu0 0.0
    %1187 = vmatpush1.msra.mxu0 0.0
    %1188 = vmatprep.subr.mxu0 0.0
    %1189 = vmatpush1.msra.mxu0 0.0
    %1190 = vmatprep.subr.mxu0 0.0
    %1191 = vmatpush1.msra.mxu0 0.0
    %1192 = vmatprep.subr.mxu0 0.0
    %1193 = vmatpush1.msra.mxu0 0.0
    %1194 = vmatprep.subr.mxu0 0.0
    %1195 = vmatpush1.msra.mxu0 0.0
    %1196 = vmatprep.subr.mxu0 0.0
    %1197 = vmatpush1.msra.mxu0 0.0
    %1198 = vmatprep.subr.mxu0 0.0
    %1199 = vmatpush1.msra.mxu0 0.0
    %1200 = vmatprep.subr.mxu0 0.0
    %1201 = vmatpush1.msra.mxu0 0.0
    %1202 = vmatprep.subr.mxu0 0.0
    %1203 = vmatpush1.msra.mxu0 0.0
    %1204 = vmatprep.subr.mxu0 0.0
    %1205 = vmatpush1.msra.mxu0 0.0
    %1206 = vmatprep.subr.mxu0 0.0
    %1207 = vmatpush1.msra.mxu0 0.0
    %1208 = vmatprep.subr.mxu0 0.0
    %1209 = vmatpush1.msra.mxu0 0.0
    %1210 = vmatprep.subr.mxu0 0.0
    %1211 = vmatpush1.msra.mxu0 0.0
    %1212 = vmatprep.subr.mxu0 0.0
    %1213 = vmatpush1.msra.mxu0 0.0
    %1214 = vmatprep.subr.mxu0 0.0
    %1215 = vmatpush1.msra.mxu0 0.0
    %1216 = vmatprep.subr.mxu0 0.0
    %1217 = vmatpush1.msra.mxu0 0.0
    %1218 = vmatprep.subr.mxu0 0.0
    %1219 = vmatpush1.msra.mxu0 0.0
    %1220 = vmatprep.subr.mxu0 0.0
    %1221 = vmatpush1.msra.mxu0 0.0
    %1222 = vmatprep.subr.mxu0 0.0
    %1223 = vmatpush1.msra.mxu0 0.0
    %1224 = vmatprep.subr.mxu0 0.0
    %1225 = vmatpush1.msra.mxu0 0.0
    %1226 = vmatprep.mubr.f32.mxu0 0.0
    %1227 = vmatmul.mubr.f32.gmra.mrb[0].mxu0 %v1000
    %v1228 = vpop.f32.mrb[0].mxu0
    %v1229 = vadd.f32 0.0, %v1228
    %v1230 = vpop.f32.mrb[0].mxu0
    %v1231 = vadd.f32 0.0, %v1230
    %1232 = vmatprep.mubr.f32.mxu0 0.0
    %1233 = vmatmul.mubr.f32.gmra.mrb[0].mxu0 %v1003
    %v1234 = vpop.f32.mrb[0].mxu0
    %v1235 = vadd.f32 0.0, %v1234
    %v1236 = vpop.f32.mrb[0].mxu0
    %v1237 = vadd.f32 0.0, %v1236
    %1238 = vmatprep.mubr.f32.mxu0 0.0
    %1239 = vmatmul.mubr.f32.gmra.mrb[0].mxu0 %v1006
    %v1240 = vpop.f32.mrb[0].mxu0
    %v1241 = vadd.f32 0.0, %v1240
    %v1242 = vpop.f32.mrb[0].mxu0
    %v1243 = vadd.f32 0.0, %v1242
    %1244 = vmatprep.mubr.f32.mxu0 0.0
    %1245 = vmatmul.mubr.f32.gmra.mrb[0].mxu0 %v1009
    %v1246 = vpop.f32.mrb[0].mxu0
    %v1247 = vadd.f32 0.0, %v1246
    %v1248 = vpop.f32.mrb[0].mxu0
    %v1249 = vadd.f32 0.0, %v1248
    %1250 = vmatprep.mubr.f32.mxu0 0.0
    %1251 = vmatmul.mubr.f32.gmra.mrb[0].mxu0 %v1012
    %v1252 = vpop.f32.mrb[0].mxu0
    %v1253 = vadd.f32 0.0, %v1252
    %v1254 = vpop.f32.mrb[0].mxu0
    %v1255 = vadd.f32 0.0, %v1254
    %1256 = vmatprep.mubr.f32.mxu0 0.0
    %1257 = vmatmul.mubr.f32.gmra.mrb[0].mxu0 %v1015
    %v1258 = vpop.f32.mrb[0].mxu0
    %v1259 = vadd.f32 0.0, %v1258
    %v1260 = vpop.f32.mrb[0].mxu0
    %v1261 = vadd.f32 0.0, %v1260
    %1262 = vmatprep.mubr.f32.mxu0 0.0
    %1263 = vmatmul.mubr.f32.gmra.mrb[0].mxu0 %v1018
    %v1264 = vpop.f32.mrb[0].mxu0
    %v1265 = vadd.f32 0.0, %v1264
    %v1266 = vpop.f32.mrb[0].mxu0
    %v1267 = vadd.f32 0.0, %v1266
    %1268 = vdwg.mxu0
    %v1269 = vadd.f32 %v968, %v1229
    %v1270 = vadd.f32 %v969, %v1231
    %v1271 = vadd.f32 %v970, %v1235
    %v1272 = vadd.f32 %v971, %v1237
    %v1273 = vadd.f32 %v972, %v1241
    %v1274 = vadd.f32 %v973, %v1243
    %v1275 = vadd.f32 %v974, %v1247
    %v1276 = vadd.f32 %v975, %v1249
    %v1277 = vadd.f32 %v976, %v1253
    %v1278 = vadd.f32 %v977, %v1255
    %v1279 = vadd.f32 %v978, %v1259
    %v1280 = vadd.f32 %v979, %v1261
    %v1281 = vadd.f32 %v980, %v1265
    %v1282 = vadd.f32 %v981, %v1267
    %s1283 = scalar_lea.vmem %s0, 224
    %v1284 = vld [vmem:[%s1283] sm:$0xff]
    %v1285 = vld [vmem:[%s1283 + $0x8] sm:$0xff]
    %v1286 = vld [vmem:[%s1283 + $0x10] sm:$0xff]
    %v1287 = vld [vmem:[%s1283 + $0x18] sm:$0xff]
    %v1288 = vld [vmem:[%s1283 + $0x20] sm:$0xff]
    %v1289 = vld [vmem:[%s1283 + $0x28] sm:$0xff]
    %v1290 = vld [vmem:[%s1283 + $0x30] sm:$0xff]
    %s1291 = scalar_lea.vmem [#allocation5], 256
    %v1292 = vld [vmem:[%s1291] sm:$0xff]
    %v1293 = vld [vmem:[%s1291 + $0x8] sm:$0xff]
    %v1294 = vld [vmem:[%s1291 + $0x10] sm:$0xff]
    %v1295 = vld [vmem:[%s1291 + $0x18] sm:$0xff]
    %v1296 = vld [vmem:[%s1291 + $0x20] sm:$0xff]
    %v1297 = vld [vmem:[%s1291 + $0x28] sm:$0xff]
    %v1298 = vld [vmem:[%s1291 + $0x30] sm:$0xf]
    %v1299 = vld [vmem:[%s1291 + $0x38] sm:$0xf]
    %v1301 = vsel %vm176, %v1284, 0
    %v1304 = vsel %vm176, %v1285, 0
    %v1307 = vsel %vm176, %v1286, 0
    %v1310 = vsel %vm176, %v1287, 0
    %v1313 = vsel %vm176, %v1288, 0
    %v1316 = vsel %vm176, %v1289, 0
    %v1319 = vsel %vm176, %v1290, 0
    %v1322 = vsel %vm198, %v1298, 0
    %v1325 = vsel %vm198, %v1299, 0
    %1327 = vmatprep.subr.mxu0 %v1293
    %1328 = vmatpush1.msra.mxu0 %v1292
    %1329 = vmatprep.subr.mxu0 %v1295
    %1330 = vmatpush1.msra.mxu0 %v1294
    %1331 = vmatprep.subr.mxu0 %v1297
    %1332 = vmatpush1.msra.mxu0 %v1296
    %1333 = vmatprep.subr.mxu0 %v1325
    %1334 = vmatpush1.msra.mxu0 %v1322
    %1335 = vmatprep.subr.mxu0 0.0
    %1336 = vmatpush1.msra.mxu0 0.0
    %1337 = vmatprep.subr.mxu0 0.0
    %1338 = vmatpush1.msra.mxu0 0.0
    %1339 = vmatprep.subr.mxu0 0.0
    %1340 = vmatpush1.msra.mxu0 0.0
    %1341 = vmatprep.subr.mxu0 0.0
    %1342 = vmatpush1.msra.mxu0 0.0
    %1343 = vmatprep.subr.mxu0 0.0
    %1344 = vmatpush1.msra.mxu0 0.0
    %1345 = vmatprep.subr.mxu0 0.0
    %1346 = vmatpush1.msra.mxu0 0.0
    %1347 = vmatprep.subr.mxu0 0.0
    %1348 = vmatpush1.msra.mxu0 0.0
    %1349 = vmatprep.subr.mxu0 0.0
    %1350 = vmatpush1.msra.mxu0 0.0
    %1351 = vmatprep.subr.mxu0 0.0
    %1352 = vmatpush1.msra.mxu0 0.0
    %1353 = vmatprep.subr.mxu0 0.0
    %1354 = vmatpush1.msra.mxu0 0.0
    %1355 = vmatprep.subr.mxu0 0.0
    %1356 = vmatpush1.msra.mxu0 0.0
    %1357 = vmatprep.subr.mxu0 0.0
    %1358 = vmatpush1.msra.mxu0 0.0
    %1359 = vmatprep.subr.mxu0 0.0
    %1360 = vmatpush1.msra.mxu0 0.0
    %1361 = vmatprep.subr.mxu0 0.0
    %1362 = vmatpush1.msra.mxu0 0.0
    %1363 = vmatprep.subr.mxu0 0.0
    %1364 = vmatpush1.msra.mxu0 0.0
    %1365 = vmatprep.subr.mxu0 0.0
    %1366 = vmatpush1.msra.mxu0 0.0
    %1367 = vmatprep.subr.mxu0 0.0
    %1368 = vmatpush1.msra.mxu0 0.0
    %1369 = vmatprep.subr.mxu0 0.0
    %1370 = vmatpush1.msra.mxu0 0.0
    %1371 = vmatprep.subr.mxu0 0.0
    %1372 = vmatpush1.msra.mxu0 0.0
    %1373 = vmatprep.subr.mxu0 0.0
    %1374 = vmatpush1.msra.mxu0 0.0
    %1375 = vmatprep.subr.mxu0 0.0
    %1376 = vmatpush1.msra.mxu0 0.0
    %1377 = vmatprep.subr.mxu0 0.0
    %1378 = vmatpush1.msra.mxu0 0.0
    %1379 = vmatprep.subr.mxu0 0.0
    %1380 = vmatpush1.msra.mxu0 0.0
    %1381 = vmatprep.subr.mxu0 0.0
    %1382 = vmatpush1.msra.mxu0 0.0
    %1383 = vmatprep.subr.mxu0 0.0
    %1384 = vmatpush1.msra.mxu0 0.0
    %1385 = vmatprep.subr.mxu0 0.0
    %1386 = vmatpush1.msra.mxu0 0.0
    %1387 = vmatprep.subr.mxu0 0.0
    %1388 = vmatpush1.msra.mxu0 0.0
    %1389 = vmatprep.subr.mxu0 0.0
    %1390 = vmatpush1.msra.mxu0 0.0
    %1391 = vmatprep.mubr.f32.mxu0 0.0
    %1392 = vmatmul.mubr.f32.gmra.mrb[0].mxu0 %v1301
    %v1393 = vpop.f32.mrb[0].mxu0
    %v1394 = vadd.f32 0.0, %v1393
    %v1395 = vpop.f32.mrb[0].mxu0
    %v1396 = vadd.f32 0.0, %v1395
    %1397 = vmatprep.mubr.f32.mxu0 0.0
    %1398 = vmatmul.mubr.f32.gmra.mrb[0].mxu0 %v1304
    %v1399 = vpop.f32.mrb[0].mxu0
    %v1400 = vadd.f32 0.0, %v1399
    %v1401 = vpop.f32.mrb[0].mxu0
    %v1402 = vadd.f32 0.0, %v1401
    %1403 = vmatprep.mubr.f32.mxu0 0.0
    %1404 = vmatmul.mubr.f32.gmra.mrb[0].mxu0 %v1307
    %v1405 = vpop.f32.mrb[0].mxu0
    %v1406 = vadd.f32 0.0, %v1405
    %v1407 = vpop.f32.mrb[0].mxu0
    %v1408 = vadd.f32 0.0, %v1407
    %1409 = vmatprep.mubr.f32.mxu0 0.0
    %1410 = vmatmul.mubr.f32.gmra.mrb[0].mxu0 %v1310
    %v1411 = vpop.f32.mrb[0].mxu0
    %v1412 = vadd.f32 0.0, %v1411
    %v1413 = vpop.f32.mrb[0].mxu0
    %v1414 = vadd.f32 0.0, %v1413
    %1415 = vmatprep.mubr.f32.mxu0 0.0
    %1416 = vmatmul.mubr.f32.gmra.mrb[0].mxu0 %v1313
    %v1417 = vpop.f32.mrb[0].mxu0
    %v1418 = vadd.f32 0.0, %v1417
    %v1419 = vpop.f32.mrb[0].mxu0
    %v1420 = vadd.f32 0.0, %v1419
    %1421 = vmatprep.mubr.f32.mxu0 0.0
    %1422 = vmatmul.mubr.f32.gmra.mrb[0].mxu0 %v1316
    %v1423 = vpop.f32.mrb[0].mxu0
    %v1424 = vadd.f32 0.0, %v1423
    %v1425 = vpop.f32.mrb[0].mxu0
    %v1426 = vadd.f32 0.0, %v1425
    %1427 = vmatprep.mubr.f32.mxu0 0.0
    %1428 = vmatmul.mubr.f32.gmra.mrb[0].mxu0 %v1319
    %v1429 = vpop.f32.mrb[0].mxu0
    %v1430 = vadd.f32 0.0, %v1429
    %v1431 = vpop.f32.mrb[0].mxu0
    %v1432 = vadd.f32 0.0, %v1431
    %1433 = vdwg.mxu0
    %v1434 = vadd.f32 %v1133, %v1394
    %v1435 = vadd.f32 %v1134, %v1396
    %v1436 = vadd.f32 %v1135, %v1400
    %v1437 = vadd.f32 %v1136, %v1402
    %v1438 = vadd.f32 %v1137, %v1406
    %v1439 = vadd.f32 %v1138, %v1408
    %v1440 = vadd.f32 %v1139, %v1412
    %v1441 = vadd.f32 %v1140, %v1414
    %v1442 = vadd.f32 %v1141, %v1418
    %v1443 = vadd.f32 %v1142, %v1420
    %v1444 = vadd.f32 %v1143, %v1424
    %v1445 = vadd.f32 %v1144, %v1426
    %v1446 = vadd.f32 %v1145, %v1430
    %v1447 = vadd.f32 %v1146, %v1432
    %s1448 = scalar_lea.vmem [#allocation8], 256
    %v1449 = vld [vmem:[%s1448] sm:$0xff]
    %v1450 = vld [vmem:[%s1448 + $0x8] sm:$0xff]
    %v1451 = vld [vmem:[%s1448 + $0x10] sm:$0xff]
    %v1452 = vld [vmem:[%s1448 + $0x18] sm:$0xff]
    %v1453 = vld [vmem:[%s1448 + $0x20] sm:$0xff]
    %v1454 = vld [vmem:[%s1448 + $0x28] sm:$0xff]
    %v1455 = vld [vmem:[%s1448 + $0x30] sm:$0xf]
    %v1456 = vld [vmem:[%s1448 + $0x38] sm:$0xf]
    %v1458 = vsel %vm198, %v1455, 0
    %v1461 = vsel %vm198, %v1456, 0
    %1463 = vmatprep.subr.mxu0 %v1450
    %1464 = vmatpush1.msra.mxu0 %v1449
    %1465 = vmatprep.subr.mxu0 %v1452
    %1466 = vmatpush1.msra.mxu0 %v1451
    %1467 = vmatprep.subr.mxu0 %v1454
    %1468 = vmatpush1.msra.mxu0 %v1453
    %1469 = vmatprep.subr.mxu0 %v1461
    %1470 = vmatpush1.msra.mxu0 %v1458
    %1471 = vmatprep.subr.mxu0 0.0
    %1472 = vmatpush1.msra.mxu0 0.0
    %1473 = vmatprep.subr.mxu0 0.0
    %1474 = vmatpush1.msra.mxu0 0.0
    %1475 = vmatprep.subr.mxu0 0.0
    %1476 = vmatpush1.msra.mxu0 0.0
    %1477 = vmatprep.subr.mxu0 0.0
    %1478 = vmatpush1.msra.mxu0 0.0
    %1479 = vmatprep.subr.mxu0 0.0
    %1480 = vmatpush1.msra.mxu0 0.0
    %1481 = vmatprep.subr.mxu0 0.0
    %1482 = vmatpush1.msra.mxu0 0.0
    %1483 = vmatprep.subr.mxu0 0.0
    %1484 = vmatpush1.msra.mxu0 0.0
    %1485 = vmatprep.subr.mxu0 0.0
    %1486 = vmatpush1.msra.mxu0 0.0
    %1487 = vmatprep.subr.mxu0 0.0
    %1488 = vmatpush1.msra.mxu0 0.0
    %1489 = vmatprep.subr.mxu0 0.0
    %1490 = vmatpush1.msra.mxu0 0.0
    %1491 = vmatprep.subr.mxu0 0.0
    %1492 = vmatpush1.msra.mxu0 0.0
    %1493 = vmatprep.subr.mxu0 0.0
    %1494 = vmatpush1.msra.mxu0 0.0
    %1495 = vmatprep.subr.mxu0 0.0
    %1496 = vmatpush1.msra.mxu0 0.0
    %1497 = vmatprep.subr.mxu0 0.0
    %1498 = vmatpush1.msra.mxu0 0.0
    %1499 = vmatprep.subr.mxu0 0.0
    %1500 = vmatpush1.msra.mxu0 0.0
    %1501 = vmatprep.subr.mxu0 0.0
    %1502 = vmatpush1.msra.mxu0 0.0
    %1503 = vmatprep.subr.mxu0 0.0
    %1504 = vmatpush1.msra.mxu0 0.0
    %1505 = vmatprep.subr.mxu0 0.0
    %1506 = vmatpush1.msra.mxu0 0.0
    %1507 = vmatprep.subr.mxu0 0.0
    %1508 = vmatpush1.msra.mxu0 0.0
    %1509 = vmatprep.subr.mxu0 0.0
    %1510 = vmatpush1.msra.mxu0 0.0
    %1511 = vmatprep.subr.mxu0 0.0
    %1512 = vmatpush1.msra.mxu0 0.0
    %1513 = vmatprep.subr.mxu0 0.0
    %1514 = vmatpush1.msra.mxu0 0.0
    %1515 = vmatprep.subr.mxu0 0.0
    %1516 = vmatpush1.msra.mxu0 0.0
    %1517 = vmatprep.subr.mxu0 0.0
    %1518 = vmatpush1.msra.mxu0 0.0
    %1519 = vmatprep.subr.mxu0 0.0
    %1520 = vmatpush1.msra.mxu0 0.0
    %1521 = vmatprep.subr.mxu0 0.0
    %1522 = vmatpush1.msra.mxu0 0.0
    %1523 = vmatprep.subr.mxu0 0.0
    %1524 = vmatpush1.msra.mxu0 0.0
    %1525 = vmatprep.subr.mxu0 0.0
    %1526 = vmatpush1.msra.mxu0 0.0
    %1527 = vmatprep.mubr.f32.mxu0 0.0
    %1528 = vmatmul.mubr.f32.gmra.mrb[0].mxu0 %v1301
    %v1529 = vpop.f32.mrb[0].mxu0
    %v1530 = vadd.f32 0.0, %v1529
    %v1531 = vpop.f32.mrb[0].mxu0
    %v1532 = vadd.f32 0.0, %v1531
    %1533 = vmatprep.mubr.f32.mxu0 0.0
    %1534 = vmatmul.mubr.f32.gmra.mrb[0].mxu0 %v1304
    %v1535 = vpop.f32.mrb[0].mxu0
    %v1536 = vadd.f32 0.0, %v1535
    %v1537 = vpop.f32.mrb[0].mxu0
    %v1538 = vadd.f32 0.0, %v1537
    %1539 = vmatprep.mubr.f32.mxu0 0.0
    %1540 = vmatmul.mubr.f32.gmra.mrb[0].mxu0 %v1307
    %v1541 = vpop.f32.mrb[0].mxu0
    %v1542 = vadd.f32 0.0, %v1541
    %v1543 = vpop.f32.mrb[0].mxu0
    %v1544 = vadd.f32 0.0, %v1543
    %1545 = vmatprep.mubr.f32.mxu0 0.0
    %1546 = vmatmul.mubr.f32.gmra.mrb[0].mxu0 %v1310
    %v1547 = vpop.f32.mrb[0].mxu0
    %v1548 = vadd.f32 0.0, %v1547
    %v1549 = vpop.f32.mrb[0].mxu0
    %v1550 = vadd.f32 0.0, %v1549
    %1551 = vmatprep.mubr.f32.mxu0 0.0
    %1552 = vmatmul.mubr.f32.gmra.mrb[0].mxu0 %v1313
    %v1553 = vpop.f32.mrb[0].mxu0
    %v1554 = vadd.f32 0.0, %v1553
    %v1555 = vpop.f32.mrb[0].mxu0
    %v1556 = vadd.f32 0.0, %v1555
    %1557 = vmatprep.mubr.f32.mxu0 0.0
    %1558 = vmatmul.mubr.f32.gmra.mrb[0].mxu0 %v1316
    %v1559 = vpop.f32.mrb[0].mxu0
    %v1560 = vadd.f32 0.0, %v1559
    %v1561 = vpop.f32.mrb[0].mxu0
    %v1562 = vadd.f32 0.0, %v1561
    %1563 = vmatprep.mubr.f32.mxu0 0.0
    %1564 = vmatmul.mubr.f32.gmra.mrb[0].mxu0 %v1319
    %v1565 = vpop.f32.mrb[0].mxu0
    %v1566 = vadd.f32 0.0, %v1565
    %v1567 = vpop.f32.mrb[0].mxu0
    %v1568 = vadd.f32 0.0, %v1567
    %1569 = vdwg.mxu0
    %v1570 = vadd.f32 %v1269, %v1530
    %v1571 = vadd.f32 %v1270, %v1532
    %v1572 = vadd.f32 %v1271, %v1536
    %v1573 = vadd.f32 %v1272, %v1538
    %v1574 = vadd.f32 %v1273, %v1542
    %v1575 = vadd.f32 %v1274, %v1544
    %v1576 = vadd.f32 %v1275, %v1548
    %v1577 = vadd.f32 %v1276, %v1550
    %v1578 = vadd.f32 %v1277, %v1554
    %v1579 = vadd.f32 %v1278, %v1556
    %v1580 = vadd.f32 %v1279, %v1560
    %v1581 = vadd.f32 %v1280, %v1562
    %v1582 = vadd.f32 %v1281, %v1566
    %v1583 = vadd.f32 %v1282, %v1568
    %v1584 = vmax.f32 %v1434, %v1570
    %v1585 = vmax.f32 %v1435, %v1571
    %v1586 = vmax.f32 %v1436, %v1572
    %v1587 = vmax.f32 %v1437, %v1573
    %v1588 = vmax.f32 %v1438, %v1574
    %v1589 = vmax.f32 %v1439, %v1575
    %v1590 = vmax.f32 %v1440, %v1576
    %v1591 = vmax.f32 %v1441, %v1577
    %v1592 = vmax.f32 %v1442, %v1578
    %v1593 = vmax.f32 %v1443, %v1579
    %v1594 = vmax.f32 %v1444, %v1580
    %v1595 = vmax.f32 %v1445, %v1581
    %v1596 = vmax.f32 %v1446, %v1582
    %v1597 = vmax.f32 %v1447, %v1583
    %v1598 = vld [vmem:[#allocation10] sm:$0x3]
    %v1600 = vlaneseq
    %v1601 = vshrl.u32 %v1600, 7
    %v1602 = vsub.s32 0, %v1601
    %v1603 = vrot.slane %v1598, %v1602
    %v1604 = vlaneseq
    %v1605 = vshrl.u32 %v1604, 7
    %v1606 = vsub.s32 1, %v1605
    %v1607 = vrot.slane %v1598, %v1606
    %v1610 = vadd.f32 %v1584, %v1603
    %v1611 = vadd.f32 %v1585, %v1607
    %v1612 = vadd.f32 %v1586, %v1603
    %v1613 = vadd.f32 %v1587, %v1607
    %v1614 = vadd.f32 %v1588, %v1603
    %v1615 = vadd.f32 %v1589, %v1607
    %v1616 = vadd.f32 %v1590, %v1603
    %v1617 = vadd.f32 %v1591, %v1607
    %v1618 = vadd.f32 %v1592, %v1603
    %v1619 = vadd.f32 %v1593, %v1607
    %v1620 = vadd.f32 %v1594, %v1603
    %v1621 = vadd.f32 %v1595, %v1607
    %v1622 = vadd.f32 %v1596, %v1603
    %v1623 = vadd.f32 %v1597, %v1607
    %v1624 = vmax.f32 %v1610, 0.0
    %v1625 = vmax.f32 %v1611, 0.0
    %v1626 = vmax.f32 %v1612, 0.0
    %v1627 = vmax.f32 %v1613, 0.0
    %v1628 = vmax.f32 %v1614, 0.0
    %v1629 = vmax.f32 %v1615, 0.0
    %v1630 = vmax.f32 %v1616, 0.0
    %v1631 = vmax.f32 %v1617, 0.0
    %v1632 = vmax.f32 %v1618, 0.0
    %v1633 = vmax.f32 %v1619, 0.0
    %v1634 = vmax.f32 %v1620, 0.0
    %v1635 = vmax.f32 %v1621, 0.0
    %v1636 = vmax.f32 %v1622, 0.0
    %v1637 = vmax.f32 %v1623, 0.0
    %1638 = vst [vmem:[#allocation2] sm:$0xff] %v1624
    %vm1639 = vcmask 785408
    %1640 = vst.msk [vmem:[#allocation2 + $0x8] sm:$0xff] %vm1639, %v1625
    %1641 = vst [vmem:[#allocation2 + $0x10] sm:$0xff] %v1626
    %1642 = vst.msk [vmem:[#allocation2 + $0x18] sm:$0xff] %vm1639, %v1627
    %1643 = vst [vmem:[#allocation2 + $0x20] sm:$0xff] %v1628
    %1644 = vst.msk [vmem:[#allocation2 + $0x28] sm:$0xff] %vm1639, %v1629
    %1645 = vst [vmem:[#allocation2 + $0x30] sm:$0xff] %v1630
    %1646 = vst.msk [vmem:[#allocation2 + $0x38] sm:$0xff] %vm1639, %v1631
    %1647 = vst [vmem:[#allocation2 + $0x40] sm:$0xff] %v1632
    %1648 = vst.msk [vmem:[#allocation2 + $0x48] sm:$0xff] %vm1639, %v1633
    %1649 = vst [vmem:[#allocation2 + $0x50] sm:$0xff] %v1634
    %1650 = vst.msk [vmem:[#allocation2 + $0x58] sm:$0xff] %vm1639, %v1635
    %1651 = vst [vmem:[#allocation2 + $0x60] sm:$0xff] %v1636
    %1652 = vst.msk [vmem:[#allocation2 + $0x68] sm:$0xff] %vm1639, %v1637
    %1653 = vst [vmem:[#allocation3] sm:$0xf] 0.0
    %vm1654 = vcmask 781312
    %1655 = vst.msk [vmem:[#allocation3 + $0x8] sm:$0xf] %vm1654, 0.0
    %1656 = vst [vmem:[#allocation3 + $0x40] sm:$0xf] 0.0
    %1657 = vst.msk [vmem:[#allocation3 + $0x48] sm:$0xf] %vm1654, 0.0
    %v1658 = vld [vmem:[#allocation2] sm:$0x3]
    %v1659 = vld [vmem:[#allocation2 + $0x8] sm:$0x3]
    %v1660 = vld [vmem:[#allocation2] sm:$0xc]
    %v1661 = vld [vmem:[#allocation2 + $0x8] sm:$0xc]
    %v1664 = vrot.slane %v1660, 2
    %v1665 = vrot.slane %v1661, 2
    %v1668 = vmax.f32 %v1658, %v1664
    %v1669 = vmax.f32 %v1659, %v1665
    %v1672 = vrot.slane %v1668, 4
    %v1673 = vrot.slane %v1669, 4
    %1676 = vst [vmem:[#allocation3] sm:$0x30] %v1672
    %vm1677 = vcmask 783364
    %1678 = vst.msk [vmem:[#allocation3 + $0x8] sm:$0x30] %vm1677, %v1673
    %v1679 = vld [vmem:[#allocation2] sm:$0x30]
    %v1680 = vld [vmem:[#allocation2 + $0x8] sm:$0x30]
    %v1681 = vld [vmem:[#allocation2] sm:$0xc0]
    %v1682 = vld [vmem:[#allocation2 + $0x8] sm:$0xc0]
    %v1685 = vrot.slane %v1681, 2
    %v1686 = vrot.slane %v1682, 2
    %v1689 = vmax.f32 %v1679, %v1685
    %v1690 = vmax.f32 %v1680, %v1686
    %v1693 = vrot.slane %v1689, 6
    %v1694 = vrot.slane %v1690, 6
    %1697 = vst [vmem:[#allocation3] sm:$0xc0] %v1693
    %vm1698 = vcmask 785414
    %1699 = vst.msk [vmem:[#allocation3 + $0x8] sm:$0xc0] %vm1698, %v1694
    %v1700 = vld [vmem:[#allocation2 + $0x10] sm:$0x3]
    %v1701 = vld [vmem:[#allocation2 + $0x18] sm:$0x3]
    %v1702 = vld [vmem:[#allocation2 + $0x10] sm:$0xc]
    %v1703 = vld [vmem:[#allocation2 + $0x18] sm:$0xc]
    %v1706 = vrot.slane %v1702, 2
    %v1707 = vrot.slane %v1703, 2
    %v1710 = vmax.f32 %v1700, %v1706
    %v1711 = vmax.f32 %v1701, %v1707
    %1712 = vst [vmem:[#allocation3 + $0x10] sm:$0x3] %v1710
    %vm1713 = vcmask 779264
    %1714 = vst.msk [vmem:[#allocation3 + $0x18] sm:$0x3] %vm1713, %v1711
    %v1715 = vld [vmem:[#allocation2 + $0x10] sm:$0x30]
    %v1716 = vld [vmem:[#allocation2 + $0x18] sm:$0x30]
    %v1717 = vld [vmem:[#allocation2 + $0x10] sm:$0xc0]
    %v1718 = vld [vmem:[#allocation2 + $0x18] sm:$0xc0]
    %v1721 = vrot.slane %v1717, 2
    %v1722 = vrot.slane %v1718, 2
    %v1725 = vmax.f32 %v1715, %v1721
    %v1726 = vmax.f32 %v1716, %v1722
    %v1729 = vrot.slane %v1725, 2
    %v1730 = vrot.slane %v1726, 2
    %1733 = vst [vmem:[#allocation3 + $0x10] sm:$0xc] %v1729
    %vm1734 = vcmask 781314
    %1735 = vst.msk [vmem:[#allocation3 + $0x18] sm:$0xc] %vm1734, %v1730
    %v1736 = vld [vmem:[#allocation2 + $0x20] sm:$0x3]
    %v1737 = vld [vmem:[#allocation2 + $0x28] sm:$0x3]
    %v1738 = vld [vmem:[#allocation2 + $0x20] sm:$0xc]
    %v1739 = vld [vmem:[#allocation2 + $0x28] sm:$0xc]
    %v1742 = vrot.slane %v1738, 2
    %v1743 = vrot.slane %v1739, 2
    %v1746 = vmax.f32 %v1736, %v1742
    %v1747 = vmax.f32 %v1737, %v1743
    %v1750 = vrot.slane %v1746, 4
    %v1751 = vrot.slane %v1747, 4
    %1754 = vst [vmem:[#allocation3 + $0x10] sm:$0x30] %v1750
    %1755 = vst.msk [vmem:[#allocation3 + $0x18] sm:$0x30] %vm1677, %v1751
    %v1756 = vld [vmem:[#allocation2 + $0x20] sm:$0x30]
    %v1757 = vld [vmem:[#allocation2 + $0x28] sm:$0x30]
    %v1758 = vld [vmem:[#allocation2 + $0x20] sm:$0xc0]
    %v1759 = vld [vmem:[#allocation2 + $0x28] sm:$0xc0]
    %v1762 = vrot.slane %v1758, 2
    %v1763 = vrot.slane %v1759, 2
    %v1766 = vmax.f32 %v1756, %v1762
    %v1767 = vmax.f32 %v1757, %v1763
    %v1770 = vrot.slane %v1766, 6
    %v1771 = vrot.slane %v1767, 6
    %1774 = vst [vmem:[#allocation3 + $0x10] sm:$0xc0] %v1770
    %1775 = vst.msk [vmem:[#allocation3 + $0x18] sm:$0xc0] %vm1698, %v1771
    %v1776 = vld [vmem:[#allocation2 + $0x30] sm:$0x3]
    %v1777 = vld [vmem:[#allocation2 + $0x38] sm:$0x3]
    %v1778 = vld [vmem:[#allocation2 + $0x30] sm:$0xc]
    %v1779 = vld [vmem:[#allocation2 + $0x38] sm:$0xc]
    %v1782 = vrot.slane %v1778, 2
    %v1783 = vrot.slane %v1779, 2
    %v1786 = vmax.f32 %v1776, %v1782
    %v1787 = vmax.f32 %v1777, %v1783
    %1788 = vst [vmem:[#allocation3 + $0x20] sm:$0x3] %v1786
    %1789 = vst.msk [vmem:[#allocation3 + $0x28] sm:$0x3] %vm1713, %v1787
    %v1790 = vld [vmem:[#allocation2 + $0x30] sm:$0x30]
    %v1791 = vld [vmem:[#allocation2 + $0x38] sm:$0x30]
    %v1792 = vld [vmem:[#allocation2 + $0x30] sm:$0xc0]
    %v1793 = vld [vmem:[#allocation2 + $0x38] sm:$0xc0]
    %v1796 = vrot.slane %v1792, 2
    %v1797 = vrot.slane %v1793, 2
    %v1800 = vmax.f32 %v1790, %v1796
    %v1801 = vmax.f32 %v1791, %v1797
    %v1804 = vrot.slane %v1800, 2
    %v1805 = vrot.slane %v1801, 2
    %1808 = vst [vmem:[#allocation3 + $0x20] sm:$0xc] %v1804
    %1809 = vst.msk [vmem:[#allocation3 + $0x28] sm:$0xc] %vm1734, %v1805
    %v1810 = vld [vmem:[#allocation2 + $0x40] sm:$0x3]
    %v1811 = vld [vmem:[#allocation2 + $0x48] sm:$0x3]
    %v1812 = vld [vmem:[#allocation2 + $0x40] sm:$0xc]
    %v1813 = vld [vmem:[#allocation2 + $0x48] sm:$0xc]
    %v1816 = vrot.slane %v1812, 2
    %v1817 = vrot.slane %v1813, 2
    %v1820 = vmax.f32 %v1810, %v1816
    %v1821 = vmax.f32 %v1811, %v1817
    %v1824 = vrot.slane %v1820, 4
    %v1825 = vrot.slane %v1821, 4
    %1828 = vst [vmem:[#allocation3 + $0x20] sm:$0x30] %v1824
    %1829 = vst.msk [vmem:[#allocation3 + $0x28] sm:$0x30] %vm1677, %v1825
    %v1830 = vld [vmem:[#allocation2 + $0x40] sm:$0x30]
    %v1831 = vld [vmem:[#allocation2 + $0x48] sm:$0x30]
    %v1832 = vld [vmem:[#allocation2 + $0x40] sm:$0xc0]
    %v1833 = vld [vmem:[#allocation2 + $0x48] sm:$0xc0]
    %v1836 = vrot.slane %v1832, 2
    %v1837 = vrot.slane %v1833, 2
    %v1840 = vmax.f32 %v1830, %v1836
    %v1841 = vmax.f32 %v1831, %v1837
    %v1844 = vrot.slane %v1840, 6
    %v1845 = vrot.slane %v1841, 6
    %1848 = vst [vmem:[#allocation3 + $0x20] sm:$0xc0] %v1844
    %1849 = vst.msk [vmem:[#allocation3 + $0x28] sm:$0xc0] %vm1698, %v1845
    %v1850 = vld [vmem:[#allocation2 + $0x50] sm:$0x3]
    %v1851 = vld [vmem:[#allocation2 + $0x58] sm:$0x3]
    %v1852 = vld [vmem:[#allocation2 + $0x50] sm:$0xc]
    %v1853 = vld [vmem:[#allocation2 + $0x58] sm:$0xc]
    %v1856 = vrot.slane %v1852, 2
    %v1857 = vrot.slane %v1853, 2
    %v1860 = vmax.f32 %v1850, %v1856
    %v1861 = vmax.f32 %v1851, %v1857
    %1862 = vst [vmem:[#allocation3 + $0x30] sm:$0x3] %v1860
    %1863 = vst.msk [vmem:[#allocation3 + $0x38] sm:$0x3] %vm1713, %v1861
    %v1864 = vld [vmem:[#allocation2 + $0x50] sm:$0x30]
    %v1865 = vld [vmem:[#allocation2 + $0x58] sm:$0x30]
    %v1866 = vld [vmem:[#allocation2 + $0x50] sm:$0xc0]
    %v1867 = vld [vmem:[#allocation2 + $0x58] sm:$0xc0]
    %v1870 = vrot.slane %v1866, 2
    %v1871 = vrot.slane %v1867, 2
    %v1874 = vmax.f32 %v1864, %v1870
    %v1875 = vmax.f32 %v1865, %v1871
    %v1878 = vrot.slane %v1874, 2
    %v1879 = vrot.slane %v1875, 2
    %1882 = vst [vmem:[#allocation3 + $0x30] sm:$0xc] %v1878
    %1883 = vst.msk [vmem:[#allocation3 + $0x38] sm:$0xc] %vm1734, %v1879
    %v1884 = vld [vmem:[#allocation2 + $0x60] sm:$0x3]
    %v1885 = vld [vmem:[#allocation2 + $0x68] sm:$0x3]
    %v1886 = vld [vmem:[#allocation2 + $0x60] sm:$0xc]
    %v1887 = vld [vmem:[#allocation2 + $0x68] sm:$0xc]
    %v1890 = vrot.slane %v1886, 2
    %v1891 = vrot.slane %v1887, 2
    %v1894 = vmax.f32 %v1884, %v1890
    %v1895 = vmax.f32 %v1885, %v1891
    %v1898 = vrot.slane %v1894, 4
    %v1899 = vrot.slane %v1895, 4
    %1902 = vst [vmem:[#allocation3 + $0x30] sm:$0x30] %v1898
    %1903 = vst.msk [vmem:[#allocation3 + $0x38] sm:$0x30] %vm1677, %v1899
    %v1904 = vld [vmem:[#allocation2 + $0x60] sm:$0x30]
    %v1905 = vld [vmem:[#allocation2 + $0x68] sm:$0x30]
    %v1906 = vld [vmem:[#allocation2 + $0x60] sm:$0xc0]
    %v1907 = vld [vmem:[#allocation2 + $0x68] sm:$0xc0]
    %v1910 = vrot.slane %v1906, 2
    %v1911 = vrot.slane %v1907, 2
    %v1914 = vmax.f32 %v1904, %v1910
    %v1915 = vmax.f32 %v1905, %v1911
    %v1918 = vrot.slane %v1914, 6
    %v1919 = vrot.slane %v1915, 6
    %1922 = vst [vmem:[#allocation3 + $0x30] sm:$0xc0] %v1918
    %1923 = vst.msk [vmem:[#allocation3 + $0x38] sm:$0xc0] %vm1698, %v1919
    %v1924 = vld [vmem:[#allocation3] sm:$0xff]
    %v1925 = vld [vmem:[#allocation3 + $0x8] sm:$0xff]
    %v1926 = vld [vmem:[#allocation3 + $0x10] sm:$0xff]
    %v1927 = vld [vmem:[#allocation3 + $0x18] sm:$0xff]
    %v1928 = vld [vmem:[#allocation3 + $0x20] sm:$0xff]
    %v1929 = vld [vmem:[#allocation3 + $0x28] sm:$0xff]
    %v1930 = vld [vmem:[#allocation3 + $0x30] sm:$0xf]
    %v1931 = vld [vmem:[#allocation3 + $0x38] sm:$0xf]
    %v1932 = vld [vmem:[#allocation11] sm:$0xff]
    %v1933 = vld [vmem:[#allocation11 + $0x8] sm:$0xff]
    %v1934 = vld [vmem:[#allocation11 + $0x10] sm:$0xff]
    %v1935 = vld [vmem:[#allocation11 + $0x18] sm:$0xff]
    %v1936 = vld [vmem:[#allocation11 + $0x20] sm:$0xff]
    %v1937 = vld [vmem:[#allocation11 + $0x28] sm:$0xff]
    %v1938 = vld [vmem:[#allocation11 + $0x30] sm:$0xff]
    %v1939 = vld [vmem:[#allocation11 + $0x38] sm:$0xff]
    %v1940 = vld [vmem:[#allocation11 + $0x40] sm:$0xff]
    %v1941 = vld [vmem:[#allocation11 + $0x48] sm:$0xff]
    %v1942 = vld [vmem:[#allocation11 + $0x50] sm:$0xff]
    %v1943 = vld [vmem:[#allocation11 + $0x58] sm:$0xff]
    %v1944 = vld [vmem:[#allocation11 + $0x60] sm:$0xff]
    %v1945 = vld [vmem:[#allocation11 + $0x68] sm:$0xff]
    %v1946 = vld [vmem:[#allocation11 + $0x70] sm:$0xff]
    %v1947 = vld [vmem:[#allocation11 + $0x78] sm:$0xff]
    %v1948 = vld [vmem:[#allocation11 + $0x80] sm:$0xff]
    %v1949 = vld [vmem:[#allocation11 + $0x88] sm:$0xff]
    %v1950 = vld [vmem:[#allocation11 + $0x90] sm:$0xff]
    %v1951 = vld [vmem:[#allocation11 + $0x98] sm:$0xff]
    %v1952 = vld [vmem:[#allocation11 + $0xa0] sm:$0xff]
    %v1953 = vld [vmem:[#allocation11 + $0xa8] sm:$0xff]
    %v1954 = vld [vmem:[#allocation11 + $0xb0] sm:$0xff]
    %v1955 = vld [vmem:[#allocation11 + $0xb8] sm:$0xff]
    %v1956 = vld [vmem:[#allocation11 + $0xc0] sm:$0xff]
    %v1957 = vld [vmem:[#allocation11 + $0xc8] sm:$0xff]
    %v1958 = vld [vmem:[#allocation11 + $0xd0] sm:$0xff]
    %v1959 = vld [vmem:[#allocation11 + $0xd8] sm:$0xff]
    %v1960 = vld [vmem:[#allocation11 + $0xe0] sm:$0xff]
    %v1961 = vld [vmem:[#allocation11 + $0xe8] sm:$0xff]
    %v1962 = vld [vmem:[#allocation11 + $0xf0] sm:$0xff]
    %v1963 = vld [vmem:[#allocation11 + $0xf8] sm:$0xff]
    %v1964 = vld [vmem:[#allocation11 + $0x100] sm:$0xff]
    %v1965 = vld [vmem:[#allocation11 + $0x108] sm:$0xff]
    %v1966 = vld [vmem:[#allocation11 + $0x110] sm:$0xff]
    %v1967 = vld [vmem:[#allocation11 + $0x118] sm:$0xff]
    %v1968 = vld [vmem:[#allocation11 + $0x120] sm:$0xff]
    %v1969 = vld [vmem:[#allocation11 + $0x128] sm:$0xff]
    %v1970 = vld [vmem:[#allocation11 + $0x130] sm:$0xff]
    %v1971 = vld [vmem:[#allocation11 + $0x138] sm:$0xff]
    %v1972 = vld [vmem:[#allocation11 + $0x140] sm:$0xff]
    %v1973 = vld [vmem:[#allocation11 + $0x148] sm:$0xff]
    %v1974 = vld [vmem:[#allocation11 + $0x150] sm:$0xff]
    %v1975 = vld [vmem:[#allocation11 + $0x158] sm:$0xff]
    %v1976 = vld [vmem:[#allocation11 + $0x160] sm:$0xff]
    %v1977 = vld [vmem:[#allocation11 + $0x168] sm:$0xff]
    %v1978 = vld [vmem:[#allocation11 + $0x170] sm:$0xff]
    %v1979 = vld [vmem:[#allocation11 + $0x178] sm:$0xff]
    %v1980 = vld [vmem:[#allocation11 + $0x180] sm:$0xff]
    %v1981 = vld [vmem:[#allocation11 + $0x188] sm:$0xff]
    %v1982 = vld [vmem:[#allocation11 + $0x190] sm:$0xff]
    %v1983 = vld [vmem:[#allocation11 + $0x198] sm:$0xff]
    %v1984 = vld [vmem:[#allocation11 + $0x1a0] sm:$0xff]
    %v1985 = vld [vmem:[#allocation11 + $0x1a8] sm:$0xff]
    %v1986 = vld [vmem:[#allocation11 + $0x1b0] sm:$0xff]
    %v1987 = vld [vmem:[#allocation11 + $0x1b8] sm:$0xff]
    %v1988 = vld [vmem:[#allocation13] sm:$0xff]
    %v1989 = vld [vmem:[#allocation13 + $0x8] sm:$0xff]
    %v1990 = vld [vmem:[#allocation13 + $0x10] sm:$0xff]
    %v1991 = vld [vmem:[#allocation13 + $0x18] sm:$0xff]
    %v1992 = vld [vmem:[#allocation13 + $0x20] sm:$0xff]
    %v1993 = vld [vmem:[#allocation13 + $0x28] sm:$0xff]
    %v1994 = vld [vmem:[#allocation13 + $0x30] sm:$0xff]
    %v1995 = vld [vmem:[#allocation13 + $0x38] sm:$0xff]
    %v1996 = vld [vmem:[#allocation13 + $0x40] sm:$0xff]
    %v1997 = vld [vmem:[#allocation13 + $0x48] sm:$0xff]
    %v1998 = vld [vmem:[#allocation13 + $0x50] sm:$0xff]
    %v1999 = vld [vmem:[#allocation13 + $0x58] sm:$0xff]
    %v2000 = vld [vmem:[#allocation13 + $0x60] sm:$0xff]
    %v2001 = vld [vmem:[#allocation13 + $0x68] sm:$0xff]
    %v2002 = vld [vmem:[#allocation13 + $0x70] sm:$0xff]
    %v2003 = vld [vmem:[#allocation13 + $0x78] sm:$0xff]
    %v2004 = vld [vmem:[#allocation13 + $0x80] sm:$0xff]
    %v2005 = vld [vmem:[#allocation13 + $0x88] sm:$0xff]
    %v2006 = vld [vmem:[#allocation13 + $0x90] sm:$0xff]
    %v2007 = vld [vmem:[#allocation13 + $0x98] sm:$0xff]
    %v2008 = vld [vmem:[#allocation13 + $0xa0] sm:$0xff]
    %v2009 = vld [vmem:[#allocation13 + $0xa8] sm:$0xff]
    %v2010 = vld [vmem:[#allocation13 + $0xb0] sm:$0xff]
    %v2011 = vld [vmem:[#allocation13 + $0xb8] sm:$0xff]
    %v2012 = vld [vmem:[#allocation13 + $0xc0] sm:$0xff]
    %v2013 = vld [vmem:[#allocation13 + $0xc8] sm:$0xff]
    %v2014 = vld [vmem:[#allocation13 + $0xd0] sm:$0xff]
    %v2015 = vld [vmem:[#allocation13 + $0xd8] sm:$0xff]
    %v2016 = vld [vmem:[#allocation13 + $0xe0] sm:$0xff]
    %v2017 = vld [vmem:[#allocation13 + $0xe8] sm:$0xff]
    %v2018 = vld [vmem:[#allocation13 + $0xf0] sm:$0xff]
    %v2019 = vld [vmem:[#allocation13 + $0xf8] sm:$0xff]
    %v2020 = vld [vmem:[#allocation13 + $0x100] sm:$0xff]
    %v2021 = vld [vmem:[#allocation13 + $0x108] sm:$0xff]
    %v2022 = vld [vmem:[#allocation13 + $0x110] sm:$0xff]
    %v2023 = vld [vmem:[#allocation13 + $0x118] sm:$0xff]
    %v2024 = vld [vmem:[#allocation13 + $0x120] sm:$0xff]
    %v2025 = vld [vmem:[#allocation13 + $0x128] sm:$0xff]
    %v2026 = vld [vmem:[#allocation13 + $0x130] sm:$0xff]
    %v2027 = vld [vmem:[#allocation13 + $0x138] sm:$0xff]
    %v2028 = vld [vmem:[#allocation13 + $0x140] sm:$0xff]
    %v2029 = vld [vmem:[#allocation13 + $0x148] sm:$0xff]
    %v2030 = vld [vmem:[#allocation13 + $0x150] sm:$0xff]
    %v2031 = vld [vmem:[#allocation13 + $0x158] sm:$0xff]
    %v2032 = vld [vmem:[#allocation13 + $0x160] sm:$0xff]
    %v2033 = vld [vmem:[#allocation13 + $0x168] sm:$0xff]
    %v2034 = vld [vmem:[#allocation13 + $0x170] sm:$0xff]
    %v2035 = vld [vmem:[#allocation13 + $0x178] sm:$0xff]
    %v2036 = vld [vmem:[#allocation13 + $0x180] sm:$0xff]
    %v2037 = vld [vmem:[#allocation13 + $0x188] sm:$0xff]
    %v2038 = vld [vmem:[#allocation13 + $0x190] sm:$0xff]
    %v2039 = vld [vmem:[#allocation13 + $0x198] sm:$0xff]
    %v2040 = vld [vmem:[#allocation13 + $0x1a0] sm:$0xff]
    %v2041 = vld [vmem:[#allocation13 + $0x1a8] sm:$0xff]
    %v2042 = vld [vmem:[#allocation13 + $0x1b0] sm:$0xff]
    %v2043 = vld [vmem:[#allocation13 + $0x1b8] sm:$0xff]
    %v2044 = vld [vmem:[#allocation3] sm:$0xfc]
    %v2045 = vld [vmem:[#allocation3 + $0x8] sm:$0xfc]
    %v2046 = vld [vmem:[#allocation3 + $0x30] sm:$0x3f]
    %v2047 = vld [vmem:[#allocation3 + $0x38] sm:$0x3f]
    %s2048 = scalar_lea.vmem [#allocation11], 448
    %v2049 = vld [vmem:[%s2048] sm:$0xff]
    %v2050 = vld [vmem:[%s2048 + $0x8] sm:$0xff]
    %v2051 = vld [vmem:[%s2048 + $0x10] sm:$0xff]
    %v2052 = vld [vmem:[%s2048 + $0x18] sm:$0xff]
    %v2053 = vld [vmem:[%s2048 + $0x20] sm:$0xff]
    %v2054 = vld [vmem:[%s2048 + $0x28] sm:$0xff]
    %v2055 = vld [vmem:[%s2048 + $0x30] sm:$0xff]
    %v2056 = vld [vmem:[%s2048 + $0x38] sm:$0xff]
    %v2057 = vld [vmem:[%s2048 + $0x40] sm:$0xff]
    %v2058 = vld [vmem:[%s2048 + $0x48] sm:$0xff]
    %v2059 = vld [vmem:[%s2048 + $0x50] sm:$0xff]
    %v2060 = vld [vmem:[%s2048 + $0x58] sm:$0xff]
    %v2061 = vld [vmem:[%s2048 + $0x60] sm:$0xff]
    %v2062 = vld [vmem:[%s2048 + $0x68] sm:$0xff]
    %v2063 = vld [vmem:[%s2048 + $0x70] sm:$0xff]
    %v2064 = vld [vmem:[%s2048 + $0x78] sm:$0xff]
    %v2065 = vld [vmem:[%s2048 + $0x80] sm:$0xff]
    %v2066 = vld [vmem:[%s2048 + $0x88] sm:$0xff]
    %v2067 = vld [vmem:[%s2048 + $0x90] sm:$0xff]
    %v2068 = vld [vmem:[%s2048 + $0x98] sm:$0xff]
    %v2069 = vld [vmem:[%s2048 + $0xa0] sm:$0xff]
    %v2070 = vld [vmem:[%s2048 + $0xa8] sm:$0xff]
    %v2071 = vld [vmem:[%s2048 + $0xb0] sm:$0xff]
    %v2072 = vld [vmem:[%s2048 + $0xb8] sm:$0xff]
    %v2073 = vld [vmem:[%s2048 + $0xc0] sm:$0xff]
    %v2074 = vld [vmem:[%s2048 + $0xc8] sm:$0xff]
    %v2075 = vld [vmem:[%s2048 + $0xd0] sm:$0xff]
    %v2076 = vld [vmem:[%s2048 + $0xd8] sm:$0xff]
    %v2077 = vld [vmem:[%s2048 + $0xe0] sm:$0xff]
    %v2078 = vld [vmem:[%s2048 + $0xe8] sm:$0xff]
    %v2079 = vld [vmem:[%s2048 + $0xf0] sm:$0xff]
    %v2080 = vld [vmem:[%s2048 + $0xf8] sm:$0xff]
    %v2081 = vld [vmem:[%s2048 + $0x100] sm:$0xff]
    %v2082 = vld [vmem:[%s2048 + $0x108] sm:$0xff]
    %v2083 = vld [vmem:[%s2048 + $0x110] sm:$0xff]
    %v2084 = vld [vmem:[%s2048 + $0x118] sm:$0xff]
    %v2085 = vld [vmem:[%s2048 + $0x120] sm:$0xff]
    %v2086 = vld [vmem:[%s2048 + $0x128] sm:$0xff]
    %v2087 = vld [vmem:[%s2048 + $0x130] sm:$0xff]
    %v2088 = vld [vmem:[%s2048 + $0x138] sm:$0xff]
    %v2089 = vld [vmem:[%s2048 + $0x140] sm:$0xff]
    %v2090 = vld [vmem:[%s2048 + $0x148] sm:$0xff]
    %v2091 = vld [vmem:[%s2048 + $0x150] sm:$0xff]
    %v2092 = vld [vmem:[%s2048 + $0x158] sm:$0xff]
    %v2093 = vld [vmem:[%s2048 + $0x160] sm:$0xff]
    %v2094 = vld [vmem:[%s2048 + $0x168] sm:$0xff]
    %v2095 = vld [vmem:[%s2048 + $0x170] sm:$0xff]
    %v2096 = vld [vmem:[%s2048 + $0x178] sm:$0xff]
    %v2097 = vld [vmem:[%s2048 + $0x180] sm:$0xff]
    %v2098 = vld [vmem:[%s2048 + $0x188] sm:$0xff]
    %v2099 = vld [vmem:[%s2048 + $0x190] sm:$0xff]
    %v2100 = vld [vmem:[%s2048 + $0x198] sm:$0xff]
    %v2101 = vld [vmem:[%s2048 + $0x1a0] sm:$0xff]
    %v2102 = vld [vmem:[%s2048 + $0x1a8] sm:$0xff]
    %v2103 = vld [vmem:[%s2048 + $0x1b0] sm:$0xff]
    %v2104 = vld [vmem:[%s2048 + $0x1b8] sm:$0xff]
    %vm2113 = vcmask 1045504
    %v2114 = vrot.slane %v2044, 2
    %v2115 = vrot.slane %v1926, 2
    %v2116 = vsel %vm2113, %v2114, %v2115
    %v2117 = vrot.slane %v2045, 2
    %v2118 = vrot.slane %v1927, 2
    %v2119 = vsel %vm2113, %v2117, %v2118
    %v2120 = vrot.slane %v1928, 2
    %v2121 = vsel %vm2113, %v2115, %v2120
    %v2122 = vrot.slane %v1929, 2
    %v2123 = vsel %vm2113, %v2118, %v2122
    %v2124 = vrot.slane %v2046, 2
    %v2125 = vsel %vm2113, %v2120, %v2124
    %v2126 = vrot.slane %v2047, 2
    %v2127 = vsel %vm2113, %v2122, %v2126
    %v2132 = vsel %vm1639, %v2119, 0
    %v2134 = vsel %vm1639, %v2123, 0
    %v2136 = vsel %vm1639, %v2127, 0
    %v2138 = vsel %vm1639, %v2126, 0
    %2140 = vmatprep.subr.mxu0 %v2050
    %2141 = vmatpush1.msra.mxu0 %v2049
    %2142 = vmatprep.subr.mxu0 %v2052
    %2143 = vmatpush1.msra.mxu0 %v2051
    %2144 = vmatprep.subr.mxu0 %v2054
    %2145 = vmatpush1.msra.mxu0 %v2053
    %2146 = vmatprep.subr.mxu0 %v2056
    %2147 = vmatpush1.msra.mxu0 %v2055
    %2148 = vmatprep.subr.mxu0 %v2058
    %2149 = vmatpush1.msra.mxu0 %v2057
    %2150 = vmatprep.subr.mxu0 %v2060
    %2151 = vmatpush1.msra.mxu0 %v2059
    %2152 = vmatprep.subr.mxu0 %v2062
    %2153 = vmatpush1.msra.mxu0 %v2061
    %2154 = vmatprep.subr.mxu0 %v2064
    %2155 = vmatpush1.msra.mxu0 %v2063
    %2156 = vmatprep.subr.mxu0 %v2066
    %2157 = vmatpush1.msra.mxu0 %v2065
    %2158 = vmatprep.subr.mxu0 %v2068
    %2159 = vmatpush1.msra.mxu0 %v2067
    %2160 = vmatprep.subr.mxu0 %v2070
    %2161 = vmatpush1.msra.mxu0 %v2069
    %2162 = vmatprep.subr.mxu0 %v2072
    %2163 = vmatpush1.msra.mxu0 %v2071
    %2164 = vmatprep.subr.mxu0 %v2074
    %2165 = vmatpush1.msra.mxu0 %v2073
    %2166 = vmatprep.subr.mxu0 %v2076
    %2167 = vmatpush1.msra.mxu0 %v2075
    %2168 = vmatprep.subr.mxu0 %v2078
    %2169 = vmatpush1.msra.mxu0 %v2077
    %2170 = vmatprep.subr.mxu0 %v2080
    %2171 = vmatpush1.msra.mxu0 %v2079
    %2172 = vmatprep.subr.mxu0 %v2082
    %2173 = vmatpush1.msra.mxu0 %v2081
    %2174 = vmatprep.subr.mxu0 %v2084
    %2175 = vmatpush1.msra.mxu0 %v2083
    %2176 = vmatprep.subr.mxu0 %v2086
    %2177 = vmatpush1.msra.mxu0 %v2085
    %2178 = vmatprep.subr.mxu0 %v2088
    %2179 = vmatpush1.msra.mxu0 %v2087
    %2180 = vmatprep.subr.mxu0 %v2090
    %2181 = vmatpush1.msra.mxu0 %v2089
    %2182 = vmatprep.subr.mxu0 %v2092
    %2183 = vmatpush1.msra.mxu0 %v2091
    %2184 = vmatprep.subr.mxu0 %v2094
    %2185 = vmatpush1.msra.mxu0 %v2093
    %2186 = vmatprep.subr.mxu0 %v2096
    %2187 = vmatpush1.msra.mxu0 %v2095
    %2188 = vmatprep.subr.mxu0 %v2098
    %2189 = vmatpush1.msra.mxu0 %v2097
    %2190 = vmatprep.subr.mxu0 %v2100
    %2191 = vmatpush1.msra.mxu0 %v2099
    %2192 = vmatprep.subr.mxu0 %v2102
    %2193 = vmatpush1.msra.mxu0 %v2101
    %2194 = vmatprep.subr.mxu0 %v2104
    %2195 = vmatpush1.msra.mxu0 %v2103
    %2196 = vmatprep.subr.mxu0 0.0
    %2197 = vmatpush1.msra.mxu0 0.0
    %2198 = vmatprep.subr.mxu0 0.0
    %2199 = vmatpush1.msra.mxu0 0.0
    %2200 = vmatprep.subr.mxu0 0.0
    %2201 = vmatpush1.msra.mxu0 0.0
    %2202 = vmatprep.subr.mxu0 0.0
    %2203 = vmatpush1.msra.mxu0 0.0
    %2204 = vmatprep.mubr.f32.mxu0 %v2132
    %2205 = vmatmul.mubr.f32.gmra.mrb[0].mxu0 %v2116
    %v2206 = vpop.f32.mrb[0].mxu0
    %v2207 = vadd.f32 0.0, %v2206
    %v2208 = vpop.f32.mrb[0].mxu0
    %v2209 = vadd.f32 0.0, %v2208
    %2210 = vmatprep.mubr.f32.mxu0 %v2134
    %2211 = vmatmul.mubr.f32.gmra.mrb[0].mxu0 %v2121
    %v2212 = vpop.f32.mrb[0].mxu0
    %v2213 = vadd.f32 0.0, %v2212
    %v2214 = vpop.f32.mrb[0].mxu0
    %v2215 = vadd.f32 0.0, %v2214
    %2216 = vmatprep.mubr.f32.mxu0 %v2136
    %2217 = vmatmul.mubr.f32.gmra.mrb[0].mxu0 %v2125
    %v2218 = vpop.f32.mrb[0].mxu0
    %v2219 = vadd.f32 0.0, %v2218
    %v2220 = vpop.f32.mrb[0].mxu0
    %v2221 = vadd.f32 0.0, %v2220
    %2222 = vmatprep.mubr.f32.mxu0 %v2138
    %2223 = vmatmul.mubr.f32.gmra.mrb[0].mxu0 %v2124
    %v2224 = vpop.f32.mrb[0].mxu0
    %v2225 = vadd.f32 0.0, %v2224
    %v2226 = vpop.f32.mrb[0].mxu0
    %v2227 = vadd.f32 0.0, %v2226
    %2228 = vdwg.mxu0
    %v2230 = vsel %vm1639, %v1925, 0
    %v2232 = vsel %vm1639, %v1927, 0
    %v2234 = vsel %vm1639, %v1929, 0
    %v2237 = vsel %vm1639, %v1931, 0
    %2239 = vmatprep.subr.mxu0 %v1933
    %2240 = vmatpush1.msra.mxu0 %v1932
    %2241 = vmatprep.subr.mxu0 %v1935
    %2242 = vmatpush1.msra.mxu0 %v1934
    %2243 = vmatprep.subr.mxu0 %v1937
    %2244 = vmatpush1.msra.mxu0 %v1936
    %2245 = vmatprep.subr.mxu0 %v1939
    %2246 = vmatpush1.msra.mxu0 %v1938
    %2247 = vmatprep.subr.mxu0 %v1941
    %2248 = vmatpush1.msra.mxu0 %v1940
    %2249 = vmatprep.subr.mxu0 %v1943
    %2250 = vmatpush1.msra.mxu0 %v1942
    %2251 = vmatprep.subr.mxu0 %v1945
    %2252 = vmatpush1.msra.mxu0 %v1944
    %2253 = vmatprep.subr.mxu0 %v1947
    %2254 = vmatpush1.msra.mxu0 %v1946
    %2255 = vmatprep.subr.mxu0 %v1949
    %2256 = vmatpush1.msra.mxu0 %v1948
    %2257 = vmatprep.subr.mxu0 %v1951
    %2258 = vmatpush1.msra.mxu0 %v1950
    %2259 = vmatprep.subr.mxu0 %v1953
    %2260 = vmatpush1.msra.mxu0 %v1952
    %2261 = vmatprep.subr.mxu0 %v1955
    %2262 = vmatpush1.msra.mxu0 %v1954
    %2263 = vmatprep.subr.mxu0 %v1957
    %2264 = vmatpush1.msra.mxu0 %v1956
    %2265 = vmatprep.subr.mxu0 %v1959
    %2266 = vmatpush1.msra.mxu0 %v1958
    %2267 = vmatprep.subr.mxu0 %v1961
    %2268 = vmatpush1.msra.mxu0 %v1960
    %2269 = vmatprep.subr.mxu0 %v1963
    %2270 = vmatpush1.msra.mxu0 %v1962
    %2271 = vmatprep.subr.mxu0 %v1965
    %2272 = vmatpush1.msra.mxu0 %v1964
    %2273 = vmatprep.subr.mxu0 %v1967
    %2274 = vmatpush1.msra.mxu0 %v1966
    %2275 = vmatprep.subr.mxu0 %v1969
    %2276 = vmatpush1.msra.mxu0 %v1968
    %2277 = vmatprep.subr.mxu0 %v1971
    %2278 = vmatpush1.msra.mxu0 %v1970
    %2279 = vmatprep.subr.mxu0 %v1973
    %2280 = vmatpush1.msra.mxu0 %v1972
    %2281 = vmatprep.subr.mxu0 %v1975
    %2282 = vmatpush1.msra.mxu0 %v1974
    %2283 = vmatprep.subr.mxu0 %v1977
    %2284 = vmatpush1.msra.mxu0 %v1976
    %2285 = vmatprep.subr.mxu0 %v1979
    %2286 = vmatpush1.msra.mxu0 %v1978
    %2287 = vmatprep.subr.mxu0 %v1981
    %2288 = vmatpush1.msra.mxu0 %v1980
    %2289 = vmatprep.subr.mxu0 %v1983
    %2290 = vmatpush1.msra.mxu0 %v1982
    %2291 = vmatprep.subr.mxu0 %v1985
    %2292 = vmatpush1.msra.mxu0 %v1984
    %2293 = vmatprep.subr.mxu0 %v1987
    %2294 = vmatpush1.msra.mxu0 %v1986
    %2295 = vmatprep.subr.mxu0 0.0
    %2296 = vmatpush1.msra.mxu0 0.0
    %2297 = vmatprep.subr.mxu0 0.0
    %2298 = vmatpush1.msra.mxu0 0.0
    %2299 = vmatprep.subr.mxu0 0.0
    %2300 = vmatpush1.msra.mxu0 0.0
    %2301 = vmatprep.subr.mxu0 0.0
    %2302 = vmatpush1.msra.mxu0 0.0
    %2303 = vmatprep.mubr.f32.mxu0 %v2230
    %2304 = vmatmul.mubr.f32.gmra.mrb[0].mxu0 %v1924
    %v2305 = vpop.f32.mrb[0].mxu0
    %v2306 = vadd.f32 %v2207, %v2305
    %v2307 = vpop.f32.mrb[0].mxu0
    %v2308 = vadd.f32 %v2209, %v2307
    %2309 = vmatprep.mubr.f32.mxu0 %v2232
    %2310 = vmatmul.mubr.f32.gmra.mrb[0].mxu0 %v1926
    %v2311 = vpop.f32.mrb[0].mxu0
    %v2312 = vadd.f32 %v2213, %v2311
    %v2313 = vpop.f32.mrb[0].mxu0
    %v2314 = vadd.f32 %v2215, %v2313
    %2315 = vmatprep.mubr.f32.mxu0 %v2234
    %2316 = vmatmul.mubr.f32.gmra.mrb[0].mxu0 %v1928
    %v2317 = vpop.f32.mrb[0].mxu0
    %v2318 = vadd.f32 %v2219, %v2317
    %v2319 = vpop.f32.mrb[0].mxu0
    %v2320 = vadd.f32 %v2221, %v2319
    %2321 = vmatprep.mubr.f32.mxu0 %v2237
    %2322 = vmatmul.mubr.f32.gmra.mrb[0].mxu0 %v1930
    %v2323 = vpop.f32.mrb[0].mxu0
    %v2324 = vadd.f32 %v2225, %v2323
    %v2325 = vpop.f32.mrb[0].mxu0
    %v2326 = vadd.f32 %v2227, %v2325
    %2327 = vdwg.mxu0
    %s2328 = scalar_lea.vmem [#allocation13], 448
    %v2329 = vld [vmem:[%s2328] sm:$0xff]
    %v2330 = vld [vmem:[%s2328 + $0x8] sm:$0xff]
    %v2331 = vld [vmem:[%s2328 + $0x10] sm:$0xff]
    %v2332 = vld [vmem:[%s2328 + $0x18] sm:$0xff]
    %v2333 = vld [vmem:[%s2328 + $0x20] sm:$0xff]
    %v2334 = vld [vmem:[%s2328 + $0x28] sm:$0xff]
    %v2335 = vld [vmem:[%s2328 + $0x30] sm:$0xff]
    %v2336 = vld [vmem:[%s2328 + $0x38] sm:$0xff]
    %v2337 = vld [vmem:[%s2328 + $0x40] sm:$0xff]
    %v2338 = vld [vmem:[%s2328 + $0x48] sm:$0xff]
    %v2339 = vld [vmem:[%s2328 + $0x50] sm:$0xff]
    %v2340 = vld [vmem:[%s2328 + $0x58] sm:$0xff]
    %v2341 = vld [vmem:[%s2328 + $0x60] sm:$0xff]
    %v2342 = vld [vmem:[%s2328 + $0x68] sm:$0xff]
    %v2343 = vld [vmem:[%s2328 + $0x70] sm:$0xff]
    %v2344 = vld [vmem:[%s2328 + $0x78] sm:$0xff]
    %v2345 = vld [vmem:[%s2328 + $0x80] sm:$0xff]
    %v2346 = vld [vmem:[%s2328 + $0x88] sm:$0xff]
    %v2347 = vld [vmem:[%s2328 + $0x90] sm:$0xff]
    %v2348 = vld [vmem:[%s2328 + $0x98] sm:$0xff]
    %v2349 = vld [vmem:[%s2328 + $0xa0] sm:$0xff]
    %v2350 = vld [vmem:[%s2328 + $0xa8] sm:$0xff]
    %v2351 = vld [vmem:[%s2328 + $0xb0] sm:$0xff]
    %v2352 = vld [vmem:[%s2328 + $0xb8] sm:$0xff]
    %v2353 = vld [vmem:[%s2328 + $0xc0] sm:$0xff]
    %v2354 = vld [vmem:[%s2328 + $0xc8] sm:$0xff]
    %v2355 = vld [vmem:[%s2328 + $0xd0] sm:$0xff]
    %v2356 = vld [vmem:[%s2328 + $0xd8] sm:$0xff]
    %v2357 = vld [vmem:[%s2328 + $0xe0] sm:$0xff]
    %v2358 = vld [vmem:[%s2328 + $0xe8] sm:$0xff]
    %v2359 = vld [vmem:[%s2328 + $0xf0] sm:$0xff]
    %v2360 = vld [vmem:[%s2328 + $0xf8] sm:$0xff]
    %v2361 = vld [vmem:[%s2328 + $0x100] sm:$0xff]
    %v2362 = vld [vmem:[%s2328 + $0x108] sm:$0xff]
    %v2363 = vld [vmem:[%s2328 + $0x110] sm:$0xff]
    %v2364 = vld [vmem:[%s2328 + $0x118] sm:$0xff]
    %v2365 = vld [vmem:[%s2328 + $0x120] sm:$0xff]
    %v2366 = vld [vmem:[%s2328 + $0x128] sm:$0xff]
    %v2367 = vld [vmem:[%s2328 + $0x130] sm:$0xff]
    %v2368 = vld [vmem:[%s2328 + $0x138] sm:$0xff]
    %v2369 = vld [vmem:[%s2328 + $0x140] sm:$0xff]
    %v2370 = vld [vmem:[%s2328 + $0x148] sm:$0xff]
    %v2371 = vld [vmem:[%s2328 + $0x150] sm:$0xff]
    %v2372 = vld [vmem:[%s2328 + $0x158] sm:$0xff]
    %v2373 = vld [vmem:[%s2328 + $0x160] sm:$0xff]
    %v2374 = vld [vmem:[%s2328 + $0x168] sm:$0xff]
    %v2375 = vld [vmem:[%s2328 + $0x170] sm:$0xff]
    %v2376 = vld [vmem:[%s2328 + $0x178] sm:$0xff]
    %v2377 = vld [vmem:[%s2328 + $0x180] sm:$0xff]
    %v2378 = vld [vmem:[%s2328 + $0x188] sm:$0xff]
    %v2379 = vld [vmem:[%s2328 + $0x190] sm:$0xff]
    %v2380 = vld [vmem:[%s2328 + $0x198] sm:$0xff]
    %v2381 = vld [vmem:[%s2328 + $0x1a0] sm:$0xff]
    %v2382 = vld [vmem:[%s2328 + $0x1a8] sm:$0xff]
    %v2383 = vld [vmem:[%s2328 + $0x1b0] sm:$0xff]
    %v2384 = vld [vmem:[%s2328 + $0x1b8] sm:$0xff]
    %2385 = vmatprep.subr.mxu0 %v2330
    %2386 = vmatpush1.msra.mxu0 %v2329
    %2387 = vmatprep.subr.mxu0 %v2332
    %2388 = vmatpush1.msra.mxu0 %v2331
    %2389 = vmatprep.subr.mxu0 %v2334
    %2390 = vmatpush1.msra.mxu0 %v2333
    %2391 = vmatprep.subr.mxu0 %v2336
    %2392 = vmatpush1.msra.mxu0 %v2335
    %2393 = vmatprep.subr.mxu0 %v2338
    %2394 = vmatpush1.msra.mxu0 %v2337
    %2395 = vmatprep.subr.mxu0 %v2340
    %2396 = vmatpush1.msra.mxu0 %v2339
    %2397 = vmatprep.subr.mxu0 %v2342
    %2398 = vmatpush1.msra.mxu0 %v2341
    %2399 = vmatprep.subr.mxu0 %v2344
    %2400 = vmatpush1.msra.mxu0 %v2343
    %2401 = vmatprep.subr.mxu0 %v2346
    %2402 = vmatpush1.msra.mxu0 %v2345
    %2403 = vmatprep.subr.mxu0 %v2348
    %2404 = vmatpush1.msra.mxu0 %v2347
    %2405 = vmatprep.subr.mxu0 %v2350
    %2406 = vmatpush1.msra.mxu0 %v2349
    %2407 = vmatprep.subr.mxu0 %v2352
    %2408 = vmatpush1.msra.mxu0 %v2351
    %2409 = vmatprep.subr.mxu0 %v2354
    %2410 = vmatpush1.msra.mxu0 %v2353
    %2411 = vmatprep.subr.mxu0 %v2356
    %2412 = vmatpush1.msra.mxu0 %v2355
    %2413 = vmatprep.subr.mxu0 %v2358
    %2414 = vmatpush1.msra.mxu0 %v2357
    %2415 = vmatprep.subr.mxu0 %v2360
    %2416 = vmatpush1.msra.mxu0 %v2359
    %2417 = vmatprep.subr.mxu0 %v2362
    %2418 = vmatpush1.msra.mxu0 %v2361
    %2419 = vmatprep.subr.mxu0 %v2364
    %2420 = vmatpush1.msra.mxu0 %v2363
    %2421 = vmatprep.subr.mxu0 %v2366
    %2422 = vmatpush1.msra.mxu0 %v2365
    %2423 = vmatprep.subr.mxu0 %v2368
    %2424 = vmatpush1.msra.mxu0 %v2367
    %2425 = vmatprep.subr.mxu0 %v2370
    %2426 = vmatpush1.msra.mxu0 %v2369
    %2427 = vmatprep.subr.mxu0 %v2372
    %2428 = vmatpush1.msra.mxu0 %v2371
    %2429 = vmatprep.subr.mxu0 %v2374
    %2430 = vmatpush1.msra.mxu0 %v2373
    %2431 = vmatprep.subr.mxu0 %v2376
    %2432 = vmatpush1.msra.mxu0 %v2375
    %2433 = vmatprep.subr.mxu0 %v2378
    %2434 = vmatpush1.msra.mxu0 %v2377
    %2435 = vmatprep.subr.mxu0 %v2380
    %2436 = vmatpush1.msra.mxu0 %v2379
    %2437 = vmatprep.subr.mxu0 %v2382
    %2438 = vmatpush1.msra.mxu0 %v2381
    %2439 = vmatprep.subr.mxu0 %v2384
    %2440 = vmatpush1.msra.mxu0 %v2383
    %2441 = vmatprep.subr.mxu0 0.0
    %2442 = vmatpush1.msra.mxu0 0.0
    %2443 = vmatprep.subr.mxu0 0.0
    %2444 = vmatpush1.msra.mxu0 0.0
    %2445 = vmatprep.subr.mxu0 0.0
    %2446 = vmatpush1.msra.mxu0 0.0
    %2447 = vmatprep.subr.mxu0 0.0
    %2448 = vmatpush1.msra.mxu0 0.0
    %2449 = vmatprep.mubr.f32.mxu0 %v2132
    %2450 = vmatmul.mubr.f32.gmra.mrb[0].mxu0 %v2116
    %v2451 = vpop.f32.mrb[0].mxu0
    %v2452 = vadd.f32 0.0, %v2451
    %v2453 = vpop.f32.mrb[0].mxu0
    %v2454 = vadd.f32 0.0, %v2453
    %2455 = vmatprep.mubr.f32.mxu0 %v2134
    %2456 = vmatmul.mubr.f32.gmra.mrb[0].mxu0 %v2121
    %v2457 = vpop.f32.mrb[0].mxu0
    %v2458 = vadd.f32 0.0, %v2457
    %v2459 = vpop.f32.mrb[0].mxu0
    %v2460 = vadd.f32 0.0, %v2459
    %2461 = vmatprep.mubr.f32.mxu0 %v2136
    %2462 = vmatmul.mubr.f32.gmra.mrb[0].mxu0 %v2125
    %v2463 = vpop.f32.mrb[0].mxu0
    %v2464 = vadd.f32 0.0, %v2463
    %v2465 = vpop.f32.mrb[0].mxu0
    %v2466 = vadd.f32 0.0, %v2465
    %2467 = vmatprep.mubr.f32.mxu0 %v2138
    %2468 = vmatmul.mubr.f32.gmra.mrb[0].mxu0 %v2124
    %v2469 = vpop.f32.mrb[0].mxu0
    %v2470 = vadd.f32 0.0, %v2469
    %v2471 = vpop.f32.mrb[0].mxu0
    %v2472 = vadd.f32 0.0, %v2471
    %2473 = vdwg.mxu0
    %2474 = vmatprep.subr.mxu0 %v1989
    %2475 = vmatpush1.msra.mxu0 %v1988
    %2476 = vmatprep.subr.mxu0 %v1991
    %2477 = vmatpush1.msra.mxu0 %v1990
    %2478 = vmatprep.subr.mxu0 %v1993
    %2479 = vmatpush1.msra.mxu0 %v1992
    %2480 = vmatprep.subr.mxu0 %v1995
    %2481 = vmatpush1.msra.mxu0 %v1994
    %2482 = vmatprep.subr.mxu0 %v1997
    %2483 = vmatpush1.msra.mxu0 %v1996
    %2484 = vmatprep.subr.mxu0 %v1999
    %2485 = vmatpush1.msra.mxu0 %v1998
    %2486 = vmatprep.subr.mxu0 %v2001
    %2487 = vmatpush1.msra.mxu0 %v2000
    %2488 = vmatprep.subr.mxu0 %v2003
    %2489 = vmatpush1.msra.mxu0 %v2002
    %2490 = vmatprep.subr.mxu0 %v2005
    %2491 = vmatpush1.msra.mxu0 %v2004
    %2492 = vmatprep.subr.mxu0 %v2007
    %2493 = vmatpush1.msra.mxu0 %v2006
    %2494 = vmatprep.subr.mxu0 %v2009
    %2495 = vmatpush1.msra.mxu0 %v2008
    %2496 = vmatprep.subr.mxu0 %v2011
    %2497 = vmatpush1.msra.mxu0 %v2010
    %2498 = vmatprep.subr.mxu0 %v2013
    %2499 = vmatpush1.msra.mxu0 %v2012
    %2500 = vmatprep.subr.mxu0 %v2015
    %2501 = vmatpush1.msra.mxu0 %v2014
    %2502 = vmatprep.subr.mxu0 %v2017
    %2503 = vmatpush1.msra.mxu0 %v2016
    %2504 = vmatprep.subr.mxu0 %v2019
    %2505 = vmatpush1.msra.mxu0 %v2018
    %2506 = vmatprep.subr.mxu0 %v2021
    %2507 = vmatpush1.msra.mxu0 %v2020
    %2508 = vmatprep.subr.mxu0 %v2023
    %2509 = vmatpush1.msra.mxu0 %v2022
    %2510 = vmatprep.subr.mxu0 %v2025
    %2511 = vmatpush1.msra.mxu0 %v2024
    %2512 = vmatprep.subr.mxu0 %v2027
    %2513 = vmatpush1.msra.mxu0 %v2026
    %2514 = vmatprep.subr.mxu0 %v2029
    %2515 = vmatpush1.msra.mxu0 %v2028
    %2516 = vmatprep.subr.mxu0 %v2031
    %2517 = vmatpush1.msra.mxu0 %v2030
    %2518 = vmatprep.subr.mxu0 %v2033
    %2519 = vmatpush1.msra.mxu0 %v2032
    %2520 = vmatprep.subr.mxu0 %v2035
    %2521 = vmatpush1.msra.mxu0 %v2034
    %2522 = vmatprep.subr.mxu0 %v2037
    %2523 = vmatpush1.msra.mxu0 %v2036
    %2524 = vmatprep.subr.mxu0 %v2039
    %2525 = vmatpush1.msra.mxu0 %v2038
    %2526 = vmatprep.subr.mxu0 %v2041
    %2527 = vmatpush1.msra.mxu0 %v2040
    %2528 = vmatprep.subr.mxu0 %v2043
    %2529 = vmatpush1.msra.mxu0 %v2042
    %2530 = vmatprep.subr.mxu0 0.0
    %2531 = vmatpush1.msra.mxu0 0.0
    %2532 = vmatprep.subr.mxu0 0.0
    %2533 = vmatpush1.msra.mxu0 0.0
    %2534 = vmatprep.subr.mxu0 0.0
    %2535 = vmatpush1.msra.mxu0 0.0
    %2536 = vmatprep.subr.mxu0 0.0
    %2537 = vmatpush1.msra.mxu0 0.0
    %2538 = vmatprep.mubr.f32.mxu0 %v2230
    %2539 = vmatmul.mubr.f32.gmra.mrb[0].mxu0 %v1924
    %v2540 = vpop.f32.mrb[0].mxu0
    %v2541 = vadd.f32 %v2452, %v2540
    %v2542 = vpop.f32.mrb[0].mxu0
    %v2543 = vadd.f32 %v2454, %v2542
    %2544 = vmatprep.mubr.f32.mxu0 %v2232
    %2545 = vmatmul.mubr.f32.gmra.mrb[0].mxu0 %v1926
    %v2546 = vpop.f32.mrb[0].mxu0
    %v2547 = vadd.f32 %v2458, %v2546
    %v2548 = vpop.f32.mrb[0].mxu0
    %v2549 = vadd.f32 %v2460, %v2548
    %2550 = vmatprep.mubr.f32.mxu0 %v2234
    %2551 = vmatmul.mubr.f32.gmra.mrb[0].mxu0 %v1928
    %v2552 = vpop.f32.mrb[0].mxu0
    %v2553 = vadd.f32 %v2464, %v2552
    %v2554 = vpop.f32.mrb[0].mxu0
    %v2555 = vadd.f32 %v2466, %v2554
    %2556 = vmatprep.mubr.f32.mxu0 %v2237
    %2557 = vmatmul.mubr.f32.gmra.mrb[0].mxu0 %v1930
    %v2558 = vpop.f32.mrb[0].mxu0
    %v2559 = vadd.f32 %v2470, %v2558
    %v2560 = vpop.f32.mrb[0].mxu0
    %v2561 = vadd.f32 %v2472, %v2560
    %2562 = vdwg.mxu0
    %v2563 = vld [vmem:[#allocation3] sm:$0xf0]
    %v2564 = vld [vmem:[#allocation3 + $0x8] sm:$0xf0]
    %v2565 = vld [vmem:[#allocation3 + $0x30] sm:$0xff]
    %v2566 = vld [vmem:[#allocation3 + $0x38] sm:$0xff]
    %s2567 = scalar_lea.vmem [#allocation11], 896
    %v2568 = vld [vmem:[%s2567] sm:$0xff]
    %v2569 = vld [vmem:[%s2567 + $0x8] sm:$0xff]
    %v2570 = vld [vmem:[%s2567 + $0x10] sm:$0xff]
    %v2571 = vld [vmem:[%s2567 + $0x18] sm:$0xff]
    %v2572 = vld [vmem:[%s2567 + $0x20] sm:$0xff]
    %v2573 = vld [vmem:[%s2567 + $0x28] sm:$0xff]
    %v2574 = vld [vmem:[%s2567 + $0x30] sm:$0xff]
    %v2575 = vld [vmem:[%s2567 + $0x38] sm:$0xff]
    %v2576 = vld [vmem:[%s2567 + $0x40] sm:$0xff]
    %v2577 = vld [vmem:[%s2567 + $0x48] sm:$0xff]
    %v2578 = vld [vmem:[%s2567 + $0x50] sm:$0xff]
    %v2579 = vld [vmem:[%s2567 + $0x58] sm:$0xff]
    %v2580 = vld [vmem:[%s2567 + $0x60] sm:$0xff]
    %v2581 = vld [vmem:[%s2567 + $0x68] sm:$0xff]
    %v2582 = vld [vmem:[%s2567 + $0x70] sm:$0xff]
    %v2583 = vld [vmem:[%s2567 + $0x78] sm:$0xff]
    %v2584 = vld [vmem:[%s2567 + $0x80] sm:$0xff]
    %v2585 = vld [vmem:[%s2567 + $0x88] sm:$0xff]
    %v2586 = vld [vmem:[%s2567 + $0x90] sm:$0xff]
    %v2587 = vld [vmem:[%s2567 + $0x98] sm:$0xff]
    %v2588 = vld [vmem:[%s2567 + $0xa0] sm:$0xff]
    %v2589 = vld [vmem:[%s2567 + $0xa8] sm:$0xff]
    %v2590 = vld [vmem:[%s2567 + $0xb0] sm:$0xff]
    %v2591 = vld [vmem:[%s2567 + $0xb8] sm:$0xff]
    %v2592 = vld [vmem:[%s2567 + $0xc0] sm:$0xff]
    %v2593 = vld [vmem:[%s2567 + $0xc8] sm:$0xff]
    %v2594 = vld [vmem:[%s2567 + $0xd0] sm:$0xff]
    %v2595 = vld [vmem:[%s2567 + $0xd8] sm:$0xff]
    %v2596 = vld [vmem:[%s2567 + $0xe0] sm:$0xff]
    %v2597 = vld [vmem:[%s2567 + $0xe8] sm:$0xff]
    %v2598 = vld [vmem:[%s2567 + $0xf0] sm:$0xff]
    %v2599 = vld [vmem:[%s2567 + $0xf8] sm:$0xff]
    %v2600 = vld [vmem:[%s2567 + $0x100] sm:$0xff]
    %v2601 = vld [vmem:[%s2567 + $0x108] sm:$0xff]
    %v2602 = vld [vmem:[%s2567 + $0x110] sm:$0xff]
    %v2603 = vld [vmem:[%s2567 + $0x118] sm:$0xff]
    %v2604 = vld [vmem:[%s2567 + $0x120] sm:$0xff]
    %v2605 = vld [vmem:[%s2567 + $0x128] sm:$0xff]
    %v2606 = vld [vmem:[%s2567 + $0x130] sm:$0xff]
    %v2607 = vld [vmem:[%s2567 + $0x138] sm:$0xff]
    %v2608 = vld [vmem:[%s2567 + $0x140] sm:$0xff]
    %v2609 = vld [vmem:[%s2567 + $0x148] sm:$0xff]
    %v2610 = vld [vmem:[%s2567 + $0x150] sm:$0xff]
    %v2611 = vld [vmem:[%s2567 + $0x158] sm:$0xff]
    %v2612 = vld [vmem:[%s2567 + $0x160] sm:$0xff]
    %v2613 = vld [vmem:[%s2567 + $0x168] sm:$0xff]
    %v2614 = vld [vmem:[%s2567 + $0x170] sm:$0xff]
    %v2615 = vld [vmem:[%s2567 + $0x178] sm:$0xff]
    %v2616 = vld [vmem:[%s2567 + $0x180] sm:$0xff]
    %v2617 = vld [vmem:[%s2567 + $0x188] sm:$0xff]
    %v2618 = vld [vmem:[%s2567 + $0x190] sm:$0xff]
    %v2619 = vld [vmem:[%s2567 + $0x198] sm:$0xff]
    %v2620 = vld [vmem:[%s2567 + $0x1a0] sm:$0xff]
    %v2621 = vld [vmem:[%s2567 + $0x1a8] sm:$0xff]
    %v2622 = vld [vmem:[%s2567 + $0x1b0] sm:$0xff]
    %v2623 = vld [vmem:[%s2567 + $0x1b8] sm:$0xff]
    %v2628 = vrot.slane %v2563, 4
    %v2629 = vrot.slane %v1926, 4
    %v2630 = vsel %vm198, %v2628, %v2629
    %v2631 = vrot.slane %v2564, 4
    %v2632 = vrot.slane %v1927, 4
    %v2633 = vsel %vm198, %v2631, %v2632
    %v2634 = vrot.slane %v1928, 4
    %v2635 = vsel %vm198, %v2629, %v2634
    %v2636 = vrot.slane %v1929, 4
    %v2637 = vsel %vm198, %v2632, %v2636
    %v2638 = vrot.slane %v2565, 4
    %v2639 = vsel %vm198, %v2634, %v2638
    %v2640 = vrot.slane %v2566, 4
    %v2641 = vsel %vm198, %v2636, %v2640
    %v2646 = vsel %vm1639, %v2633, 0
    %v2648 = vsel %vm1639, %v2637, 0
    %v2650 = vsel %vm1639, %v2641, 0
    %v2652 = vsel %vm1639, %v2640, 0
    %2654 = vmatprep.subr.mxu0 %v2569
    %2655 = vmatpush1.msra.mxu0 %v2568
    %2656 = vmatprep.subr.mxu0 %v2571
    %2657 = vmatpush1.msra.mxu0 %v2570
    %2658 = vmatprep.subr.mxu0 %v2573
    %2659 = vmatpush1.msra.mxu0 %v2572
    %2660 = vmatprep.subr.mxu0 %v2575
    %2661 = vmatpush1.msra.mxu0 %v2574
    %2662 = vmatprep.subr.mxu0 %v2577
    %2663 = vmatpush1.msra.mxu0 %v2576
    %2664 = vmatprep.subr.mxu0 %v2579
    %2665 = vmatpush1.msra.mxu0 %v2578
    %2666 = vmatprep.subr.mxu0 %v2581
    %2667 = vmatpush1.msra.mxu0 %v2580
    %2668 = vmatprep.subr.mxu0 %v2583
    %2669 = vmatpush1.msra.mxu0 %v2582
    %2670 = vmatprep.subr.mxu0 %v2585
    %2671 = vmatpush1.msra.mxu0 %v2584
    %2672 = vmatprep.subr.mxu0 %v2587
    %2673 = vmatpush1.msra.mxu0 %v2586
    %2674 = vmatprep.subr.mxu0 %v2589
    %2675 = vmatpush1.msra.mxu0 %v2588
    %2676 = vmatprep.subr.mxu0 %v2591
    %2677 = vmatpush1.msra.mxu0 %v2590
    %2678 = vmatprep.subr.mxu0 %v2593
    %2679 = vmatpush1.msra.mxu0 %v2592
    %2680 = vmatprep.subr.mxu0 %v2595
    %2681 = vmatpush1.msra.mxu0 %v2594
    %2682 = vmatprep.subr.mxu0 %v2597
    %2683 = vmatpush1.msra.mxu0 %v2596
    %2684 = vmatprep.subr.mxu0 %v2599
    %2685 = vmatpush1.msra.mxu0 %v2598
    %2686 = vmatprep.subr.mxu0 %v2601
    %2687 = vmatpush1.msra.mxu0 %v2600
    %2688 = vmatprep.subr.mxu0 %v2603
    %2689 = vmatpush1.msra.mxu0 %v2602
    %2690 = vmatprep.subr.mxu0 %v2605
    %2691 = vmatpush1.msra.mxu0 %v2604
    %2692 = vmatprep.subr.mxu0 %v2607
    %2693 = vmatpush1.msra.mxu0 %v2606
    %2694 = vmatprep.subr.mxu0 %v2609
    %2695 = vmatpush1.msra.mxu0 %v2608
    %2696 = vmatprep.subr.mxu0 %v2611
    %2697 = vmatpush1.msra.mxu0 %v2610
    %2698 = vmatprep.subr.mxu0 %v2613
    %2699 = vmatpush1.msra.mxu0 %v2612
    %2700 = vmatprep.subr.mxu0 %v2615
    %2701 = vmatpush1.msra.mxu0 %v2614
    %2702 = vmatprep.subr.mxu0 %v2617
    %2703 = vmatpush1.msra.mxu0 %v2616
    %2704 = vmatprep.subr.mxu0 %v2619
    %2705 = vmatpush1.msra.mxu0 %v2618
    %2706 = vmatprep.subr.mxu0 %v2621
    %2707 = vmatpush1.msra.mxu0 %v2620
    %2708 = vmatprep.subr.mxu0 %v2623
    %2709 = vmatpush1.msra.mxu0 %v2622
    %2710 = vmatprep.subr.mxu0 0.0
    %2711 = vmatpush1.msra.mxu0 0.0
    %2712 = vmatprep.subr.mxu0 0.0
    %2713 = vmatpush1.msra.mxu0 0.0
    %2714 = vmatprep.subr.mxu0 0.0
    %2715 = vmatpush1.msra.mxu0 0.0
    %2716 = vmatprep.subr.mxu0 0.0
    %2717 = vmatpush1.msra.mxu0 0.0
    %2718 = vmatprep.mubr.f32.mxu0 %v2646
    %2719 = vmatmul.mubr.f32.gmra.mrb[0].mxu0 %v2630
    %v2720 = vpop.f32.mrb[0].mxu0
    %v2721 = vadd.f32 0.0, %v2720
    %v2722 = vpop.f32.mrb[0].mxu0
    %v2723 = vadd.f32 0.0, %v2722
    %2724 = vmatprep.mubr.f32.mxu0 %v2648
    %2725 = vmatmul.mubr.f32.gmra.mrb[0].mxu0 %v2635
    %v2726 = vpop.f32.mrb[0].mxu0
    %v2727 = vadd.f32 0.0, %v2726
    %v2728 = vpop.f32.mrb[0].mxu0
    %v2729 = vadd.f32 0.0, %v2728
    %2730 = vmatprep.mubr.f32.mxu0 %v2650
    %2731 = vmatmul.mubr.f32.gmra.mrb[0].mxu0 %v2639
    %v2732 = vpop.f32.mrb[0].mxu0
    %v2733 = vadd.f32 0.0, %v2732
    %v2734 = vpop.f32.mrb[0].mxu0
    %v2735 = vadd.f32 0.0, %v2734
    %2736 = vmatprep.mubr.f32.mxu0 %v2652
    %2737 = vmatmul.mubr.f32.gmra.mrb[0].mxu0 %v2638
    %v2738 = vpop.f32.mrb[0].mxu0
    %v2739 = vadd.f32 0.0, %v2738
    %v2740 = vpop.f32.mrb[0].mxu0
    %v2741 = vadd.f32 0.0, %v2740
    %2742 = vdwg.mxu0
    %v2743 = vadd.f32 %v2306, %v2721
    %v2744 = vadd.f32 %v2308, %v2723
    %v2745 = vadd.f32 %v2312, %v2727
    %v2746 = vadd.f32 %v2314, %v2729
    %v2747 = vadd.f32 %v2318, %v2733
    %v2748 = vadd.f32 %v2320, %v2735
    %v2749 = vadd.f32 %v2324, %v2739
    %v2750 = vadd.f32 %v2326, %v2741
    %s2751 = scalar_lea.vmem [#allocation13], 896
    %v2752 = vld [vmem:[%s2751] sm:$0xff]
    %v2753 = vld [vmem:[%s2751 + $0x8] sm:$0xff]
    %v2754 = vld [vmem:[%s2751 + $0x10] sm:$0xff]
    %v2755 = vld [vmem:[%s2751 + $0x18] sm:$0xff]
    %v2756 = vld [vmem:[%s2751 + $0x20] sm:$0xff]
    %v2757 = vld [vmem:[%s2751 + $0x28] sm:$0xff]
    %v2758 = vld [vmem:[%s2751 + $0x30] sm:$0xff]
    %v2759 = vld [vmem:[%s2751 + $0x38] sm:$0xff]
    %v2760 = vld [vmem:[%s2751 + $0x40] sm:$0xff]
    %v2761 = vld [vmem:[%s2751 + $0x48] sm:$0xff]
    %v2762 = vld [vmem:[%s2751 + $0x50] sm:$0xff]
    %v2763 = vld [vmem:[%s2751 + $0x58] sm:$0xff]
    %v2764 = vld [vmem:[%s2751 + $0x60] sm:$0xff]
    %v2765 = vld [vmem:[%s2751 + $0x68] sm:$0xff]
    %v2766 = vld [vmem:[%s2751 + $0x70] sm:$0xff]
    %v2767 = vld [vmem:[%s2751 + $0x78] sm:$0xff]
    %v2768 = vld [vmem:[%s2751 + $0x80] sm:$0xff]
    %v2769 = vld [vmem:[%s2751 + $0x88] sm:$0xff]
    %v2770 = vld [vmem:[%s2751 + $0x90] sm:$0xff]
    %v2771 = vld [vmem:[%s2751 + $0x98] sm:$0xff]
    %v2772 = vld [vmem:[%s2751 + $0xa0] sm:$0xff]
    %v2773 = vld [vmem:[%s2751 + $0xa8] sm:$0xff]
    %v2774 = vld [vmem:[%s2751 + $0xb0] sm:$0xff]
    %v2775 = vld [vmem:[%s2751 + $0xb8] sm:$0xff]
    %v2776 = vld [vmem:[%s2751 + $0xc0] sm:$0xff]
    %v2777 = vld [vmem:[%s2751 + $0xc8] sm:$0xff]
    %v2778 = vld [vmem:[%s2751 + $0xd0] sm:$0xff]
    %v2779 = vld [vmem:[%s2751 + $0xd8] sm:$0xff]
    %v2780 = vld [vmem:[%s2751 + $0xe0] sm:$0xff]
    %v2781 = vld [vmem:[%s2751 + $0xe8] sm:$0xff]
    %v2782 = vld [vmem:[%s2751 + $0xf0] sm:$0xff]
    %v2783 = vld [vmem:[%s2751 + $0xf8] sm:$0xff]
    %v2784 = vld [vmem:[%s2751 + $0x100] sm:$0xff]
    %v2785 = vld [vmem:[%s2751 + $0x108] sm:$0xff]
    %v2786 = vld [vmem:[%s2751 + $0x110] sm:$0xff]
    %v2787 = vld [vmem:[%s2751 + $0x118] sm:$0xff]
    %v2788 = vld [vmem:[%s2751 + $0x120] sm:$0xff]
    %v2789 = vld [vmem:[%s2751 + $0x128] sm:$0xff]
    %v2790 = vld [vmem:[%s2751 + $0x130] sm:$0xff]
    %v2791 = vld [vmem:[%s2751 + $0x138] sm:$0xff]
    %v2792 = vld [vmem:[%s2751 + $0x140] sm:$0xff]
    %v2793 = vld [vmem:[%s2751 + $0x148] sm:$0xff]
    %v2794 = vld [vmem:[%s2751 + $0x150] sm:$0xff]
    %v2795 = vld [vmem:[%s2751 + $0x158] sm:$0xff]
    %v2796 = vld [vmem:[%s2751 + $0x160] sm:$0xff]
    %v2797 = vld [vmem:[%s2751 + $0x168] sm:$0xff]
    %v2798 = vld [vmem:[%s2751 + $0x170] sm:$0xff]
    %v2799 = vld [vmem:[%s2751 + $0x178] sm:$0xff]
    %v2800 = vld [vmem:[%s2751 + $0x180] sm:$0xff]
    %v2801 = vld [vmem:[%s2751 + $0x188] sm:$0xff]
    %v2802 = vld [vmem:[%s2751 + $0x190] sm:$0xff]
    %v2803 = vld [vmem:[%s2751 + $0x198] sm:$0xff]
    %v2804 = vld [vmem:[%s2751 + $0x1a0] sm:$0xff]
    %v2805 = vld [vmem:[%s2751 + $0x1a8] sm:$0xff]
    %v2806 = vld [vmem:[%s2751 + $0x1b0] sm:$0xff]
    %v2807 = vld [vmem:[%s2751 + $0x1b8] sm:$0xff]
    %2808 = vmatprep.subr.mxu0 %v2753
    %2809 = vmatpush1.msra.mxu0 %v2752
    %2810 = vmatprep.subr.mxu0 %v2755
    %2811 = vmatpush1.msra.mxu0 %v2754
    %2812 = vmatprep.subr.mxu0 %v2757
    %2813 = vmatpush1.msra.mxu0 %v2756
    %2814 = vmatprep.subr.mxu0 %v2759
    %2815 = vmatpush1.msra.mxu0 %v2758
    %2816 = vmatprep.subr.mxu0 %v2761
    %2817 = vmatpush1.msra.mxu0 %v2760
    %2818 = vmatprep.subr.mxu0 %v2763
    %2819 = vmatpush1.msra.mxu0 %v2762
    %2820 = vmatprep.subr.mxu0 %v2765
    %2821 = vmatpush1.msra.mxu0 %v2764
    %2822 = vmatprep.subr.mxu0 %v2767
    %2823 = vmatpush1.msra.mxu0 %v2766
    %2824 = vmatprep.subr.mxu0 %v2769
    %2825 = vmatpush1.msra.mxu0 %v2768
    %2826 = vmatprep.subr.mxu0 %v2771
    %2827 = vmatpush1.msra.mxu0 %v2770
    %2828 = vmatprep.subr.mxu0 %v2773
    %2829 = vmatpush1.msra.mxu0 %v2772
    %2830 = vmatprep.subr.mxu0 %v2775
    %2831 = vmatpush1.msra.mxu0 %v2774
    %2832 = vmatprep.subr.mxu0 %v2777
    %2833 = vmatpush1.msra.mxu0 %v2776
    %2834 = vmatprep.subr.mxu0 %v2779
    %2835 = vmatpush1.msra.mxu0 %v2778
    %2836 = vmatprep.subr.mxu0 %v2781
    %2837 = vmatpush1.msra.mxu0 %v2780
    %2838 = vmatprep.subr.mxu0 %v2783
    %2839 = vmatpush1.msra.mxu0 %v2782
    %2840 = vmatprep.subr.mxu0 %v2785
    %2841 = vmatpush1.msra.mxu0 %v2784
    %2842 = vmatprep.subr.mxu0 %v2787
    %2843 = vmatpush1.msra.mxu0 %v2786
    %2844 = vmatprep.subr.mxu0 %v2789
    %2845 = vmatpush1.msra.mxu0 %v2788
    %2846 = vmatprep.subr.mxu0 %v2791
    %2847 = vmatpush1.msra.mxu0 %v2790
    %2848 = vmatprep.subr.mxu0 %v2793
    %2849 = vmatpush1.msra.mxu0 %v2792
    %2850 = vmatprep.subr.mxu0 %v2795
    %2851 = vmatpush1.msra.mxu0 %v2794
    %2852 = vmatprep.subr.mxu0 %v2797
    %2853 = vmatpush1.msra.mxu0 %v2796
    %2854 = vmatprep.subr.mxu0 %v2799
    %2855 = vmatpush1.msra.mxu0 %v2798
    %2856 = vmatprep.subr.mxu0 %v2801
    %2857 = vmatpush1.msra.mxu0 %v2800
    %2858 = vmatprep.subr.mxu0 %v2803
    %2859 = vmatpush1.msra.mxu0 %v2802
    %2860 = vmatprep.subr.mxu0 %v2805
    %2861 = vmatpush1.msra.mxu0 %v2804
    %2862 = vmatprep.subr.mxu0 %v2807
    %2863 = vmatpush1.msra.mxu0 %v2806
    %2864 = vmatprep.subr.mxu0 0.0
    %2865 = vmatpush1.msra.mxu0 0.0
    %2866 = vmatprep.subr.mxu0 0.0
    %2867 = vmatpush1.msra.mxu0 0.0
    %2868 = vmatprep.subr.mxu0 0.0
    %2869 = vmatpush1.msra.mxu0 0.0
    %2870 = vmatprep.subr.mxu0 0.0
    %2871 = vmatpush1.msra.mxu0 0.0
    %2872 = vmatprep.mubr.f32.mxu0 %v2646
    %2873 = vmatmul.mubr.f32.gmra.mrb[0].mxu0 %v2630
    %v2874 = vpop.f32.mrb[0].mxu0
    %v2875 = vadd.f32 0.0, %v2874
    %v2876 = vpop.f32.mrb[0].mxu0
    %v2877 = vadd.f32 0.0, %v2876
    %2878 = vmatprep.mubr.f32.mxu0 %v2648
    %2879 = vmatmul.mubr.f32.gmra.mrb[0].mxu0 %v2635
    %v2880 = vpop.f32.mrb[0].mxu0
    %v2881 = vadd.f32 0.0, %v2880
    %v2882 = vpop.f32.mrb[0].mxu0
    %v2883 = vadd.f32 0.0, %v2882
    %2884 = vmatprep.mubr.f32.mxu0 %v2650
    %2885 = vmatmul.mubr.f32.gmra.mrb[0].mxu0 %v2639
    %v2886 = vpop.f32.mrb[0].mxu0
    %v2887 = vadd.f32 0.0, %v2886
    %v2888 = vpop.f32.mrb[0].mxu0
    %v2889 = vadd.f32 0.0, %v2888
    %2890 = vmatprep.mubr.f32.mxu0 %v2652
    %2891 = vmatmul.mubr.f32.gmra.mrb[0].mxu0 %v2638
    %v2892 = vpop.f32.mrb[0].mxu0
    %v2893 = vadd.f32 0.0, %v2892
    %v2894 = vpop.f32.mrb[0].mxu0
    %v2895 = vadd.f32 0.0, %v2894
    %2896 = vdwg.mxu0
    %v2897 = vadd.f32 %v2541, %v2875
    %v2898 = vadd.f32 %v2543, %v2877
    %v2899 = vadd.f32 %v2547, %v2881
    %v2900 = vadd.f32 %v2549, %v2883
    %v2901 = vadd.f32 %v2553, %v2887
    %v2902 = vadd.f32 %v2555, %v2889
    %v2903 = vadd.f32 %v2559, %v2893
    %v2904 = vadd.f32 %v2561, %v2895
    %v2905 = vld [vmem:[#allocation3] sm:$0xc0]
    %v2906 = vld [vmem:[#allocation3 + $0x8] sm:$0xc0]
    %v2907 = vld [vmem:[#allocation3 + $0x10] sm:$0xff]
    %v2908 = vld [vmem:[#allocation3 + $0x18] sm:$0xff]
    %v2909 = vld [vmem:[#allocation3 + $0x20] sm:$0xff]
    %v2910 = vld [vmem:[#allocation3 + $0x28] sm:$0xff]
    %v2911 = vld [vmem:[#allocation3 + $0x30] sm:$0xff]
    %v2912 = vld [vmem:[#allocation3 + $0x38] sm:$0xff]
    %v2913 = vld [vmem:[#allocation3 + $0x40] sm:$0x3]
    %v2914 = vld [vmem:[#allocation3 + $0x48] sm:$0x3]
    %s2915 = scalar_lea.vmem [#allocation11], 1344
    %v2916 = vld [vmem:[%s2915] sm:$0xff]
    %v2917 = vld [vmem:[%s2915 + $0x8] sm:$0xff]
    %v2918 = vld [vmem:[%s2915 + $0x10] sm:$0xff]
    %v2919 = vld [vmem:[%s2915 + $0x18] sm:$0xff]
    %v2920 = vld [vmem:[%s2915 + $0x20] sm:$0xff]
    %v2921 = vld [vmem:[%s2915 + $0x28] sm:$0xff]
    %v2922 = vld [vmem:[%s2915 + $0x30] sm:$0xff]
    %v2923 = vld [vmem:[%s2915 + $0x38] sm:$0xff]
    %v2924 = vld [vmem:[%s2915 + $0x40] sm:$0xff]
    %v2925 = vld [vmem:[%s2915 + $0x48] sm:$0xff]
    %v2926 = vld [vmem:[%s2915 + $0x50] sm:$0xff]
    %v2927 = vld [vmem:[%s2915 + $0x58] sm:$0xff]
    %v2928 = vld [vmem:[%s2915 + $0x60] sm:$0xff]
    %v2929 = vld [vmem:[%s2915 + $0x68] sm:$0xff]
    %v2930 = vld [vmem:[%s2915 + $0x70] sm:$0xff]
    %v2931 = vld [vmem:[%s2915 + $0x78] sm:$0xff]
    %v2932 = vld [vmem:[%s2915 + $0x80] sm:$0xff]
    %v2933 = vld [vmem:[%s2915 + $0x88] sm:$0xff]
    %v2934 = vld [vmem:[%s2915 + $0x90] sm:$0xff]
    %v2935 = vld [vmem:[%s2915 + $0x98] sm:$0xff]
    %v2936 = vld [vmem:[%s2915 + $0xa0] sm:$0xff]
    %v2937 = vld [vmem:[%s2915 + $0xa8] sm:$0xff]
    %v2938 = vld [vmem:[%s2915 + $0xb0] sm:$0xff]
    %v2939 = vld [vmem:[%s2915 + $0xb8] sm:$0xff]
    %v2940 = vld [vmem:[%s2915 + $0xc0] sm:$0xff]
    %v2941 = vld [vmem:[%s2915 + $0xc8] sm:$0xff]
    %v2942 = vld [vmem:[%s2915 + $0xd0] sm:$0xff]
    %v2943 = vld [vmem:[%s2915 + $0xd8] sm:$0xff]
    %v2944 = vld [vmem:[%s2915 + $0xe0] sm:$0xff]
    %v2945 = vld [vmem:[%s2915 + $0xe8] sm:$0xff]
    %v2946 = vld [vmem:[%s2915 + $0xf0] sm:$0xff]
    %v2947 = vld [vmem:[%s2915 + $0xf8] sm:$0xff]
    %v2948 = vld [vmem:[%s2915 + $0x100] sm:$0xff]
    %v2949 = vld [vmem:[%s2915 + $0x108] sm:$0xff]
    %v2950 = vld [vmem:[%s2915 + $0x110] sm:$0xff]
    %v2951 = vld [vmem:[%s2915 + $0x118] sm:$0xff]
    %v2952 = vld [vmem:[%s2915 + $0x120] sm:$0xff]
    %v2953 = vld [vmem:[%s2915 + $0x128] sm:$0xff]
    %v2954 = vld [vmem:[%s2915 + $0x130] sm:$0xff]
    %v2955 = vld [vmem:[%s2915 + $0x138] sm:$0xff]
    %v2956 = vld [vmem:[%s2915 + $0x140] sm:$0xff]
    %v2957 = vld [vmem:[%s2915 + $0x148] sm:$0xff]
    %v2958 = vld [vmem:[%s2915 + $0x150] sm:$0xff]
    %v2959 = vld [vmem:[%s2915 + $0x158] sm:$0xff]
    %v2960 = vld [vmem:[%s2915 + $0x160] sm:$0xff]
    %v2961 = vld [vmem:[%s2915 + $0x168] sm:$0xff]
    %v2962 = vld [vmem:[%s2915 + $0x170] sm:$0xff]
    %v2963 = vld [vmem:[%s2915 + $0x178] sm:$0xff]
    %v2964 = vld [vmem:[%s2915 + $0x180] sm:$0xff]
    %v2965 = vld [vmem:[%s2915 + $0x188] sm:$0xff]
    %v2966 = vld [vmem:[%s2915 + $0x190] sm:$0xff]
    %v2967 = vld [vmem:[%s2915 + $0x198] sm:$0xff]
    %v2968 = vld [vmem:[%s2915 + $0x1a0] sm:$0xff]
    %v2969 = vld [vmem:[%s2915 + $0x1a8] sm:$0xff]
    %v2970 = vld [vmem:[%s2915 + $0x1b0] sm:$0xff]
    %v2971 = vld [vmem:[%s2915 + $0x1b8] sm:$0xff]
    %vm2982 = vcmask 1041408
    %v2983 = vrot.slane %v2905, 6
    %v2984 = vrot.slane %v2907, 6
    %v2985 = vsel %vm2982, %v2983, %v2984
    %v2986 = vrot.slane %v2906, 6
    %v2987 = vrot.slane %v2908, 6
    %v2988 = vsel %vm2982, %v2986, %v2987
    %v2989 = vrot.slane %v2909, 6
    %v2990 = vsel %vm2982, %v2984, %v2989
    %v2991 = vrot.slane %v2910, 6
    %v2992 = vsel %vm2982, %v2987, %v2991
    %v2993 = vrot.slane %v2911, 6
    %v2994 = vsel %vm2982, %v2989, %v2993
    %v2995 = vrot.slane %v2912, 6
    %v2996 = vsel %vm2982, %v2991, %v2995
    %v2997 = vrot.slane %v2913, 6
    %v2998 = vsel %vm2982, %v2993, %v2997
    %v2999 = vrot.slane %v2914, 6
    %v3000 = vsel %vm2982, %v2995, %v2999
    %v3005 = vsel %vm1639, %v2988, 0
    %v3007 = vsel %vm1639, %v2992, 0
    %v3009 = vsel %vm1639, %v2996, 0
    %v3011 = vsel %vm1639, %v3000, 0
    %3013 = vmatprep.subr.mxu0 %v2917
    %3014 = vmatpush1.msra.mxu0 %v2916
    %3015 = vmatprep.subr.mxu0 %v2919
    %3016 = vmatpush1.msra.mxu0 %v2918
    %3017 = vmatprep.subr.mxu0 %v2921
    %3018 = vmatpush1.msra.mxu0 %v2920
    %3019 = vmatprep.subr.mxu0 %v2923
    %3020 = vmatpush1.msra.mxu0 %v2922
    %3021 = vmatprep.subr.mxu0 %v2925
    %3022 = vmatpush1.msra.mxu0 %v2924
    %3023 = vmatprep.subr.mxu0 %v2927
    %3024 = vmatpush1.msra.mxu0 %v2926
    %3025 = vmatprep.subr.mxu0 %v2929
    %3026 = vmatpush1.msra.mxu0 %v2928
    %3027 = vmatprep.subr.mxu0 %v2931
    %3028 = vmatpush1.msra.mxu0 %v2930
    %3029 = vmatprep.subr.mxu0 %v2933
    %3030 = vmatpush1.msra.mxu0 %v2932
    %3031 = vmatprep.subr.mxu0 %v2935
    %3032 = vmatpush1.msra.mxu0 %v2934
    %3033 = vmatprep.subr.mxu0 %v2937
    %3034 = vmatpush1.msra.mxu0 %v2936
    %3035 = vmatprep.subr.mxu0 %v2939
    %3036 = vmatpush1.msra.mxu0 %v2938
    %3037 = vmatprep.subr.mxu0 %v2941
    %3038 = vmatpush1.msra.mxu0 %v2940
    %3039 = vmatprep.subr.mxu0 %v2943
    %3040 = vmatpush1.msra.mxu0 %v2942
    %3041 = vmatprep.subr.mxu0 %v2945
    %3042 = vmatpush1.msra.mxu0 %v2944
    %3043 = vmatprep.subr.mxu0 %v2947
    %3044 = vmatpush1.msra.mxu0 %v2946
    %3045 = vmatprep.subr.mxu0 %v2949
    %3046 = vmatpush1.msra.mxu0 %v2948
    %3047 = vmatprep.subr.mxu0 %v2951
    %3048 = vmatpush1.msra.mxu0 %v2950
    %3049 = vmatprep.subr.mxu0 %v2953
    %3050 = vmatpush1.msra.mxu0 %v2952
    %3051 = vmatprep.subr.mxu0 %v2955
    %3052 = vmatpush1.msra.mxu0 %v2954
    %3053 = vmatprep.subr.mxu0 %v2957
    %3054 = vmatpush1.msra.mxu0 %v2956
    %3055 = vmatprep.subr.mxu0 %v2959
    %3056 = vmatpush1.msra.mxu0 %v2958
    %3057 = vmatprep.subr.mxu0 %v2961
    %3058 = vmatpush1.msra.mxu0 %v2960
    %3059 = vmatprep.subr.mxu0 %v2963
    %3060 = vmatpush1.msra.mxu0 %v2962
    %3061 = vmatprep.subr.mxu0 %v2965
    %3062 = vmatpush1.msra.mxu0 %v2964
    %3063 = vmatprep.subr.mxu0 %v2967
    %3064 = vmatpush1.msra.mxu0 %v2966
    %3065 = vmatprep.subr.mxu0 %v2969
    %3066 = vmatpush1.msra.mxu0 %v2968
    %3067 = vmatprep.subr.mxu0 %v2971
    %3068 = vmatpush1.msra.mxu0 %v2970
    %3069 = vmatprep.subr.mxu0 0.0
    %3070 = vmatpush1.msra.mxu0 0.0
    %3071 = vmatprep.subr.mxu0 0.0
    %3072 = vmatpush1.msra.mxu0 0.0
    %3073 = vmatprep.subr.mxu0 0.0
    %3074 = vmatpush1.msra.mxu0 0.0
    %3075 = vmatprep.subr.mxu0 0.0
    %3076 = vmatpush1.msra.mxu0 0.0
    %3077 = vmatprep.mubr.f32.mxu0 %v3005
    %3078 = vmatmul.mubr.f32.gmra.mrb[0].mxu0 %v2985
    %v3079 = vpop.f32.mrb[0].mxu0
    %v3080 = vadd.f32 0.0, %v3079
    %v3081 = vpop.f32.mrb[0].mxu0
    %v3082 = vadd.f32 0.0, %v3081
    %3083 = vmatprep.mubr.f32.mxu0 %v3007
    %3084 = vmatmul.mubr.f32.gmra.mrb[0].mxu0 %v2990
    %v3085 = vpop.f32.mrb[0].mxu0
    %v3086 = vadd.f32 0.0, %v3085
    %v3087 = vpop.f32.mrb[0].mxu0
    %v3088 = vadd.f32 0.0, %v3087
    %3089 = vmatprep.mubr.f32.mxu0 %v3009
    %3090 = vmatmul.mubr.f32.gmra.mrb[0].mxu0 %v2994
    %v3091 = vpop.f32.mrb[0].mxu0
    %v3092 = vadd.f32 0.0, %v3091
    %v3093 = vpop.f32.mrb[0].mxu0
    %v3094 = vadd.f32 0.0, %v3093
    %3095 = vmatprep.mubr.f32.mxu0 %v3011
    %3096 = vmatmul.mubr.f32.gmra.mrb[0].mxu0 %v2998
    %v3097 = vpop.f32.mrb[0].mxu0
    %v3098 = vadd.f32 0.0, %v3097
    %v3099 = vpop.f32.mrb[0].mxu0
    %v3100 = vadd.f32 0.0, %v3099
    %3101 = vdwg.mxu0
    %v3102 = vadd.f32 %v2743, %v3080
    %v3103 = vadd.f32 %v2744, %v3082
    %v3104 = vadd.f32 %v2745, %v3086
    %v3105 = vadd.f32 %v2746, %v3088
    %v3106 = vadd.f32 %v2747, %v3092
    %v3107 = vadd.f32 %v2748, %v3094
    %v3108 = vadd.f32 %v2749, %v3098
    %v3109 = vadd.f32 %v2750, %v3100
    %s3110 = scalar_lea.vmem [#allocation13], 1344
    %v3111 = vld [vmem:[%s3110] sm:$0xff]
    %v3112 = vld [vmem:[%s3110 + $0x8] sm:$0xff]
    %v3113 = vld [vmem:[%s3110 + $0x10] sm:$0xff]
    %v3114 = vld [vmem:[%s3110 + $0x18] sm:$0xff]
    %v3115 = vld [vmem:[%s3110 + $0x20] sm:$0xff]
    %v3116 = vld [vmem:[%s3110 + $0x28] sm:$0xff]
    %v3117 = vld [vmem:[%s3110 + $0x30] sm:$0xff]
    %v3118 = vld [vmem:[%s3110 + $0x38] sm:$0xff]
    %v3119 = vld [vmem:[%s3110 + $0x40] sm:$0xff]
    %v3120 = vld [vmem:[%s3110 + $0x48] sm:$0xff]
    %v3121 = vld [vmem:[%s3110 + $0x50] sm:$0xff]
    %v3122 = vld [vmem:[%s3110 + $0x58] sm:$0xff]
    %v3123 = vld [vmem:[%s3110 + $0x60] sm:$0xff]
    %v3124 = vld [vmem:[%s3110 + $0x68] sm:$0xff]
    %v3125 = vld [vmem:[%s3110 + $0x70] sm:$0xff]
    %v3126 = vld [vmem:[%s3110 + $0x78] sm:$0xff]
    %v3127 = vld [vmem:[%s3110 + $0x80] sm:$0xff]
    %v3128 = vld [vmem:[%s3110 + $0x88] sm:$0xff]
    %v3129 = vld [vmem:[%s3110 + $0x90] sm:$0xff]
    %v3130 = vld [vmem:[%s3110 + $0x98] sm:$0xff]
    %v3131 = vld [vmem:[%s3110 + $0xa0] sm:$0xff]
    %v3132 = vld [vmem:[%s3110 + $0xa8] sm:$0xff]
    %v3133 = vld [vmem:[%s3110 + $0xb0] sm:$0xff]
    %v3134 = vld [vmem:[%s3110 + $0xb8] sm:$0xff]
    %v3135 = vld [vmem:[%s3110 + $0xc0] sm:$0xff]
    %v3136 = vld [vmem:[%s3110 + $0xc8] sm:$0xff]
    %v3137 = vld [vmem:[%s3110 + $0xd0] sm:$0xff]
    %v3138 = vld [vmem:[%s3110 + $0xd8] sm:$0xff]
    %v3139 = vld [vmem:[%s3110 + $0xe0] sm:$0xff]
    %v3140 = vld [vmem:[%s3110 + $0xe8] sm:$0xff]
    %v3141 = vld [vmem:[%s3110 + $0xf0] sm:$0xff]
    %v3142 = vld [vmem:[%s3110 + $0xf8] sm:$0xff]
    %v3143 = vld [vmem:[%s3110 + $0x100] sm:$0xff]
    %v3144 = vld [vmem:[%s3110 + $0x108] sm:$0xff]
    %v3145 = vld [vmem:[%s3110 + $0x110] sm:$0xff]
    %v3146 = vld [vmem:[%s3110 + $0x118] sm:$0xff]
    %v3147 = vld [vmem:[%s3110 + $0x120] sm:$0xff]
    %v3148 = vld [vmem:[%s3110 + $0x128] sm:$0xff]
    %v3149 = vld [vmem:[%s3110 + $0x130] sm:$0xff]
    %v3150 = vld [vmem:[%s3110 + $0x138] sm:$0xff]
    %v3151 = vld [vmem:[%s3110 + $0x140] sm:$0xff]
    %v3152 = vld [vmem:[%s3110 + $0x148] sm:$0xff]
    %v3153 = vld [vmem:[%s3110 + $0x150] sm:$0xff]
    %v3154 = vld [vmem:[%s3110 + $0x158] sm:$0xff]
    %v3155 = vld [vmem:[%s3110 + $0x160] sm:$0xff]
    %v3156 = vld [vmem:[%s3110 + $0x168] sm:$0xff]
    %v3157 = vld [vmem:[%s3110 + $0x170] sm:$0xff]
    %v3158 = vld [vmem:[%s3110 + $0x178] sm:$0xff]
    %v3159 = vld [vmem:[%s3110 + $0x180] sm:$0xff]
    %v3160 = vld [vmem:[%s3110 + $0x188] sm:$0xff]
    %v3161 = vld [vmem:[%s3110 + $0x190] sm:$0xff]
    %v3162 = vld [vmem:[%s3110 + $0x198] sm:$0xff]
    %v3163 = vld [vmem:[%s3110 + $0x1a0] sm:$0xff]
    %v3164 = vld [vmem:[%s3110 + $0x1a8] sm:$0xff]
    %v3165 = vld [vmem:[%s3110 + $0x1b0] sm:$0xff]
    %v3166 = vld [vmem:[%s3110 + $0x1b8] sm:$0xff]
    %3167 = vmatprep.subr.mxu0 %v3112
    %3168 = vmatpush1.msra.mxu0 %v3111
    %3169 = vmatprep.subr.mxu0 %v3114
    %3170 = vmatpush1.msra.mxu0 %v3113
    %3171 = vmatprep.subr.mxu0 %v3116
    %3172 = vmatpush1.msra.mxu0 %v3115
    %3173 = vmatprep.subr.mxu0 %v3118
    %3174 = vmatpush1.msra.mxu0 %v3117
    %3175 = vmatprep.subr.mxu0 %v3120
    %3176 = vmatpush1.msra.mxu0 %v3119
    %3177 = vmatprep.subr.mxu0 %v3122
    %3178 = vmatpush1.msra.mxu0 %v3121
    %3179 = vmatprep.subr.mxu0 %v3124
    %3180 = vmatpush1.msra.mxu0 %v3123
    %3181 = vmatprep.subr.mxu0 %v3126
    %3182 = vmatpush1.msra.mxu0 %v3125
    %3183 = vmatprep.subr.mxu0 %v3128
    %3184 = vmatpush1.msra.mxu0 %v3127
    %3185 = vmatprep.subr.mxu0 %v3130
    %3186 = vmatpush1.msra.mxu0 %v3129
    %3187 = vmatprep.subr.mxu0 %v3132
    %3188 = vmatpush1.msra.mxu0 %v3131
    %3189 = vmatprep.subr.mxu0 %v3134
    %3190 = vmatpush1.msra.mxu0 %v3133
    %3191 = vmatprep.subr.mxu0 %v3136
    %3192 = vmatpush1.msra.mxu0 %v3135
    %3193 = vmatprep.subr.mxu0 %v3138
    %3194 = vmatpush1.msra.mxu0 %v3137
    %3195 = vmatprep.subr.mxu0 %v3140
    %3196 = vmatpush1.msra.mxu0 %v3139
    %3197 = vmatprep.subr.mxu0 %v3142
    %3198 = vmatpush1.msra.mxu0 %v3141
    %3199 = vmatprep.subr.mxu0 %v3144
    %3200 = vmatpush1.msra.mxu0 %v3143
    %3201 = vmatprep.subr.mxu0 %v3146
    %3202 = vmatpush1.msra.mxu0 %v3145
    %3203 = vmatprep.subr.mxu0 %v3148
    %3204 = vmatpush1.msra.mxu0 %v3147
    %3205 = vmatprep.subr.mxu0 %v3150
    %3206 = vmatpush1.msra.mxu0 %v3149
    %3207 = vmatprep.subr.mxu0 %v3152
    %3208 = vmatpush1.msra.mxu0 %v3151
    %3209 = vmatprep.subr.mxu0 %v3154
    %3210 = vmatpush1.msra.mxu0 %v3153
    %3211 = vmatprep.subr.mxu0 %v3156
    %3212 = vmatpush1.msra.mxu0 %v3155
    %3213 = vmatprep.subr.mxu0 %v3158
    %3214 = vmatpush1.msra.mxu0 %v3157
    %3215 = vmatprep.subr.mxu0 %v3160
    %3216 = vmatpush1.msra.mxu0 %v3159
    %3217 = vmatprep.subr.mxu0 %v3162
    %3218 = vmatpush1.msra.mxu0 %v3161
    %3219 = vmatprep.subr.mxu0 %v3164
    %3220 = vmatpush1.msra.mxu0 %v3163
    %3221 = vmatprep.subr.mxu0 %v3166
    %3222 = vmatpush1.msra.mxu0 %v3165
    %3223 = vmatprep.subr.mxu0 0.0
    %3224 = vmatpush1.msra.mxu0 0.0
    %3225 = vmatprep.subr.mxu0 0.0
    %3226 = vmatpush1.msra.mxu0 0.0
    %3227 = vmatprep.subr.mxu0 0.0
    %3228 = vmatpush1.msra.mxu0 0.0
    %3229 = vmatprep.subr.mxu0 0.0
    %3230 = vmatpush1.msra.mxu0 0.0
    %3231 = vmatprep.mubr.f32.mxu0 %v3005
    %3232 = vmatmul.mubr.f32.gmra.mrb[0].mxu0 %v2985
    %v3233 = vpop.f32.mrb[0].mxu0
    %v3234 = vadd.f32 0.0, %v3233
    %v3235 = vpop.f32.mrb[0].mxu0
    %v3236 = vadd.f32 0.0, %v3235
    %3237 = vmatprep.mubr.f32.mxu0 %v3007
    %3238 = vmatmul.mubr.f32.gmra.mrb[0].mxu0 %v2990
    %v3239 = vpop.f32.mrb[0].mxu0
    %v3240 = vadd.f32 0.0, %v3239
    %v3241 = vpop.f32.mrb[0].mxu0
    %v3242 = vadd.f32 0.0, %v3241
    %3243 = vmatprep.mubr.f32.mxu0 %v3009
    %3244 = vmatmul.mubr.f32.gmra.mrb[0].mxu0 %v2994
    %v3245 = vpop.f32.mrb[0].mxu0
    %v3246 = vadd.f32 0.0, %v3245
    %v3247 = vpop.f32.mrb[0].mxu0
    %v3248 = vadd.f32 0.0, %v3247
    %3249 = vmatprep.mubr.f32.mxu0 %v3011
    %3250 = vmatmul.mubr.f32.gmra.mrb[0].mxu0 %v2998
    %v3251 = vpop.f32.mrb[0].mxu0
    %v3252 = vadd.f32 0.0, %v3251
    %v3253 = vpop.f32.mrb[0].mxu0
    %v3254 = vadd.f32 0.0, %v3253
    %3255 = vdwg.mxu0
    %v3256 = vadd.f32 %v2897, %v3234
    %v3257 = vadd.f32 %v2898, %v3236
    %v3258 = vadd.f32 %v2899, %v3240
    %v3259 = vadd.f32 %v2900, %v3242
    %v3260 = vadd.f32 %v2901, %v3246
    %v3261 = vadd.f32 %v2902, %v3248
    %v3262 = vadd.f32 %v2903, %v3252
    %v3263 = vadd.f32 %v2904, %v3254
    %v3264 = vld [vmem:[#allocation3 + $0x40] sm:$0xf]
    %v3265 = vld [vmem:[#allocation3 + $0x48] sm:$0xf]
    %s3266 = scalar_lea.vmem [#allocation11], 1792
    %v3267 = vld [vmem:[%s3266] sm:$0xff]
    %v3268 = vld [vmem:[%s3266 + $0x8] sm:$0xff]
    %v3269 = vld [vmem:[%s3266 + $0x10] sm:$0xff]
    %v3270 = vld [vmem:[%s3266 + $0x18] sm:$0xff]
    %v3271 = vld [vmem:[%s3266 + $0x20] sm:$0xff]
    %v3272 = vld [vmem:[%s3266 + $0x28] sm:$0xff]
    %v3273 = vld [vmem:[%s3266 + $0x30] sm:$0xff]
    %v3274 = vld [vmem:[%s3266 + $0x38] sm:$0xff]
    %v3275 = vld [vmem:[%s3266 + $0x40] sm:$0xff]
    %v3276 = vld [vmem:[%s3266 + $0x48] sm:$0xff]
    %v3277 = vld [vmem:[%s3266 + $0x50] sm:$0xff]
    %v3278 = vld [vmem:[%s3266 + $0x58] sm:$0xff]
    %v3279 = vld [vmem:[%s3266 + $0x60] sm:$0xff]
    %v3280 = vld [vmem:[%s3266 + $0x68] sm:$0xff]
    %v3281 = vld [vmem:[%s3266 + $0x70] sm:$0xff]
    %v3282 = vld [vmem:[%s3266 + $0x78] sm:$0xff]
    %v3283 = vld [vmem:[%s3266 + $0x80] sm:$0xff]
    %v3284 = vld [vmem:[%s3266 + $0x88] sm:$0xff]
    %v3285 = vld [vmem:[%s3266 + $0x90] sm:$0xff]
    %v3286 = vld [vmem:[%s3266 + $0x98] sm:$0xff]
    %v3287 = vld [vmem:[%s3266 + $0xa0] sm:$0xff]
    %v3288 = vld [vmem:[%s3266 + $0xa8] sm:$0xff]
    %v3289 = vld [vmem:[%s3266 + $0xb0] sm:$0xff]
    %v3290 = vld [vmem:[%s3266 + $0xb8] sm:$0xff]
    %v3291 = vld [vmem:[%s3266 + $0xc0] sm:$0xff]
    %v3292 = vld [vmem:[%s3266 + $0xc8] sm:$0xff]
    %v3293 = vld [vmem:[%s3266 + $0xd0] sm:$0xff]
    %v3294 = vld [vmem:[%s3266 + $0xd8] sm:$0xff]
    %v3295 = vld [vmem:[%s3266 + $0xe0] sm:$0xff]
    %v3296 = vld [vmem:[%s3266 + $0xe8] sm:$0xff]
    %v3297 = vld [vmem:[%s3266 + $0xf0] sm:$0xff]
    %v3298 = vld [vmem:[%s3266 + $0xf8] sm:$0xff]
    %v3299 = vld [vmem:[%s3266 + $0x100] sm:$0xff]
    %v3300 = vld [vmem:[%s3266 + $0x108] sm:$0xff]
    %v3301 = vld [vmem:[%s3266 + $0x110] sm:$0xff]
    %v3302 = vld [vmem:[%s3266 + $0x118] sm:$0xff]
    %v3303 = vld [vmem:[%s3266 + $0x120] sm:$0xff]
    %v3304 = vld [vmem:[%s3266 + $0x128] sm:$0xff]
    %v3305 = vld [vmem:[%s3266 + $0x130] sm:$0xff]
    %v3306 = vld [vmem:[%s3266 + $0x138] sm:$0xff]
    %v3307 = vld [vmem:[%s3266 + $0x140] sm:$0xff]
    %v3308 = vld [vmem:[%s3266 + $0x148] sm:$0xff]
    %v3309 = vld [vmem:[%s3266 + $0x150] sm:$0xff]
    %v3310 = vld [vmem:[%s3266 + $0x158] sm:$0xff]
    %v3311 = vld [vmem:[%s3266 + $0x160] sm:$0xff]
    %v3312 = vld [vmem:[%s3266 + $0x168] sm:$0xff]
    %v3313 = vld [vmem:[%s3266 + $0x170] sm:$0xff]
    %v3314 = vld [vmem:[%s3266 + $0x178] sm:$0xff]
    %v3315 = vld [vmem:[%s3266 + $0x180] sm:$0xff]
    %v3316 = vld [vmem:[%s3266 + $0x188] sm:$0xff]
    %v3317 = vld [vmem:[%s3266 + $0x190] sm:$0xff]
    %v3318 = vld [vmem:[%s3266 + $0x198] sm:$0xff]
    %v3319 = vld [vmem:[%s3266 + $0x1a0] sm:$0xff]
    %v3320 = vld [vmem:[%s3266 + $0x1a8] sm:$0xff]
    %v3321 = vld [vmem:[%s3266 + $0x1b0] sm:$0xff]
    %v3322 = vld [vmem:[%s3266 + $0x1b8] sm:$0xff]
    %v3323 = vsel %vm1639, %v2908, 0
    %v3325 = vsel %vm1639, %v2910, 0
    %v3327 = vsel %vm1639, %v2912, 0
    %v3330 = vsel %vm1639, %v3265, 0
    %3332 = vmatprep.subr.mxu0 %v3268
    %3333 = vmatpush1.msra.mxu0 %v3267
    %3334 = vmatprep.subr.mxu0 %v3270
    %3335 = vmatpush1.msra.mxu0 %v3269
    %3336 = vmatprep.subr.mxu0 %v3272
    %3337 = vmatpush1.msra.mxu0 %v3271
    %3338 = vmatprep.subr.mxu0 %v3274
    %3339 = vmatpush1.msra.mxu0 %v3273
    %3340 = vmatprep.subr.mxu0 %v3276
    %3341 = vmatpush1.msra.mxu0 %v3275
    %3342 = vmatprep.subr.mxu0 %v3278
    %3343 = vmatpush1.msra.mxu0 %v3277
    %3344 = vmatprep.subr.mxu0 %v3280
    %3345 = vmatpush1.msra.mxu0 %v3279
    %3346 = vmatprep.subr.mxu0 %v3282
    %3347 = vmatpush1.msra.mxu0 %v3281
    %3348 = vmatprep.subr.mxu0 %v3284
    %3349 = vmatpush1.msra.mxu0 %v3283
    %3350 = vmatprep.subr.mxu0 %v3286
    %3351 = vmatpush1.msra.mxu0 %v3285
    %3352 = vmatprep.subr.mxu0 %v3288
    %3353 = vmatpush1.msra.mxu0 %v3287
    %3354 = vmatprep.subr.mxu0 %v3290
    %3355 = vmatpush1.msra.mxu0 %v3289
    %3356 = vmatprep.subr.mxu0 %v3292
    %3357 = vmatpush1.msra.mxu0 %v3291
    %3358 = vmatprep.subr.mxu0 %v3294
    %3359 = vmatpush1.msra.mxu0 %v3293
    %3360 = vmatprep.subr.mxu0 %v3296
    %3361 = vmatpush1.msra.mxu0 %v3295
    %3362 = vmatprep.subr.mxu0 %v3298
    %3363 = vmatpush1.msra.mxu0 %v3297
    %3364 = vmatprep.subr.mxu0 %v3300
    %3365 = vmatpush1.msra.mxu0 %v3299
    %3366 = vmatprep.subr.mxu0 %v3302
    %3367 = vmatpush1.msra.mxu0 %v3301
    %3368 = vmatprep.subr.mxu0 %v3304
    %3369 = vmatpush1.msra.mxu0 %v3303
    %3370 = vmatprep.subr.mxu0 %v3306
    %3371 = vmatpush1.msra.mxu0 %v3305
    %3372 = vmatprep.subr.mxu0 %v3308
    %3373 = vmatpush1.msra.mxu0 %v3307
    %3374 = vmatprep.subr.mxu0 %v3310
    %3375 = vmatpush1.msra.mxu0 %v3309
    %3376 = vmatprep.subr.mxu0 %v3312
    %3377 = vmatpush1.msra.mxu0 %v3311
    %3378 = vmatprep.subr.mxu0 %v3314
    %3379 = vmatpush1.msra.mxu0 %v3313
    %3380 = vmatprep.subr.mxu0 %v3316
    %3381 = vmatpush1.msra.mxu0 %v3315
    %3382 = vmatprep.subr.mxu0 %v3318
    %3383 = vmatpush1.msra.mxu0 %v3317
    %3384 = vmatprep.subr.mxu0 %v3320
    %3385 = vmatpush1.msra.mxu0 %v3319
    %3386 = vmatprep.subr.mxu0 %v3322
    %3387 = vmatpush1.msra.mxu0 %v3321
    %3388 = vmatprep.subr.mxu0 0.0
    %3389 = vmatpush1.msra.mxu0 0.0
    %3390 = vmatprep.subr.mxu0 0.0
    %3391 = vmatpush1.msra.mxu0 0.0
    %3392 = vmatprep.subr.mxu0 0.0
    %3393 = vmatpush1.msra.mxu0 0.0
    %3394 = vmatprep.subr.mxu0 0.0
    %3395 = vmatpush1.msra.mxu0 0.0
    %3396 = vmatprep.mubr.f32.mxu0 %v3323
    %3397 = vmatmul.mubr.f32.gmra.mrb[0].mxu0 %v2907
    %v3398 = vpop.f32.mrb[0].mxu0
    %v3399 = vadd.f32 0.0, %v3398
    %v3400 = vpop.f32.mrb[0].mxu0
    %v3401 = vadd.f32 0.0, %v3400
    %3402 = vmatprep.mubr.f32.mxu0 %v3325
    %3403 = vmatmul.mubr.f32.gmra.mrb[0].mxu0 %v2909
    %v3404 = vpop.f32.mrb[0].mxu0
    %v3405 = vadd.f32 0.0, %v3404
    %v3406 = vpop.f32.mrb[0].mxu0
    %v3407 = vadd.f32 0.0, %v3406
    %3408 = vmatprep.mubr.f32.mxu0 %v3327
    %3409 = vmatmul.mubr.f32.gmra.mrb[0].mxu0 %v2911
    %v3410 = vpop.f32.mrb[0].mxu0
    %v3411 = vadd.f32 0.0, %v3410
    %v3412 = vpop.f32.mrb[0].mxu0
    %v3413 = vadd.f32 0.0, %v3412
    %3414 = vmatprep.mubr.f32.mxu0 %v3330
    %3415 = vmatmul.mubr.f32.gmra.mrb[0].mxu0 %v3264
    %v3416 = vpop.f32.mrb[0].mxu0
    %v3417 = vadd.f32 0.0, %v3416
    %v3418 = vpop.f32.mrb[0].mxu0
    %v3419 = vadd.f32 0.0, %v3418
    %3420 = vdwg.mxu0
    %v3421 = vadd.f32 %v3102, %v3399
    %v3422 = vadd.f32 %v3103, %v3401
    %v3423 = vadd.f32 %v3104, %v3405
    %v3424 = vadd.f32 %v3105, %v3407
    %v3425 = vadd.f32 %v3106, %v3411
    %v3426 = vadd.f32 %v3107, %v3413
    %v3427 = vadd.f32 %v3108, %v3417
    %v3428 = vadd.f32 %v3109, %v3419
    %s3429 = scalar_lea.vmem [#allocation13], 1792
    %v3430 = vld [vmem:[%s3429] sm:$0xff]
    %v3431 = vld [vmem:[%s3429 + $0x8] sm:$0xff]
    %v3432 = vld [vmem:[%s3429 + $0x10] sm:$0xff]
    %v3433 = vld [vmem:[%s3429 + $0x18] sm:$0xff]
    %v3434 = vld [vmem:[%s3429 + $0x20] sm:$0xff]
    %v3435 = vld [vmem:[%s3429 + $0x28] sm:$0xff]
    %v3436 = vld [vmem:[%s3429 + $0x30] sm:$0xff]
    %v3437 = vld [vmem:[%s3429 + $0x38] sm:$0xff]
    %v3438 = vld [vmem:[%s3429 + $0x40] sm:$0xff]
    %v3439 = vld [vmem:[%s3429 + $0x48] sm:$0xff]
    %v3440 = vld [vmem:[%s3429 + $0x50] sm:$0xff]
    %v3441 = vld [vmem:[%s3429 + $0x58] sm:$0xff]
    %v3442 = vld [vmem:[%s3429 + $0x60] sm:$0xff]
    %v3443 = vld [vmem:[%s3429 + $0x68] sm:$0xff]
    %v3444 = vld [vmem:[%s3429 + $0x70] sm:$0xff]
    %v3445 = vld [vmem:[%s3429 + $0x78] sm:$0xff]
    %v3446 = vld [vmem:[%s3429 + $0x80] sm:$0xff]
    %v3447 = vld [vmem:[%s3429 + $0x88] sm:$0xff]
    %v3448 = vld [vmem:[%s3429 + $0x90] sm:$0xff]
    %v3449 = vld [vmem:[%s3429 + $0x98] sm:$0xff]
    %v3450 = vld [vmem:[%s3429 + $0xa0] sm:$0xff]
    %v3451 = vld [vmem:[%s3429 + $0xa8] sm:$0xff]
    %v3452 = vld [vmem:[%s3429 + $0xb0] sm:$0xff]
    %v3453 = vld [vmem:[%s3429 + $0xb8] sm:$0xff]
    %v3454 = vld [vmem:[%s3429 + $0xc0] sm:$0xff]
    %v3455 = vld [vmem:[%s3429 + $0xc8] sm:$0xff]
    %v3456 = vld [vmem:[%s3429 + $0xd0] sm:$0xff]
    %v3457 = vld [vmem:[%s3429 + $0xd8] sm:$0xff]
    %v3458 = vld [vmem:[%s3429 + $0xe0] sm:$0xff]
    %v3459 = vld [vmem:[%s3429 + $0xe8] sm:$0xff]
    %v3460 = vld [vmem:[%s3429 + $0xf0] sm:$0xff]
    %v3461 = vld [vmem:[%s3429 + $0xf8] sm:$0xff]
    %v3462 = vld [vmem:[%s3429 + $0x100] sm:$0xff]
    %v3463 = vld [vmem:[%s3429 + $0x108] sm:$0xff]
    %v3464 = vld [vmem:[%s3429 + $0x110] sm:$0xff]
    %v3465 = vld [vmem:[%s3429 + $0x118] sm:$0xff]
    %v3466 = vld [vmem:[%s3429 + $0x120] sm:$0xff]
    %v3467 = vld [vmem:[%s3429 + $0x128] sm:$0xff]
    %v3468 = vld [vmem:[%s3429 + $0x130] sm:$0xff]
    %v3469 = vld [vmem:[%s3429 + $0x138] sm:$0xff]
    %v3470 = vld [vmem:[%s3429 + $0x140] sm:$0xff]
    %v3471 = vld [vmem:[%s3429 + $0x148] sm:$0xff]
    %v3472 = vld [vmem:[%s3429 + $0x150] sm:$0xff]
    %v3473 = vld [vmem:[%s3429 + $0x158] sm:$0xff]
    %v3474 = vld [vmem:[%s3429 + $0x160] sm:$0xff]
    %v3475 = vld [vmem:[%s3429 + $0x168] sm:$0xff]
    %v3476 = vld [vmem:[%s3429 + $0x170] sm:$0xff]
    %v3477 = vld [vmem:[%s3429 + $0x178] sm:$0xff]
    %v3478 = vld [vmem:[%s3429 + $0x180] sm:$0xff]
    %v3479 = vld [vmem:[%s3429 + $0x188] sm:$0xff]
    %v3480 = vld [vmem:[%s3429 + $0x190] sm:$0xff]
    %v3481 = vld [vmem:[%s3429 + $0x198] sm:$0xff]
    %v3482 = vld [vmem:[%s3429 + $0x1a0] sm:$0xff]
    %v3483 = vld [vmem:[%s3429 + $0x1a8] sm:$0xff]
    %v3484 = vld [vmem:[%s3429 + $0x1b0] sm:$0xff]
    %v3485 = vld [vmem:[%s3429 + $0x1b8] sm:$0xff]
    %3486 = vmatprep.subr.mxu0 %v3431
    %3487 = vmatpush1.msra.mxu0 %v3430
    %3488 = vmatprep.subr.mxu0 %v3433
    %3489 = vmatpush1.msra.mxu0 %v3432
    %3490 = vmatprep.subr.mxu0 %v3435
    %3491 = vmatpush1.msra.mxu0 %v3434
    %3492 = vmatprep.subr.mxu0 %v3437
    %3493 = vmatpush1.msra.mxu0 %v3436
    %3494 = vmatprep.subr.mxu0 %v3439
    %3495 = vmatpush1.msra.mxu0 %v3438
    %3496 = vmatprep.subr.mxu0 %v3441
    %3497 = vmatpush1.msra.mxu0 %v3440
    %3498 = vmatprep.subr.mxu0 %v3443
    %3499 = vmatpush1.msra.mxu0 %v3442
    %3500 = vmatprep.subr.mxu0 %v3445
    %3501 = vmatpush1.msra.mxu0 %v3444
    %3502 = vmatprep.subr.mxu0 %v3447
    %3503 = vmatpush1.msra.mxu0 %v3446
    %3504 = vmatprep.subr.mxu0 %v3449
    %3505 = vmatpush1.msra.mxu0 %v3448
    %3506 = vmatprep.subr.mxu0 %v3451
    %3507 = vmatpush1.msra.mxu0 %v3450
    %3508 = vmatprep.subr.mxu0 %v3453
    %3509 = vmatpush1.msra.mxu0 %v3452
    %3510 = vmatprep.subr.mxu0 %v3455
    %3511 = vmatpush1.msra.mxu0 %v3454
    %3512 = vmatprep.subr.mxu0 %v3457
    %3513 = vmatpush1.msra.mxu0 %v3456
    %3514 = vmatprep.subr.mxu0 %v3459
    %3515 = vmatpush1.msra.mxu0 %v3458
    %3516 = vmatprep.subr.mxu0 %v3461
    %3517 = vmatpush1.msra.mxu0 %v3460
    %3518 = vmatprep.subr.mxu0 %v3463
    %3519 = vmatpush1.msra.mxu0 %v3462
    %3520 = vmatprep.subr.mxu0 %v3465
    %3521 = vmatpush1.msra.mxu0 %v3464
    %3522 = vmatprep.subr.mxu0 %v3467
    %3523 = vmatpush1.msra.mxu0 %v3466
    %3524 = vmatprep.subr.mxu0 %v3469
    %3525 = vmatpush1.msra.mxu0 %v3468
    %3526 = vmatprep.subr.mxu0 %v3471
    %3527 = vmatpush1.msra.mxu0 %v3470
    %3528 = vmatprep.subr.mxu0 %v3473
    %3529 = vmatpush1.msra.mxu0 %v3472
    %3530 = vmatprep.subr.mxu0 %v3475
    %3531 = vmatpush1.msra.mxu0 %v3474
    %3532 = vmatprep.subr.mxu0 %v3477
    %3533 = vmatpush1.msra.mxu0 %v3476
    %3534 = vmatprep.subr.mxu0 %v3479
    %3535 = vmatpush1.msra.mxu0 %v3478
    %3536 = vmatprep.subr.mxu0 %v3481
    %3537 = vmatpush1.msra.mxu0 %v3480
    %3538 = vmatprep.subr.mxu0 %v3483
    %3539 = vmatpush1.msra.mxu0 %v3482
    %3540 = vmatprep.subr.mxu0 %v3485
    %3541 = vmatpush1.msra.mxu0 %v3484
    %3542 = vmatprep.subr.mxu0 0.0
    %3543 = vmatpush1.msra.mxu0 0.0
    %3544 = vmatprep.subr.mxu0 0.0
    %3545 = vmatpush1.msra.mxu0 0.0
    %3546 = vmatprep.subr.mxu0 0.0
    %3547 = vmatpush1.msra.mxu0 0.0
    %3548 = vmatprep.subr.mxu0 0.0
    %3549 = vmatpush1.msra.mxu0 0.0
    %3550 = vmatprep.mubr.f32.mxu0 %v3323
    %3551 = vmatmul.mubr.f32.gmra.mrb[0].mxu0 %v2907
    %v3552 = vpop.f32.mrb[0].mxu0
    %v3553 = vadd.f32 0.0, %v3552
    %v3554 = vpop.f32.mrb[0].mxu0
    %v3555 = vadd.f32 0.0, %v3554
    %3556 = vmatprep.mubr.f32.mxu0 %v3325
    %3557 = vmatmul.mubr.f32.gmra.mrb[0].mxu0 %v2909
    %v3558 = vpop.f32.mrb[0].mxu0
    %v3559 = vadd.f32 0.0, %v3558
    %v3560 = vpop.f32.mrb[0].mxu0
    %v3561 = vadd.f32 0.0, %v3560
    %3562 = vmatprep.mubr.f32.mxu0 %v3327
    %3563 = vmatmul.mubr.f32.gmra.mrb[0].mxu0 %v2911
    %v3564 = vpop.f32.mrb[0].mxu0
    %v3565 = vadd.f32 0.0, %v3564
    %v3566 = vpop.f32.mrb[0].mxu0
    %v3567 = vadd.f32 0.0, %v3566
    %3568 = vmatprep.mubr.f32.mxu0 %v3330
    %3569 = vmatmul.mubr.f32.gmra.mrb[0].mxu0 %v3264
    %v3570 = vpop.f32.mrb[0].mxu0
    %v3571 = vadd.f32 0.0, %v3570
    %v3572 = vpop.f32.mrb[0].mxu0
    %v3573 = vadd.f32 0.0, %v3572
    %3574 = vdwg.mxu0
    %v3575 = vadd.f32 %v3256, %v3553
    %v3576 = vadd.f32 %v3257, %v3555
    %v3577 = vadd.f32 %v3258, %v3559
    %v3578 = vadd.f32 %v3259, %v3561
    %v3579 = vadd.f32 %v3260, %v3565
    %v3580 = vadd.f32 %v3261, %v3567
    %v3581 = vadd.f32 %v3262, %v3571
    %v3582 = vadd.f32 %v3263, %v3573
    %v3583 = vmax.f32 %v3421, %v3575
    %v3584 = vmax.f32 %v3422, %v3576
    %v3585 = vmax.f32 %v3423, %v3577
    %v3586 = vmax.f32 %v3424, %v3578
    %v3587 = vmax.f32 %v3425, %v3579
    %v3588 = vmax.f32 %v3426, %v3580
    %v3589 = vmax.f32 %v3427, %v3581
    %v3590 = vmax.f32 %v3428, %v3582
    %v3591 = vld [vmem:[#allocation14] sm:$0x3]
    %v3593 = vlaneseq
    %v3594 = vshrl.u32 %v3593, 7
    %v3595 = vsub.s32 0, %v3594
    %v3596 = vrot.slane %v3591, %v3595
    %v3597 = vlaneseq
    %v3598 = vshrl.u32 %v3597, 7
    %v3599 = vsub.s32 1, %v3598
    %v3600 = vrot.slane %v3591, %v3599
    %v3603 = vadd.f32 %v3583, %v3596
    %v3604 = vadd.f32 %v3584, %v3600
    %v3605 = vadd.f32 %v3585, %v3596
    %v3606 = vadd.f32 %v3586, %v3600
    %v3607 = vadd.f32 %v3587, %v3596
    %v3608 = vadd.f32 %v3588, %v3600
    %v3609 = vadd.f32 %v3589, %v3596
    %v3610 = vadd.f32 %v3590, %v3600
    %v3611 = vmax.f32 %v3603, 0.0
    %v3612 = vmax.f32 %v3604, 0.0
    %v3613 = vmax.f32 %v3605, 0.0
    %v3614 = vmax.f32 %v3606, 0.0
    %v3615 = vmax.f32 %v3607, 0.0
    %v3616 = vmax.f32 %v3608, 0.0
    %v3617 = vmax.f32 %v3609, 0.0
    %v3618 = vmax.f32 %v3610, 0.0
    %3619 = vst [vmem:[#allocation4] sm:$0xff] %v3611
    %3620 = vst.msk [vmem:[#allocation4 + $0x8] sm:$0xff] %vm1639, %v3612
    %3621 = vst [vmem:[#allocation4 + $0x10] sm:$0xff] %v3613
    %3622 = vst.msk [vmem:[#allocation4 + $0x18] sm:$0xff] %vm1639, %v3614
    %3623 = vst [vmem:[#allocation4 + $0x20] sm:$0xff] %v3615
    %3624 = vst.msk [vmem:[#allocation4 + $0x28] sm:$0xff] %vm1639, %v3616
    %3625 = vst [vmem:[#allocation4 + $0x30] sm:$0xf] %v3617
    %3626 = vst.msk [vmem:[#allocation4 + $0x38] sm:$0xf] %vm1654, %v3618
    %v3627 = vld [vmem:[#allocation4] sm:$0x3]
    %v3628 = vld [vmem:[#allocation4 + $0x8] sm:$0x3]
    %v3629 = vld [vmem:[#allocation4] sm:$0xc]
    %v3630 = vld [vmem:[#allocation4 + $0x8] sm:$0xc]
    %v3633 = vrot.slane %v3629, 2
    %v3634 = vrot.slane %v3630, 2
    %v3637 = vmax.f32 %v3627, %v3633
    %v3638 = vmax.f32 %v3628, %v3634
    %v3639 = vld [vmem:[#allocation16] sm:$0xff]
    %v3640 = vld [vmem:[#allocation16 + $0x8] sm:$0xff]
    %v3641 = vld [vmem:[#allocation16 + $0x10] sm:$0xff]
    %v3642 = vld [vmem:[#allocation16 + $0x18] sm:$0xff]
    %v3643 = vld [vmem:[#allocation16 + $0x20] sm:$0xff]
    %v3644 = vld [vmem:[#allocation16 + $0x28] sm:$0xff]
    %v3645 = vld [vmem:[#allocation16 + $0x30] sm:$0xff]
    %v3646 = vld [vmem:[#allocation16 + $0x38] sm:$0xff]
    %v3647 = vld [vmem:[#allocation16 + $0x40] sm:$0xff]
    %v3648 = vld [vmem:[#allocation16 + $0x48] sm:$0xff]
    %v3649 = vld [vmem:[#allocation16 + $0x50] sm:$0xff]
    %v3650 = vld [vmem:[#allocation16 + $0x58] sm:$0xff]
    %v3651 = vld [vmem:[#allocation16 + $0x60] sm:$0xff]
    %v3652 = vld [vmem:[#allocation16 + $0x68] sm:$0xff]
    %v3653 = vld [vmem:[#allocation16 + $0x70] sm:$0xff]
    %v3654 = vld [vmem:[#allocation16 + $0x78] sm:$0xff]
    %v3655 = vld [vmem:[#allocation16 + $0x80] sm:$0xff]
    %v3656 = vld [vmem:[#allocation16 + $0x88] sm:$0xff]
    %v3657 = vld [vmem:[#allocation16 + $0x90] sm:$0xff]
    %v3658 = vld [vmem:[#allocation16 + $0x98] sm:$0xff]
    %v3659 = vld [vmem:[#allocation16 + $0xa0] sm:$0xff]
    %v3660 = vld [vmem:[#allocation16 + $0xa8] sm:$0xff]
    %v3661 = vld [vmem:[#allocation16 + $0xb0] sm:$0xff]
    %v3662 = vld [vmem:[#allocation16 + $0xb8] sm:$0xff]
    %v3663 = vld [vmem:[#allocation16 + $0xc0] sm:$0xff]
    %v3664 = vld [vmem:[#allocation16 + $0xc8] sm:$0xff]
    %v3665 = vld [vmem:[#allocation16 + $0xd0] sm:$0xff]
    %v3666 = vld [vmem:[#allocation16 + $0xd8] sm:$0xff]
    %v3667 = vld [vmem:[#allocation4] sm:$0x30]
    %v3668 = vld [vmem:[#allocation4 + $0x8] sm:$0x30]
    %v3669 = vld [vmem:[#allocation4] sm:$0xc0]
    %v3670 = vld [vmem:[#allocation4 + $0x8] sm:$0xc0]
    %v3673 = vrot.slane %v3669, 2
    %v3674 = vrot.slane %v3670, 2
    %v3677 = vmax.f32 %v3667, %v3673
    %v3678 = vmax.f32 %v3668, %v3674
    %s3679 = scalar_lea.vmem [#allocation16], 224
    %v3680 = vld [vmem:[%s3679] sm:$0xff]
    %v3681 = vld [vmem:[%s3679 + $0x8] sm:$0xff]
    %v3682 = vld [vmem:[%s3679 + $0x10] sm:$0xff]
    %v3683 = vld [vmem:[%s3679 + $0x18] sm:$0xff]
    %v3684 = vld [vmem:[%s3679 + $0x20] sm:$0xff]
    %v3685 = vld [vmem:[%s3679 + $0x28] sm:$0xff]
    %v3686 = vld [vmem:[%s3679 + $0x30] sm:$0xff]
    %v3687 = vld [vmem:[%s3679 + $0x38] sm:$0xff]
    %v3688 = vld [vmem:[%s3679 + $0x40] sm:$0xff]
    %v3689 = vld [vmem:[%s3679 + $0x48] sm:$0xff]
    %v3690 = vld [vmem:[%s3679 + $0x50] sm:$0xff]
    %v3691 = vld [vmem:[%s3679 + $0x58] sm:$0xff]
    %v3692 = vld [vmem:[%s3679 + $0x60] sm:$0xff]
    %v3693 = vld [vmem:[%s3679 + $0x68] sm:$0xff]
    %v3694 = vld [vmem:[%s3679 + $0x70] sm:$0xff]
    %v3695 = vld [vmem:[%s3679 + $0x78] sm:$0xff]
    %v3696 = vld [vmem:[%s3679 + $0x80] sm:$0xff]
    %v3697 = vld [vmem:[%s3679 + $0x88] sm:$0xff]
    %v3698 = vld [vmem:[%s3679 + $0x90] sm:$0xff]
    %v3699 = vld [vmem:[%s3679 + $0x98] sm:$0xff]
    %v3700 = vld [vmem:[%s3679 + $0xa0] sm:$0xff]
    %v3701 = vld [vmem:[%s3679 + $0xa8] sm:$0xff]
    %v3702 = vld [vmem:[%s3679 + $0xb0] sm:$0xff]
    %v3703 = vld [vmem:[%s3679 + $0xb8] sm:$0xff]
    %v3704 = vld [vmem:[%s3679 + $0xc0] sm:$0xff]
    %v3705 = vld [vmem:[%s3679 + $0xc8] sm:$0xff]
    %v3706 = vld [vmem:[%s3679 + $0xd0] sm:$0xff]
    %v3707 = vld [vmem:[%s3679 + $0xd8] sm:$0xff]
    %v3710 = vrot.slane %v3677, 4
    %v3711 = vrot.slane %v3678, 4
    %v3713 = vsel %vm1639, %v3711, 0
    %3715 = vmatprep.subr.mxu0 0.0
    %3716 = vmatpush1.msra.mxu0 %v3680
    %3717 = vmatprep.subr.mxu0 0.0
    %3718 = vmatpush1.msra.mxu0 %v3681
    %3719 = vmatprep.subr.mxu0 0.0
    %3720 = vmatpush1.msra.mxu0 %v3682
    %3721 = vmatprep.subr.mxu0 0.0
    %3722 = vmatpush1.msra.mxu0 %v3683
    %3723 = vmatprep.subr.mxu0 0.0
    %3724 = vmatpush1.msra.mxu0 %v3684
    %3725 = vmatprep.subr.mxu0 0.0
    %3726 = vmatpush1.msra.mxu0 %v3685
    %3727 = vmatprep.subr.mxu0 0.0
    %3728 = vmatpush1.msra.mxu0 %v3686
    %3729 = vmatprep.subr.mxu0 0.0
    %3730 = vmatpush1.msra.mxu0 %v3687
    %3731 = vmatprep.subr.mxu0 0.0
    %3732 = vmatpush1.msra.mxu0 %v3688
    %3733 = vmatprep.subr.mxu0 0.0
    %3734 = vmatpush1.msra.mxu0 %v3689
    %3735 = vmatprep.subr.mxu0 0.0
    %3736 = vmatpush1.msra.mxu0 %v3690
    %3737 = vmatprep.subr.mxu0 0.0
    %3738 = vmatpush1.msra.mxu0 %v3691
    %3739 = vmatprep.subr.mxu0 0.0
    %3740 = vmatpush1.msra.mxu0 %v3692
    %3741 = vmatprep.subr.mxu0 0.0
    %3742 = vmatpush1.msra.mxu0 %v3693
    %3743 = vmatprep.subr.mxu0 0.0
    %3744 = vmatpush1.msra.mxu0 %v3694
    %3745 = vmatprep.subr.mxu0 0.0
    %3746 = vmatpush1.msra.mxu0 %v3695
    %3747 = vmatprep.subr.mxu0 0.0
    %3748 = vmatpush1.msra.mxu0 %v3696
    %3749 = vmatprep.subr.mxu0 0.0
    %3750 = vmatpush1.msra.mxu0 %v3697
    %3751 = vmatprep.subr.mxu0 0.0
    %3752 = vmatpush1.msra.mxu0 %v3698
    %3753 = vmatprep.subr.mxu0 0.0
    %3754 = vmatpush1.msra.mxu0 %v3699
    %3755 = vmatprep.subr.mxu0 0.0
    %3756 = vmatpush1.msra.mxu0 %v3700
    %3757 = vmatprep.subr.mxu0 0.0
    %3758 = vmatpush1.msra.mxu0 %v3701
    %3759 = vmatprep.subr.mxu0 0.0
    %3760 = vmatpush1.msra.mxu0 %v3702
    %3761 = vmatprep.subr.mxu0 0.0
    %3762 = vmatpush1.msra.mxu0 %v3703
    %3763 = vmatprep.subr.mxu0 0.0
    %3764 = vmatpush1.msra.mxu0 %v3704
    %3765 = vmatprep.subr.mxu0 0.0
    %3766 = vmatpush1.msra.mxu0 %v3705
    %3767 = vmatprep.subr.mxu0 0.0
    %3768 = vmatpush1.msra.mxu0 %v3706
    %3769 = vmatprep.subr.mxu0 0.0
    %3770 = vmatpush1.msra.mxu0 %v3707
    %3771 = vmatprep.subr.mxu0 0.0
    %3772 = vmatpush1.msra.mxu0 0.0
    %3773 = vmatprep.subr.mxu0 0.0
    %3774 = vmatpush1.msra.mxu0 0.0
    %3775 = vmatprep.subr.mxu0 0.0
    %3776 = vmatpush1.msra.mxu0 0.0
    %3777 = vmatprep.subr.mxu0 0.0
    %3778 = vmatpush1.msra.mxu0 0.0
    %3779 = vmatprep.mubr.f32.mxu0 %v3713
    %3780 = vmatmul.mubr.f32.gmra.mrb[0].mxu0 %v3710
    %v3781 = vpop.f32.mrb[0].mxu0
    %v3782 = vadd.f32 0.0, %v3781
    %v3783 = vpop.f32.mrb[0].mxu0
    %3784 = vdwg.mxu0
    %v3786 = vsel %vm1639, %v3638, 0
    %3788 = vmatprep.subr.mxu0 0.0
    %3789 = vmatpush1.msra.mxu0 %v3639
    %3790 = vmatprep.subr.mxu0 0.0
    %3791 = vmatpush1.msra.mxu0 %v3640
    %3792 = vmatprep.subr.mxu0 0.0
    %3793 = vmatpush1.msra.mxu0 %v3641
    %3794 = vmatprep.subr.mxu0 0.0
    %3795 = vmatpush1.msra.mxu0 %v3642
    %3796 = vmatprep.subr.mxu0 0.0
    %3797 = vmatpush1.msra.mxu0 %v3643
    %3798 = vmatprep.subr.mxu0 0.0
    %3799 = vmatpush1.msra.mxu0 %v3644
    %3800 = vmatprep.subr.mxu0 0.0
    %3801 = vmatpush1.msra.mxu0 %v3645
    %3802 = vmatprep.subr.mxu0 0.0
    %3803 = vmatpush1.msra.mxu0 %v3646
    %3804 = vmatprep.subr.mxu0 0.0
    %3805 = vmatpush1.msra.mxu0 %v3647
    %3806 = vmatprep.subr.mxu0 0.0
    %3807 = vmatpush1.msra.mxu0 %v3648
    %3808 = vmatprep.subr.mxu0 0.0
    %3809 = vmatpush1.msra.mxu0 %v3649
    %3810 = vmatprep.subr.mxu0 0.0
    %3811 = vmatpush1.msra.mxu0 %v3650
    %3812 = vmatprep.subr.mxu0 0.0
    %3813 = vmatpush1.msra.mxu0 %v3651
    %3814 = vmatprep.subr.mxu0 0.0
    %3815 = vmatpush1.msra.mxu0 %v3652
    %3816 = vmatprep.subr.mxu0 0.0
    %3817 = vmatpush1.msra.mxu0 %v3653
    %3818 = vmatprep.subr.mxu0 0.0
    %3819 = vmatpush1.msra.mxu0 %v3654
    %3820 = vmatprep.subr.mxu0 0.0
    %3821 = vmatpush1.msra.mxu0 %v3655
    %3822 = vmatprep.subr.mxu0 0.0
    %3823 = vmatpush1.msra.mxu0 %v3656
    %3824 = vmatprep.subr.mxu0 0.0
    %3825 = vmatpush1.msra.mxu0 %v3657
    %3826 = vmatprep.subr.mxu0 0.0
    %3827 = vmatpush1.msra.mxu0 %v3658
    %3828 = vmatprep.subr.mxu0 0.0
    %3829 = vmatpush1.msra.mxu0 %v3659
    %3830 = vmatprep.subr.mxu0 0.0
    %3831 = vmatpush1.msra.mxu0 %v3660
    %3832 = vmatprep.subr.mxu0 0.0
    %3833 = vmatpush1.msra.mxu0 %v3661
    %3834 = vmatprep.subr.mxu0 0.0
    %3835 = vmatpush1.msra.mxu0 %v3662
    %3836 = vmatprep.subr.mxu0 0.0
    %3837 = vmatpush1.msra.mxu0 %v3663
    %3838 = vmatprep.subr.mxu0 0.0
    %3839 = vmatpush1.msra.mxu0 %v3664
    %3840 = vmatprep.subr.mxu0 0.0
    %3841 = vmatpush1.msra.mxu0 %v3665
    %3842 = vmatprep.subr.mxu0 0.0
    %3843 = vmatpush1.msra.mxu0 %v3666
    %3844 = vmatprep.subr.mxu0 0.0
    %3845 = vmatpush1.msra.mxu0 0.0
    %3846 = vmatprep.subr.mxu0 0.0
    %3847 = vmatpush1.msra.mxu0 0.0
    %3848 = vmatprep.subr.mxu0 0.0
    %3849 = vmatpush1.msra.mxu0 0.0
    %3850 = vmatprep.subr.mxu0 0.0
    %3851 = vmatpush1.msra.mxu0 0.0
    %3852 = vmatprep.mubr.f32.mxu0 %v3786
    %3853 = vmatmul.mubr.f32.gmra.mrb[0].mxu0 %v3637
    %v3854 = vpop.f32.mrb[0].mxu0
    %v3855 = vadd.f32 %v3782, %v3854
    %v3856 = vpop.f32.mrb[0].mxu0
    %3857 = vdwg.mxu0
    %v3858 = vld [vmem:[#allocation4 + $0x10] sm:$0x3]
    %v3859 = vld [vmem:[#allocation4 + $0x18] sm:$0x3]
    %v3860 = vld [vmem:[#allocation4 + $0x10] sm:$0xc]
    %v3861 = vld [vmem:[#allocation4 + $0x18] sm:$0xc]
    %v3864 = vrot.slane %v3860, 2
    %v3865 = vrot.slane %v3861, 2
    %v3868 = vmax.f32 %v3858, %v3864
    %v3869 = vmax.f32 %v3859, %v3865
    %s3870 = scalar_lea.vmem [#allocation16], 448
    %v3871 = vld [vmem:[%s3870] sm:$0xff]
    %v3872 = vld [vmem:[%s3870 + $0x8] sm:$0xff]
    %v3873 = vld [vmem:[%s3870 + $0x10] sm:$0xff]
    %v3874 = vld [vmem:[%s3870 + $0x18] sm:$0xff]
    %v3875 = vld [vmem:[%s3870 + $0x20] sm:$0xff]
    %v3876 = vld [vmem:[%s3870 + $0x28] sm:$0xff]
    %v3877 = vld [vmem:[%s3870 + $0x30] sm:$0xff]
    %v3878 = vld [vmem:[%s3870 + $0x38] sm:$0xff]
    %v3879 = vld [vmem:[%s3870 + $0x40] sm:$0xff]
    %v3880 = vld [vmem:[%s3870 + $0x48] sm:$0xff]
    %v3881 = vld [vmem:[%s3870 + $0x50] sm:$0xff]
    %v3882 = vld [vmem:[%s3870 + $0x58] sm:$0xff]
    %v3883 = vld [vmem:[%s3870 + $0x60] sm:$0xff]
    %v3884 = vld [vmem:[%s3870 + $0x68] sm:$0xff]
    %v3885 = vld [vmem:[%s3870 + $0x70] sm:$0xff]
    %v3886 = vld [vmem:[%s3870 + $0x78] sm:$0xff]
    %v3887 = vld [vmem:[%s3870 + $0x80] sm:$0xff]
    %v3888 = vld [vmem:[%s3870 + $0x88] sm:$0xff]
    %v3889 = vld [vmem:[%s3870 + $0x90] sm:$0xff]
    %v3890 = vld [vmem:[%s3870 + $0x98] sm:$0xff]
    %v3891 = vld [vmem:[%s3870 + $0xa0] sm:$0xff]
    %v3892 = vld [vmem:[%s3870 + $0xa8] sm:$0xff]
    %v3893 = vld [vmem:[%s3870 + $0xb0] sm:$0xff]
    %v3894 = vld [vmem:[%s3870 + $0xb8] sm:$0xff]
    %v3895 = vld [vmem:[%s3870 + $0xc0] sm:$0xff]
    %v3896 = vld [vmem:[%s3870 + $0xc8] sm:$0xff]
    %v3897 = vld [vmem:[%s3870 + $0xd0] sm:$0xff]
    %v3898 = vld [vmem:[%s3870 + $0xd8] sm:$0xff]
    %v3900 = vsel %vm1639, %v3869, 0
    %3902 = vmatprep.subr.mxu0 0.0
    %3903 = vmatpush1.msra.mxu0 %v3871
    %3904 = vmatprep.subr.mxu0 0.0
    %3905 = vmatpush1.msra.mxu0 %v3872
    %3906 = vmatprep.subr.mxu0 0.0
    %3907 = vmatpush1.msra.mxu0 %v3873
    %3908 = vmatprep.subr.mxu0 0.0
    %3909 = vmatpush1.msra.mxu0 %v3874
    %3910 = vmatprep.subr.mxu0 0.0
    %3911 = vmatpush1.msra.mxu0 %v3875
    %3912 = vmatprep.subr.mxu0 0.0
    %3913 = vmatpush1.msra.mxu0 %v3876
    %3914 = vmatprep.subr.mxu0 0.0
    %3915 = vmatpush1.msra.mxu0 %v3877
    %3916 = vmatprep.subr.mxu0 0.0
    %3917 = vmatpush1.msra.mxu0 %v3878
    %3918 = vmatprep.subr.mxu0 0.0
    %3919 = vmatpush1.msra.mxu0 %v3879
    %3920 = vmatprep.subr.mxu0 0.0
    %3921 = vmatpush1.msra.mxu0 %v3880
    %3922 = vmatprep.subr.mxu0 0.0
    %3923 = vmatpush1.msra.mxu0 %v3881
    %3924 = vmatprep.subr.mxu0 0.0
    %3925 = vmatpush1.msra.mxu0 %v3882
    %3926 = vmatprep.subr.mxu0 0.0
    %3927 = vmatpush1.msra.mxu0 %v3883
    %3928 = vmatprep.subr.mxu0 0.0
    %3929 = vmatpush1.msra.mxu0 %v3884
    %3930 = vmatprep.subr.mxu0 0.0
    %3931 = vmatpush1.msra.mxu0 %v3885
    %3932 = vmatprep.subr.mxu0 0.0
    %3933 = vmatpush1.msra.mxu0 %v3886
    %3934 = vmatprep.subr.mxu0 0.0
    %3935 = vmatpush1.msra.mxu0 %v3887
    %3936 = vmatprep.subr.mxu0 0.0
    %3937 = vmatpush1.msra.mxu0 %v3888
    %3938 = vmatprep.subr.mxu0 0.0
    %3939 = vmatpush1.msra.mxu0 %v3889
    %3940 = vmatprep.subr.mxu0 0.0
    %3941 = vmatpush1.msra.mxu0 %v3890
    %3942 = vmatprep.subr.mxu0 0.0
    %3943 = vmatpush1.msra.mxu0 %v3891
    %3944 = vmatprep.subr.mxu0 0.0
    %3945 = vmatpush1.msra.mxu0 %v3892
    %3946 = vmatprep.subr.mxu0 0.0
    %3947 = vmatpush1.msra.mxu0 %v3893
    %3948 = vmatprep.subr.mxu0 0.0
    %3949 = vmatpush1.msra.mxu0 %v3894
    %3950 = vmatprep.subr.mxu0 0.0
    %3951 = vmatpush1.msra.mxu0 %v3895
    %3952 = vmatprep.subr.mxu0 0.0
    %3953 = vmatpush1.msra.mxu0 %v3896
    %3954 = vmatprep.subr.mxu0 0.0
    %3955 = vmatpush1.msra.mxu0 %v3897
    %3956 = vmatprep.subr.mxu0 0.0
    %3957 = vmatpush1.msra.mxu0 %v3898
    %3958 = vmatprep.subr.mxu0 0.0
    %3959 = vmatpush1.msra.mxu0 0.0
    %3960 = vmatprep.subr.mxu0 0.0
    %3961 = vmatpush1.msra.mxu0 0.0
    %3962 = vmatprep.subr.mxu0 0.0
    %3963 = vmatpush1.msra.mxu0 0.0
    %3964 = vmatprep.subr.mxu0 0.0
    %3965 = vmatpush1.msra.mxu0 0.0
    %3966 = vmatprep.mubr.f32.mxu0 %v3900
    %3967 = vmatmul.mubr.f32.gmra.mrb[0].mxu0 %v3868
    %v3968 = vpop.f32.mrb[0].mxu0
    %v3969 = vadd.f32 0.0, %v3968
    %v3970 = vpop.f32.mrb[0].mxu0
    %3971 = vdwg.mxu0
    %v3972 = vadd.f32 %v3855, %v3969
    %v3973 = vld [vmem:[#allocation4 + $0x10] sm:$0x30]
    %v3974 = vld [vmem:[#allocation4 + $0x18] sm:$0x30]
    %v3975 = vld [vmem:[#allocation4 + $0x10] sm:$0xc0]
    %v3976 = vld [vmem:[#allocation4 + $0x18] sm:$0xc0]
    %v3979 = vrot.slane %v3975, 2
    %v3980 = vrot.slane %v3976, 2
    %v3983 = vmax.f32 %v3973, %v3979
    %v3984 = vmax.f32 %v3974, %v3980
    %s3985 = scalar_lea.vmem [#allocation16], 672
    %v3986 = vld [vmem:[%s3985] sm:$0xff]
    %v3987 = vld [vmem:[%s3985 + $0x8] sm:$0xff]
    %v3988 = vld [vmem:[%s3985 + $0x10] sm:$0xff]
    %v3989 = vld [vmem:[%s3985 + $0x18] sm:$0xff]
    %v3990 = vld [vmem:[%s3985 + $0x20] sm:$0xff]
    %v3991 = vld [vmem:[%s3985 + $0x28] sm:$0xff]
    %v3992 = vld [vmem:[%s3985 + $0x30] sm:$0xff]
    %v3993 = vld [vmem:[%s3985 + $0x38] sm:$0xff]
    %v3994 = vld [vmem:[%s3985 + $0x40] sm:$0xff]
    %v3995 = vld [vmem:[%s3985 + $0x48] sm:$0xff]
    %v3996 = vld [vmem:[%s3985 + $0x50] sm:$0xff]
    %v3997 = vld [vmem:[%s3985 + $0x58] sm:$0xff]
    %v3998 = vld [vmem:[%s3985 + $0x60] sm:$0xff]
    %v3999 = vld [vmem:[%s3985 + $0x68] sm:$0xff]
    %v4000 = vld [vmem:[%s3985 + $0x70] sm:$0xff]
    %v4001 = vld [vmem:[%s3985 + $0x78] sm:$0xff]
    %v4002 = vld [vmem:[%s3985 + $0x80] sm:$0xff]
    %v4003 = vld [vmem:[%s3985 + $0x88] sm:$0xff]
    %v4004 = vld [vmem:[%s3985 + $0x90] sm:$0xff]
    %v4005 = vld [vmem:[%s3985 + $0x98] sm:$0xff]
    %v4006 = vld [vmem:[%s3985 + $0xa0] sm:$0xff]
    %v4007 = vld [vmem:[%s3985 + $0xa8] sm:$0xff]
    %v4008 = vld [vmem:[%s3985 + $0xb0] sm:$0xff]
    %v4009 = vld [vmem:[%s3985 + $0xb8] sm:$0xff]
    %v4010 = vld [vmem:[%s3985 + $0xc0] sm:$0xff]
    %v4011 = vld [vmem:[%s3985 + $0xc8] sm:$0xff]
    %v4012 = vld [vmem:[%s3985 + $0xd0] sm:$0xff]
    %v4013 = vld [vmem:[%s3985 + $0xd8] sm:$0xff]
    %v4016 = vrot.slane %v3983, 4
    %v4017 = vrot.slane %v3984, 4
    %v4019 = vsel %vm1639, %v4017, 0
    %4021 = vmatprep.subr.mxu0 0.0
    %4022 = vmatpush1.msra.mxu0 %v3986
    %4023 = vmatprep.subr.mxu0 0.0
    %4024 = vmatpush1.msra.mxu0 %v3987
    %4025 = vmatprep.subr.mxu0 0.0
    %4026 = vmatpush1.msra.mxu0 %v3988
    %4027 = vmatprep.subr.mxu0 0.0
    %4028 = vmatpush1.msra.mxu0 %v3989
    %4029 = vmatprep.subr.mxu0 0.0
    %4030 = vmatpush1.msra.mxu0 %v3990
    %4031 = vmatprep.subr.mxu0 0.0
    %4032 = vmatpush1.msra.mxu0 %v3991
    %4033 = vmatprep.subr.mxu0 0.0
    %4034 = vmatpush1.msra.mxu0 %v3992
    %4035 = vmatprep.subr.mxu0 0.0
    %4036 = vmatpush1.msra.mxu0 %v3993
    %4037 = vmatprep.subr.mxu0 0.0
    %4038 = vmatpush1.msra.mxu0 %v3994
    %4039 = vmatprep.subr.mxu0 0.0
    %4040 = vmatpush1.msra.mxu0 %v3995
    %4041 = vmatprep.subr.mxu0 0.0
    %4042 = vmatpush1.msra.mxu0 %v3996
    %4043 = vmatprep.subr.mxu0 0.0
    %4044 = vmatpush1.msra.mxu0 %v3997
    %4045 = vmatprep.subr.mxu0 0.0
    %4046 = vmatpush1.msra.mxu0 %v3998
    %4047 = vmatprep.subr.mxu0 0.0
    %4048 = vmatpush1.msra.mxu0 %v3999
    %4049 = vmatprep.subr.mxu0 0.0
    %4050 = vmatpush1.msra.mxu0 %v4000
    %4051 = vmatprep.subr.mxu0 0.0
    %4052 = vmatpush1.msra.mxu0 %v4001
    %4053 = vmatprep.subr.mxu0 0.0
    %4054 = vmatpush1.msra.mxu0 %v4002
    %4055 = vmatprep.subr.mxu0 0.0
    %4056 = vmatpush1.msra.mxu0 %v4003
    %4057 = vmatprep.subr.mxu0 0.0
    %4058 = vmatpush1.msra.mxu0 %v4004
    %4059 = vmatprep.subr.mxu0 0.0
    %4060 = vmatpush1.msra.mxu0 %v4005
    %4061 = vmatprep.subr.mxu0 0.0
    %4062 = vmatpush1.msra.mxu0 %v4006
    %4063 = vmatprep.subr.mxu0 0.0
    %4064 = vmatpush1.msra.mxu0 %v4007
    %4065 = vmatprep.subr.mxu0 0.0
    %4066 = vmatpush1.msra.mxu0 %v4008
    %4067 = vmatprep.subr.mxu0 0.0
    %4068 = vmatpush1.msra.mxu0 %v4009
    %4069 = vmatprep.subr.mxu0 0.0
    %4070 = vmatpush1.msra.mxu0 %v4010
    %4071 = vmatprep.subr.mxu0 0.0
    %4072 = vmatpush1.msra.mxu0 %v4011
    %4073 = vmatprep.subr.mxu0 0.0
    %4074 = vmatpush1.msra.mxu0 %v4012
    %4075 = vmatprep.subr.mxu0 0.0
    %4076 = vmatpush1.msra.mxu0 %v4013
    %4077 = vmatprep.subr.mxu0 0.0
    %4078 = vmatpush1.msra.mxu0 0.0
    %4079 = vmatprep.subr.mxu0 0.0
    %4080 = vmatpush1.msra.mxu0 0.0
    %4081 = vmatprep.subr.mxu0 0.0
    %4082 = vmatpush1.msra.mxu0 0.0
    %4083 = vmatprep.subr.mxu0 0.0
    %4084 = vmatpush1.msra.mxu0 0.0
    %4085 = vmatprep.mubr.f32.mxu0 %v4019
    %4086 = vmatmul.mubr.f32.gmra.mrb[0].mxu0 %v4016
    %v4087 = vpop.f32.mrb[0].mxu0
    %v4088 = vadd.f32 0.0, %v4087
    %v4089 = vpop.f32.mrb[0].mxu0
    %4090 = vdwg.mxu0
    %v4091 = vadd.f32 %v3972, %v4088
    %v4092 = vld [vmem:[#allocation4 + $0x20] sm:$0x3]
    %v4093 = vld [vmem:[#allocation4 + $0x28] sm:$0x3]
    %v4094 = vld [vmem:[#allocation4 + $0x20] sm:$0xc]
    %v4095 = vld [vmem:[#allocation4 + $0x28] sm:$0xc]
    %v4098 = vrot.slane %v4094, 2
    %v4099 = vrot.slane %v4095, 2
    %v4102 = vmax.f32 %v4092, %v4098
    %v4103 = vmax.f32 %v4093, %v4099
    %s4104 = scalar_lea.vmem [#allocation16], 896
    %v4105 = vld [vmem:[%s4104] sm:$0xff]
    %v4106 = vld [vmem:[%s4104 + $0x8] sm:$0xff]
    %v4107 = vld [vmem:[%s4104 + $0x10] sm:$0xff]
    %v4108 = vld [vmem:[%s4104 + $0x18] sm:$0xff]
    %v4109 = vld [vmem:[%s4104 + $0x20] sm:$0xff]
    %v4110 = vld [vmem:[%s4104 + $0x28] sm:$0xff]
    %v4111 = vld [vmem:[%s4104 + $0x30] sm:$0xff]
    %v4112 = vld [vmem:[%s4104 + $0x38] sm:$0xff]
    %v4113 = vld [vmem:[%s4104 + $0x40] sm:$0xff]
    %v4114 = vld [vmem:[%s4104 + $0x48] sm:$0xff]
    %v4115 = vld [vmem:[%s4104 + $0x50] sm:$0xff]
    %v4116 = vld [vmem:[%s4104 + $0x58] sm:$0xff]
    %v4117 = vld [vmem:[%s4104 + $0x60] sm:$0xff]
    %v4118 = vld [vmem:[%s4104 + $0x68] sm:$0xff]
    %v4119 = vld [vmem:[%s4104 + $0x70] sm:$0xff]
    %v4120 = vld [vmem:[%s4104 + $0x78] sm:$0xff]
    %v4121 = vld [vmem:[%s4104 + $0x80] sm:$0xff]
    %v4122 = vld [vmem:[%s4104 + $0x88] sm:$0xff]
    %v4123 = vld [vmem:[%s4104 + $0x90] sm:$0xff]
    %v4124 = vld [vmem:[%s4104 + $0x98] sm:$0xff]
    %v4125 = vld [vmem:[%s4104 + $0xa0] sm:$0xff]
    %v4126 = vld [vmem:[%s4104 + $0xa8] sm:$0xff]
    %v4127 = vld [vmem:[%s4104 + $0xb0] sm:$0xff]
    %v4128 = vld [vmem:[%s4104 + $0xb8] sm:$0xff]
    %v4129 = vld [vmem:[%s4104 + $0xc0] sm:$0xff]
    %v4130 = vld [vmem:[%s4104 + $0xc8] sm:$0xff]
    %v4131 = vld [vmem:[%s4104 + $0xd0] sm:$0xff]
    %v4132 = vld [vmem:[%s4104 + $0xd8] sm:$0xff]
    %v4134 = vsel %vm1639, %v4103, 0
    %4136 = vmatprep.subr.mxu0 0.0
    %4137 = vmatpush1.msra.mxu0 %v4105
    %4138 = vmatprep.subr.mxu0 0.0
    %4139 = vmatpush1.msra.mxu0 %v4106
    %4140 = vmatprep.subr.mxu0 0.0
    %4141 = vmatpush1.msra.mxu0 %v4107
    %4142 = vmatprep.subr.mxu0 0.0
    %4143 = vmatpush1.msra.mxu0 %v4108
    %4144 = vmatprep.subr.mxu0 0.0
    %4145 = vmatpush1.msra.mxu0 %v4109
    %4146 = vmatprep.subr.mxu0 0.0
    %4147 = vmatpush1.msra.mxu0 %v4110
    %4148 = vmatprep.subr.mxu0 0.0
    %4149 = vmatpush1.msra.mxu0 %v4111
    %4150 = vmatprep.subr.mxu0 0.0
    %4151 = vmatpush1.msra.mxu0 %v4112
    %4152 = vmatprep.subr.mxu0 0.0
    %4153 = vmatpush1.msra.mxu0 %v4113
    %4154 = vmatprep.subr.mxu0 0.0
    %4155 = vmatpush1.msra.mxu0 %v4114
    %4156 = vmatprep.subr.mxu0 0.0
    %4157 = vmatpush1.msra.mxu0 %v4115
    %4158 = vmatprep.subr.mxu0 0.0
    %4159 = vmatpush1.msra.mxu0 %v4116
    %4160 = vmatprep.subr.mxu0 0.0
    %4161 = vmatpush1.msra.mxu0 %v4117
    %4162 = vmatprep.subr.mxu0 0.0
    %4163 = vmatpush1.msra.mxu0 %v4118
    %4164 = vmatprep.subr.mxu0 0.0
    %4165 = vmatpush1.msra.mxu0 %v4119
    %4166 = vmatprep.subr.mxu0 0.0
    %4167 = vmatpush1.msra.mxu0 %v4120
    %4168 = vmatprep.subr.mxu0 0.0
    %4169 = vmatpush1.msra.mxu0 %v4121
    %4170 = vmatprep.subr.mxu0 0.0
    %4171 = vmatpush1.msra.mxu0 %v4122
    %4172 = vmatprep.subr.mxu0 0.0
    %4173 = vmatpush1.msra.mxu0 %v4123
    %4174 = vmatprep.subr.mxu0 0.0
    %4175 = vmatpush1.msra.mxu0 %v4124
    %4176 = vmatprep.subr.mxu0 0.0
    %4177 = vmatpush1.msra.mxu0 %v4125
    %4178 = vmatprep.subr.mxu0 0.0
    %4179 = vmatpush1.msra.mxu0 %v4126
    %4180 = vmatprep.subr.mxu0 0.0
    %4181 = vmatpush1.msra.mxu0 %v4127
    %4182 = vmatprep.subr.mxu0 0.0
    %4183 = vmatpush1.msra.mxu0 %v4128
    %4184 = vmatprep.subr.mxu0 0.0
    %4185 = vmatpush1.msra.mxu0 %v4129
    %4186 = vmatprep.subr.mxu0 0.0
    %4187 = vmatpush1.msra.mxu0 %v4130
    %4188 = vmatprep.subr.mxu0 0.0
    %4189 = vmatpush1.msra.mxu0 %v4131
    %4190 = vmatprep.subr.mxu0 0.0
    %4191 = vmatpush1.msra.mxu0 %v4132
    %4192 = vmatprep.subr.mxu0 0.0
    %4193 = vmatpush1.msra.mxu0 0.0
    %4194 = vmatprep.subr.mxu0 0.0
    %4195 = vmatpush1.msra.mxu0 0.0
    %4196 = vmatprep.subr.mxu0 0.0
    %4197 = vmatpush1.msra.mxu0 0.0
    %4198 = vmatprep.subr.mxu0 0.0
    %4199 = vmatpush1.msra.mxu0 0.0
    %4200 = vmatprep.mubr.f32.mxu0 %v4134
    %4201 = vmatmul.mubr.f32.gmra.mrb[0].mxu0 %v4102
    %v4202 = vpop.f32.mrb[0].mxu0
    %v4203 = vadd.f32 0.0, %v4202
    %v4204 = vpop.f32.mrb[0].mxu0
    %4205 = vdwg.mxu0
    %v4206 = vadd.f32 %v4091, %v4203
    %v4207 = vld [vmem:[#allocation4 + $0x20] sm:$0x30]
    %v4208 = vld [vmem:[#allocation4 + $0x28] sm:$0x30]
    %v4209 = vld [vmem:[#allocation4 + $0x20] sm:$0xc0]
    %v4210 = vld [vmem:[#allocation4 + $0x28] sm:$0xc0]
    %v4213 = vrot.slane %v4209, 2
    %v4214 = vrot.slane %v4210, 2
    %v4217 = vmax.f32 %v4207, %v4213
    %v4218 = vmax.f32 %v4208, %v4214
    %s4219 = scalar_lea.vmem [#allocation16], 1120
    %v4220 = vld [vmem:[%s4219] sm:$0xff]
    %v4221 = vld [vmem:[%s4219 + $0x8] sm:$0xff]
    %v4222 = vld [vmem:[%s4219 + $0x10] sm:$0xff]
    %v4223 = vld [vmem:[%s4219 + $0x18] sm:$0xff]
    %v4224 = vld [vmem:[%s4219 + $0x20] sm:$0xff]
    %v4225 = vld [vmem:[%s4219 + $0x28] sm:$0xff]
    %v4226 = vld [vmem:[%s4219 + $0x30] sm:$0xff]
    %v4227 = vld [vmem:[%s4219 + $0x38] sm:$0xff]
    %v4228 = vld [vmem:[%s4219 + $0x40] sm:$0xff]
    %v4229 = vld [vmem:[%s4219 + $0x48] sm:$0xff]
    %v4230 = vld [vmem:[%s4219 + $0x50] sm:$0xff]
    %v4231 = vld [vmem:[%s4219 + $0x58] sm:$0xff]
    %v4232 = vld [vmem:[%s4219 + $0x60] sm:$0xff]
    %v4233 = vld [vmem:[%s4219 + $0x68] sm:$0xff]
    %v4234 = vld [vmem:[%s4219 + $0x70] sm:$0xff]
    %v4235 = vld [vmem:[%s4219 + $0x78] sm:$0xff]
    %v4236 = vld [vmem:[%s4219 + $0x80] sm:$0xff]
    %v4237 = vld [vmem:[%s4219 + $0x88] sm:$0xff]
    %v4238 = vld [vmem:[%s4219 + $0x90] sm:$0xff]
    %v4239 = vld [vmem:[%s4219 + $0x98] sm:$0xff]
    %v4240 = vld [vmem:[%s4219 + $0xa0] sm:$0xff]
    %v4241 = vld [vmem:[%s4219 + $0xa8] sm:$0xff]
    %v4242 = vld [vmem:[%s4219 + $0xb0] sm:$0xff]
    %v4243 = vld [vmem:[%s4219 + $0xb8] sm:$0xff]
    %v4244 = vld [vmem:[%s4219 + $0xc0] sm:$0xff]
    %v4245 = vld [vmem:[%s4219 + $0xc8] sm:$0xff]
    %v4246 = vld [vmem:[%s4219 + $0xd0] sm:$0xff]
    %v4247 = vld [vmem:[%s4219 + $0xd8] sm:$0xff]
    %v4250 = vrot.slane %v4217, 4
    %v4251 = vrot.slane %v4218, 4
    %v4253 = vsel %vm1639, %v4251, 0
    %4255 = vmatprep.subr.mxu0 0.0
    %4256 = vmatpush1.msra.mxu0 %v4220
    %4257 = vmatprep.subr.mxu0 0.0
    %4258 = vmatpush1.msra.mxu0 %v4221
    %4259 = vmatprep.subr.mxu0 0.0
    %4260 = vmatpush1.msra.mxu0 %v4222
    %4261 = vmatprep.subr.mxu0 0.0
    %4262 = vmatpush1.msra.mxu0 %v4223
    %4263 = vmatprep.subr.mxu0 0.0
    %4264 = vmatpush1.msra.mxu0 %v4224
    %4265 = vmatprep.subr.mxu0 0.0
    %4266 = vmatpush1.msra.mxu0 %v4225
    %4267 = vmatprep.subr.mxu0 0.0
    %4268 = vmatpush1.msra.mxu0 %v4226
    %4269 = vmatprep.subr.mxu0 0.0
    %4270 = vmatpush1.msra.mxu0 %v4227
    %4271 = vmatprep.subr.mxu0 0.0
    %4272 = vmatpush1.msra.mxu0 %v4228
    %4273 = vmatprep.subr.mxu0 0.0
    %4274 = vmatpush1.msra.mxu0 %v4229
    %4275 = vmatprep.subr.mxu0 0.0
    %4276 = vmatpush1.msra.mxu0 %v4230
    %4277 = vmatprep.subr.mxu0 0.0
    %4278 = vmatpush1.msra.mxu0 %v4231
    %4279 = vmatprep.subr.mxu0 0.0
    %4280 = vmatpush1.msra.mxu0 %v4232
    %4281 = vmatprep.subr.mxu0 0.0
    %4282 = vmatpush1.msra.mxu0 %v4233
    %4283 = vmatprep.subr.mxu0 0.0
    %4284 = vmatpush1.msra.mxu0 %v4234
    %4285 = vmatprep.subr.mxu0 0.0
    %4286 = vmatpush1.msra.mxu0 %v4235
    %4287 = vmatprep.subr.mxu0 0.0
    %4288 = vmatpush1.msra.mxu0 %v4236
    %4289 = vmatprep.subr.mxu0 0.0
    %4290 = vmatpush1.msra.mxu0 %v4237
    %4291 = vmatprep.subr.mxu0 0.0
    %4292 = vmatpush1.msra.mxu0 %v4238
    %4293 = vmatprep.subr.mxu0 0.0
    %4294 = vmatpush1.msra.mxu0 %v4239
    %4295 = vmatprep.subr.mxu0 0.0
    %4296 = vmatpush1.msra.mxu0 %v4240
    %4297 = vmatprep.subr.mxu0 0.0
    %4298 = vmatpush1.msra.mxu0 %v4241
    %4299 = vmatprep.subr.mxu0 0.0
    %4300 = vmatpush1.msra.mxu0 %v4242
    %4301 = vmatprep.subr.mxu0 0.0
    %4302 = vmatpush1.msra.mxu0 %v4243
    %4303 = vmatprep.subr.mxu0 0.0
    %4304 = vmatpush1.msra.mxu0 %v4244
    %4305 = vmatprep.subr.mxu0 0.0
    %4306 = vmatpush1.msra.mxu0 %v4245
    %4307 = vmatprep.subr.mxu0 0.0
    %4308 = vmatpush1.msra.mxu0 %v4246
    %4309 = vmatprep.subr.mxu0 0.0
    %4310 = vmatpush1.msra.mxu0 %v4247
    %4311 = vmatprep.subr.mxu0 0.0
    %4312 = vmatpush1.msra.mxu0 0.0
    %4313 = vmatprep.subr.mxu0 0.0
    %4314 = vmatpush1.msra.mxu0 0.0
    %4315 = vmatprep.subr.mxu0 0.0
    %4316 = vmatpush1.msra.mxu0 0.0
    %4317 = vmatprep.subr.mxu0 0.0
    %4318 = vmatpush1.msra.mxu0 0.0
    %4319 = vmatprep.mubr.f32.mxu0 %v4253
    %4320 = vmatmul.mubr.f32.gmra.mrb[0].mxu0 %v4250
    %v4321 = vpop.f32.mrb[0].mxu0
    %v4322 = vadd.f32 0.0, %v4321
    %v4323 = vpop.f32.mrb[0].mxu0
    %4324 = vdwg.mxu0
    %v4325 = vadd.f32 %v4206, %v4322
    %v4326 = vld [vmem:[#allocation4 + $0x30] sm:$0x3]
    %v4327 = vld [vmem:[#allocation4 + $0x38] sm:$0x3]
    %v4328 = vld [vmem:[#allocation4 + $0x30] sm:$0xc]
    %v4329 = vld [vmem:[#allocation4 + $0x38] sm:$0xc]
    %v4332 = vrot.slane %v4328, 2
    %v4333 = vrot.slane %v4329, 2
    %v4336 = vmax.f32 %v4326, %v4332
    %v4337 = vmax.f32 %v4327, %v4333
    %s4338 = scalar_lea.vmem [#allocation16], 1344
    %v4339 = vld [vmem:[%s4338] sm:$0xff]
    %v4340 = vld [vmem:[%s4338 + $0x8] sm:$0xff]
    %v4341 = vld [vmem:[%s4338 + $0x10] sm:$0xff]
    %v4342 = vld [vmem:[%s4338 + $0x18] sm:$0xff]
    %v4343 = vld [vmem:[%s4338 + $0x20] sm:$0xff]
    %v4344 = vld [vmem:[%s4338 + $0x28] sm:$0xff]
    %v4345 = vld [vmem:[%s4338 + $0x30] sm:$0xff]
    %v4346 = vld [vmem:[%s4338 + $0x38] sm:$0xff]
    %v4347 = vld [vmem:[%s4338 + $0x40] sm:$0xff]
    %v4348 = vld [vmem:[%s4338 + $0x48] sm:$0xff]
    %v4349 = vld [vmem:[%s4338 + $0x50] sm:$0xff]
    %v4350 = vld [vmem:[%s4338 + $0x58] sm:$0xff]
    %v4351 = vld [vmem:[%s4338 + $0x60] sm:$0xff]
    %v4352 = vld [vmem:[%s4338 + $0x68] sm:$0xff]
    %v4353 = vld [vmem:[%s4338 + $0x70] sm:$0xff]
    %v4354 = vld [vmem:[%s4338 + $0x78] sm:$0xff]
    %v4355 = vld [vmem:[%s4338 + $0x80] sm:$0xff]
    %v4356 = vld [vmem:[%s4338 + $0x88] sm:$0xff]
    %v4357 = vld [vmem:[%s4338 + $0x90] sm:$0xff]
    %v4358 = vld [vmem:[%s4338 + $0x98] sm:$0xff]
    %v4359 = vld [vmem:[%s4338 + $0xa0] sm:$0xff]
    %v4360 = vld [vmem:[%s4338 + $0xa8] sm:$0xff]
    %v4361 = vld [vmem:[%s4338 + $0xb0] sm:$0xff]
    %v4362 = vld [vmem:[%s4338 + $0xb8] sm:$0xff]
    %v4363 = vld [vmem:[%s4338 + $0xc0] sm:$0xff]
    %v4364 = vld [vmem:[%s4338 + $0xc8] sm:$0xff]
    %v4365 = vld [vmem:[%s4338 + $0xd0] sm:$0xff]
    %v4366 = vld [vmem:[%s4338 + $0xd8] sm:$0xff]
    %v4368 = vsel %vm1639, %v4337, 0
    %4370 = vmatprep.subr.mxu0 0.0
    %4371 = vmatpush1.msra.mxu0 %v4339
    %4372 = vmatprep.subr.mxu0 0.0
    %4373 = vmatpush1.msra.mxu0 %v4340
    %4374 = vmatprep.subr.mxu0 0.0
    %4375 = vmatpush1.msra.mxu0 %v4341
    %4376 = vmatprep.subr.mxu0 0.0
    %4377 = vmatpush1.msra.mxu0 %v4342
    %4378 = vmatprep.subr.mxu0 0.0
    %4379 = vmatpush1.msra.mxu0 %v4343
    %4380 = vmatprep.subr.mxu0 0.0
    %4381 = vmatpush1.msra.mxu0 %v4344
    %4382 = vmatprep.subr.mxu0 0.0
    %4383 = vmatpush1.msra.mxu0 %v4345
    %4384 = vmatprep.subr.mxu0 0.0
    %4385 = vmatpush1.msra.mxu0 %v4346
    %4386 = vmatprep.subr.mxu0 0.0
    %4387 = vmatpush1.msra.mxu0 %v4347
    %4388 = vmatprep.subr.mxu0 0.0
    %4389 = vmatpush1.msra.mxu0 %v4348
    %4390 = vmatprep.subr.mxu0 0.0
    %4391 = vmatpush1.msra.mxu0 %v4349
    %4392 = vmatprep.subr.mxu0 0.0
    %4393 = vmatpush1.msra.mxu0 %v4350
    %4394 = vmatprep.subr.mxu0 0.0
    %4395 = vmatpush1.msra.mxu0 %v4351
    %4396 = vmatprep.subr.mxu0 0.0
    %4397 = vmatpush1.msra.mxu0 %v4352
    %4398 = vmatprep.subr.mxu0 0.0
    %4399 = vmatpush1.msra.mxu0 %v4353
    %4400 = vmatprep.subr.mxu0 0.0
    %4401 = vmatpush1.msra.mxu0 %v4354
    %4402 = vmatprep.subr.mxu0 0.0
    %4403 = vmatpush1.msra.mxu0 %v4355
    %4404 = vmatprep.subr.mxu0 0.0
    %4405 = vmatpush1.msra.mxu0 %v4356
    %4406 = vmatprep.subr.mxu0 0.0
    %4407 = vmatpush1.msra.mxu0 %v4357
    %4408 = vmatprep.subr.mxu0 0.0
    %4409 = vmatpush1.msra.mxu0 %v4358
    %4410 = vmatprep.subr.mxu0 0.0
    %4411 = vmatpush1.msra.mxu0 %v4359
    %4412 = vmatprep.subr.mxu0 0.0
    %4413 = vmatpush1.msra.mxu0 %v4360
    %4414 = vmatprep.subr.mxu0 0.0
    %4415 = vmatpush1.msra.mxu0 %v4361
    %4416 = vmatprep.subr.mxu0 0.0
    %4417 = vmatpush1.msra.mxu0 %v4362
    %4418 = vmatprep.subr.mxu0 0.0
    %4419 = vmatpush1.msra.mxu0 %v4363
    %4420 = vmatprep.subr.mxu0 0.0
    %4421 = vmatpush1.msra.mxu0 %v4364
    %4422 = vmatprep.subr.mxu0 0.0
    %4423 = vmatpush1.msra.mxu0 %v4365
    %4424 = vmatprep.subr.mxu0 0.0
    %4425 = vmatpush1.msra.mxu0 %v4366
    %4426 = vmatprep.subr.mxu0 0.0
    %4427 = vmatpush1.msra.mxu0 0.0
    %4428 = vmatprep.subr.mxu0 0.0
    %4429 = vmatpush1.msra.mxu0 0.0
    %4430 = vmatprep.subr.mxu0 0.0
    %4431 = vmatpush1.msra.mxu0 0.0
    %4432 = vmatprep.subr.mxu0 0.0
    %4433 = vmatpush1.msra.mxu0 0.0
    %4434 = vmatprep.mubr.f32.mxu0 %v4368
    %4435 = vmatmul.mubr.f32.gmra.mrb[0].mxu0 %v4336
    %v4436 = vpop.f32.mrb[0].mxu0
    %v4437 = vadd.f32 0.0, %v4436
    %v4438 = vpop.f32.mrb[0].mxu0
    %4439 = vdwg.mxu0
    %v4440 = vadd.f32 %v4325, %v4437
    %v4441 = vld [vmem:[#allocation17] sm:$0x1]
    %v4443 = vlaneseq
    %v4444 = vshrl.u32 %v4443, 7
    %v4445 = vsub.s32 0, %v4444
    %v4446 = vrot.slane %v4441, %v4445
    %v4448 = vadd.f32 %v4440, %v4446
    %4449 = vst [vmem:[#allocation19] sm:$0x3] %v4448
    // Predicated region
    $region70: #{cnn_forward.1} parent=1 // pred_check
      _
    $region71: #{cnn_forward.1} parent=1 // pred_check_branch
      %4451 = sbr.rel (0) target = $region73
    $region72: #{cnn_forward.1} parent=1 // pred_region
      %s4453 = ssub.s32 32, 32
      %4454 = vsyncadd [#allocation7], %s4453
      %s4456 = sshll.u32 [#allocation19], 4
      %s4457 = int_to_ptr.vmem [resolvable:$true] %s4456
      %4459 = dma.vmem_to_hbm [thread:$0]  %s4457, 32, %s9, [#allocation7]
    $region73: #{cnn_forward.1} parent=1 // pred_fallthru
      _
    // Predicated region
    $region74: #{cnn_forward.1} parent=1 // pred_check
      _
    $region75: #{cnn_forward.1} parent=1 // pred_check_branch
      %4461 = sbr.rel (0) target = $region77
    $region76: #{cnn_forward.1} parent=1 // pred_region
      %4462 = dma.done [#allocation7], 32
    $region77: #{cnn_forward.1} parent=1 // pred_fallthru
      _
    %4463 = vsyncpa [#allocation6], 1
    %4464 = vsyncpa [#allocation9], 1
    %4465 = vsyncpa [#allocation12], 1
    %4466 = vsyncpa [#allocation15], 1
    %4467 = vsyncpa [#allocation18], 1
    %4468 = vsyncpa [#allocation7], 1

</llo_original>
